<compile_context>
chip_gen: v7x
topology: tpu7x:2x2x1
jax: 0.10.0
libtpu: 0.0.40
codegen_flags: <defaults>
</compile_context>

<pallas_src>
import math

import jax
import jax.numpy as jnp
from jax.experimental import pallas as pl
from jax.experimental.pallas import tpu as pltpu

GROUPS = 8          # nn.GroupNorm(8, ls)
GN_EPS = 1e-5

PARAM_ORDER = (
    "wt1", "bt1", "wt2", "bt2",                  # TimeEmbedding MLP
    "wx", "bx", "wf", "bf", "wtp", "btp",        # x_proj / f_proj / t_proj
    "w1s", "b1s", "g1s", "be1s",                 # stage Linear1 + GroupNorm1 (stacked over stages)
    "w2s", "b2s", "g2s", "be2s",                 # stage Linear2 + GroupNorm2 (stacked over stages)
    "wo", "bo",                                  # final Linear
)


# ---------------------------------------------------------------------------
# Kernel
# ---------------------------------------------------------------------------
def linear_model_kernel(
    x0_ref, feats_ref, temb_ref,                 # row-tiled activations
    gn_a_ref, gn_at_ref,                         # (ls, G) / (G, ls) one-hot group matrices
    wt1_ref, bt1_ref, wt2_ref, bt2_ref,
    wx_ref, bx_ref, wf_ref, bf_ref, wtp_ref, btp_ref,
    w1s_ref, b1s_ref, g1s_ref, be1s_ref,
    w2s_ref, b2s_ref, g2s_ref, be2s_ref,
    wo_ref, bo_ref,
    o_ref,
):
    f32 = jnp.float32

    def lin(v, w, b):
        return jnp.dot(v, w, preferred_element_type=f32) + b

    def swish(v):
        return v * jax.nn.sigmoid(v)

    ls = w1s_ref.shape[-1]
    inv_cpg = 1.0 / (ls // GROUPS)
    A = gn_a_ref[...]        # (ls, G)
    AT = gn_at_ref[...]      # (G, ls)

    def group_norm(v, gamma, beta):
        # Per-row, per-group mean / E[x^2] via MXU (kernel is mem-bound -> MXU slack is free).
        mean_g = jnp.dot(v, A, preferred_element_type=f32) * inv_cpg          # (n, G)
        ex2_g = jnp.dot(v * v, A, preferred_element_type=f32) * inv_cpg       # (n, G)
        var_g = ex2_g - mean_g * mean_g
        inv_g = jax.lax.rsqrt(var_g + GN_EPS)
        mean_c = jnp.dot(mean_g, AT, preferred_element_type=f32)              # (n, ls)
        inv_c = jnp.dot(inv_g, AT, preferred_element_type=f32)                # (n, ls)
        return (v - mean_c) * inv_c * gamma + beta

    # --- time embedding MLP: Linear -> Swish -> Linear -------------------------------
    temb = lin(temb_ref[...], wt1_ref[...], bt1_ref[...])
    temb = swish(temb)
    temb = lin(temb, wt2_ref[...], bt2_ref[...])

    # --- projections: Swish -> Linear -------------------------------------------------
    x_in = lin(swish(x0_ref[...]), wx_ref[...], bx_ref[...])
    f_in = lin(swish(feats_ref[...]), wf_ref[...], bf_ref[...])
    t_in = lin(swish(temb), wtp_ref[...], btp_ref[...])
    y = jnp.concatenate([x_in, f_in, t_in], axis=1)                           # (tile_n, ls)

    # --- residual stages (dropout == identity at inference) ---------------------------
    num_stages = w1s_ref.shape[0]
    for s in range(num_stages):                  # static unroll over stages
        h = lin(y, w1s_ref[s], b1s_ref[s])
        h = group_norm(h, g1s_ref[s], be1s_ref[s])
        h = jnp.maximum(h, 0.0)
        h = lin(h, w2s_ref[s], b2s_ref[s])
        h = group_norm(h, g2s_ref[s], be2s_ref[s])
        h = jnp.maximum(h, 0.0)
        y = y + h

    # --- output head -------------------------------------------------------------------
    o_ref[...] = lin(y, wo_ref[...], bo_ref[...]).astype(o_ref.dtype)


# ---------------------------------------------------------------------------
# Wrapper
# ---------------------------------------------------------------------------
def _group_matrices(ls, groups, dtype=jnp.float32):
    cpg = ls // groups
    ch_group = jnp.arange(ls) // cpg
    a = (ch_group[:, None] == jnp.arange(groups)[None, :]).astype(dtype)      # (ls, G)
    return a, a.T                                                             # (ls,G), (G,ls)


def linear_model_forward(params, x_0, t, feats, *, tile_n=512):
    """x_0: (N, in_size), t: (N,) int32, feats: (N, ls) -> (N, out_size).

    NOTE: for tiny N (like the demo) a fused XLA graph would beat a dedicated
    Pallas kernel (fixed launch/DMA overhead); this path targets large batched N.
    """
    n = x_0.shape[0]
    out_size = params["wo"].shape[1]
    ls = params["w1s"].shape[-1]
    ns = params["w1s"].shape[0]
    ch = params["wt1"].shape[0]
    tdim = params["wt1"].shape[1]
    in_size = params["wx"].shape[0]

    # Timestep embedding gather (nn.Embedding) done in plain JAX.
    temb_emb = jnp.take(params["emb_table"], t, axis=0)                       # (N, ch)

    tile_n = min(tile_n, n)
    if n > tile_n:
        assert tile_n % 8 == 0, "row tile must be a multiple of 8"
    grid = (pl.cdiv(n, tile_n),)

    gn_a, gn_at = _group_matrices(ls, GROUPS)

    def row_spec(arr):
        return pl.BlockSpec((tile_n, arr.shape[1]), lambda i: (i, 0))

    def resident_spec(arr):
        nd = arr.ndim
        return pl.BlockSpec(arr.shape, lambda i, _nd=nd: (0,) * _nd)

    ordered_params = [params[k] for k in PARAM_ORDER]
    in_specs = (
        [row_spec(x_0), row_spec(feats), row_spec(temb_emb),
         resident_spec(gn_a), resident_spec(gn_at)]
        + [resident_spec(p) for p in ordered_params]
    )
    out_specs = pl.BlockSpec((tile_n, out_size), lambda i: (i, 0))

    # Scheduler hint (mem-bound small kernel; lets XLA overlap it with neighbors).
    flops = 2 * n * (ch * tdim + tdim * tdim + in_size * (ls // 4) + ls * (ls // 2)
                     + tdim * (ls // 4) + ns * 2 * ls * ls + ls * out_size)
    transcendentals = n * (2 * tdim + in_size + ls + ns * 2 * GROUPS)
    param_bytes = sum(int(p.size) * p.dtype.itemsize for p in ordered_params)
    bytes_accessed = 4 * n * (in_size + ls + ch + out_size) + param_bytes

    return pl.pallas_call(
        linear_model_kernel,
        out_shape=jax.ShapeDtypeStruct((n, out_size), jnp.float32),
        grid_spec=pltpu.PrefetchScalarGridSpec(
            num_scalar_prefetch=0,
            grid=grid,
            in_specs=in_specs,
            out_specs=out_specs,
        ),
        compiler_params=pltpu.CompilerParams(
            dimension_semantics=("parallel",),          # v7x: shard row tiles across 2 TCs
            vmem_limit_bytes=48 * 1024 * 1024,          # headroom, still < v7x 64 MiB physical
        ),
        cost_estimate=pl.CostEstimate(
            flops=int(flops),
            transcendentals=int(transcendentals),
            bytes_accessed=int(bytes_accessed),
        ),
    )(x_0, feats, temb_emb, gn_a, gn_at, *ordered_params)


# ---------------------------------------------------------------------------
# Parameter init (mirrors LinearModel.__init__ / _initialize_weight)
# ---------------------------------------------------------------------------
def sinusoidal_embedding(T, d_model):
    half = d_model // 2
    freqs = jnp.exp(-(jnp.arange(half, dtype=jnp.float32) * 2.0 / d_model) * math.log(10000.0))
    ang = jnp.arange(T, dtype=jnp.float32)[:, None] * freqs[None, :]          # (T, d_model//2)
    emb = jnp.stack([jnp.sin(ang), jnp.cos(ang)], axis=-1)                    # (T, d_model//2, 2)
    return emb.reshape(T, d_model)


def init_params(key, *, T, ch, in_size, out_size, ns, ls):
    tdim = ch * 4
    ls4, ls2 = ls // 4, ls // 2
    assert 2 * ls4 + ls2 == ls and ls % GROUPS == 0

    n_keys = 12 + 4 * ns
    keys = iter(jax.random.split(key, n_keys))

    def kaiming_w(k, fan_in, fan_out):       # kaiming_normal_, stored as (in, out)
        return jax.random.normal(k, (fan_in, fan_out), jnp.float32) * math.sqrt(2.0 / fan_in)

    def default_b(k, fan_in, fan_out):       # PyTorch Linear default bias init
        bound = 1.0 / math.sqrt(fan_in)
        return jax.random.uniform(k, (1, fan_out), jnp.float32, -bound, bound)

    p = {"emb_table": sinusoidal_embedding(T, ch)}
    p["wt1"], p["bt1"] = kaiming_w(next(keys), ch, tdim), default_b(next(keys), ch, tdim)
    p["wt2"], p["bt2"] = kaiming_w(next(keys), tdim, tdim), default_b(next(keys), tdim, tdim)
    p["wx"], p["bx"] = kaiming_w(next(keys), in_size, ls4), default_b(next(keys), in_size, ls4)
    p["wf"], p["bf"] = kaiming_w(next(keys), ls, ls2), default_b(next(keys), ls, ls2)
    p["wtp"], p["btp"] = kaiming_w(next(keys), tdim, ls4), default_b(next(keys), tdim, ls4)

    w1s, b1s, w2s, b2s = [], [], [], []
    for _ in range(ns):
        w1s.append(kaiming_w(next(keys), ls, ls)); b1s.append(default_b(next(keys), ls, ls))
        w2s.append(kaiming_w(next(keys), ls, ls)); b2s.append(default_b(next(keys), ls, ls))
    p["w1s"], p["b1s"] = jnp.stack(w1s), jnp.stack(b1s)
    p["w2s"], p["b2s"] = jnp.stack(w2s), jnp.stack(b2s)
    p["g1s"] = jnp.ones((ns, 1, ls), jnp.float32)
    p["be1s"] = jnp.zeros((ns, 1, ls), jnp.float32)
    p["g2s"] = jnp.ones((ns, 1, ls), jnp.float32)
    p["be2s"] = jnp.zeros((ns, 1, ls), jnp.float32)

    p["wo"], p["bo"] = kaiming_w(next(keys), ls, out_size), default_b(next(keys), ls, out_size)
    return p


# ---------------------------------------------------------------------------
# Pure-JAX reference (same math, standard two-pass GroupNorm)
# ---------------------------------------------------------------------------
def reference_forward(params, x_0, t, feats, *, ns):
    hp = jax.lax.Precision.HIGHEST

    def lin(v, w, b):
        return jnp.dot(v, w, precision=hp) + b

    def swish(v):
        return v * jax.nn.sigmoid(v)

    def gn(v, gamma, beta):
        n, c = v.shape
        g = v.reshape(n, GROUPS, c // GROUPS)
        m = g.mean(axis=-1, keepdims=True)
        var = ((g - m) ** 2).mean(axis=-1, keepdims=True)
        g = (g - m) / jnp.sqrt(var + GN_EPS)
        return g.reshape(n, c) * gamma + beta

    temb = lin(params["emb_table"][t], params["wt1"], params["bt1"])
    temb = swish(temb)
    temb = lin(temb, params["wt2"], params["bt2"])
    x_in = lin(swish(x_0), params["wx"], params["bx"])
    f_in = lin(swish(feats), params["wf"], params["bf"])
    t_in = lin(swish(temb), params["wtp"], params["btp"])
    y = jnp.concatenate([x_in, f_in, t_in], axis=1)
    for s in range(ns):
        h = lin(y, params["w1s"][s], params["b1s"][s])
        h = jnp.maximum(gn(h, params["g1s"][s], params["be1s"][s]), 0.0)
        h = lin(h, params["w2s"][s], params["b2s"][s])
        h = jnp.maximum(gn(h, params["g2s"][s], params["be2s"][s]), 0.0)
        y = y + h
    return lin(y, params["wo"], params["bo"])


# ---------------------------------------------------------------------------
if __name__ == "__main__":
    # Small shapes consistent with the module (scaled-down EgoHMR defaults):
    #   T=100, ch=32 -> tdim=128; in_size=out_size=144 (24 joints x 6D rot); ns=2, ls=256.
    T, ch = 100, 32
    in_size, out_size = 144, 144
    ns, ls = 2, 256
    batch = 2

    key = jax.random.PRNGKey(0)
    kx, kf, kt, kp = jax.random.split(key, 4)
    x_0 = jax.random.normal(kx, (batch, in_size), jnp.float32)
    feats = jax.random.normal(kf, (batch, ls), jnp.float32)
    t = jax.random.randint(kt, (batch,), 0, T)

    params = init_params(kp, T=T, ch=ch, in_size=in_size, out_size=out_size, ns=ns, ls=ls)

    out = linear_model_forward(params, x_0, t, feats)
    out = jax.block_until_ready(out)

    ref = reference_forward(params, x_0, t, feats, ns=ns)
    assert out.shape == (batch, out_size)
    max_err = float(jnp.max(jnp.abs(out - ref)))
    assert jnp.allclose(out, ref, atol=2e-3, rtol=2e-3), f"max abs err {max_err}"

    print("KERNEL_OK")
</pallas_src>

<mosaic_0001>
module attributes {stable_mosaic.version = 11 : i64} {
  func.func @linear_model_kernel(%arg0: i32, %arg1: memref<2x144xf32, #tpu.memory_space<vmem>>, %arg2: memref<2x256xf32, #tpu.memory_space<vmem>>, %arg3: memref<2x32xf32, #tpu.memory_space<vmem>>, %arg4: memref<256x8xf32, #tpu.memory_space<vmem>>, %arg5: memref<8x256xf32, #tpu.memory_space<vmem>>, %arg6: memref<32x128xf32, #tpu.memory_space<vmem>>, %arg7: memref<1x128xf32, #tpu.memory_space<vmem>>, %arg8: memref<128x128xf32, #tpu.memory_space<vmem>>, %arg9: memref<1x128xf32, #tpu.memory_space<vmem>>, %arg10: memref<144x64xf32, #tpu.memory_space<vmem>>, %arg11: memref<1x64xf32, #tpu.memory_space<vmem>>, %arg12: memref<256x128xf32, #tpu.memory_space<vmem>>, %arg13: memref<1x128xf32, #tpu.memory_space<vmem>>, %arg14: memref<128x64xf32, #tpu.memory_space<vmem>>, %arg15: memref<1x64xf32, #tpu.memory_space<vmem>>, %arg16: memref<2x256x256xf32, #tpu.memory_space<vmem>>, %arg17: memref<2x1x256xf32, #tpu.memory_space<vmem>>, %arg18: memref<2x1x256xf32, #tpu.memory_space<vmem>>, %arg19: memref<2x1x256xf32, #tpu.memory_space<vmem>>, %arg20: memref<2x256x256xf32, #tpu.memory_space<vmem>>, %arg21: memref<2x1x256xf32, #tpu.memory_space<vmem>>, %arg22: memref<2x1x256xf32, #tpu.memory_space<vmem>>, %arg23: memref<2x1x256xf32, #tpu.memory_space<vmem>>, %arg24: memref<256x144xf32, #tpu.memory_space<vmem>>, %arg25: memref<1x144xf32, #tpu.memory_space<vmem>>, %arg26: memref<2x144xf32, #tpu.memory_space<vmem>>) attributes {dimension_semantics = [#tpu.dimension_semantics<parallel>], iteration_bounds = array<i64: 1>, scalar_prefetch = 0 : i64, scratch_operands = 0 : i64, tpu.core_type = #tpu.core_type<tc>, window_params = [{transform_indices = @transform_0, window_bounds = array<i64: 2, 144>}, {transform_indices = @transform_1, window_bounds = array<i64: 2, 256>}, {transform_indices = @transform_2, window_bounds = array<i64: 2, 32>}, {pipeline_mode = #tpu.pipeline_mode<synchronous>, transform_indices = @transform_3, window_bounds = array<i64: 256, 8>}, {pipeline_mode = #tpu.pipeline_mode<synchronous>, transform_indices = @transform_4, window_bounds = array<i64: 8, 256>}, {pipeline_mode = #tpu.pipeline_mode<synchronous>, transform_indices = @transform_5, window_bounds = array<i64: 32, 128>}, {pipeline_mode = #tpu.pipeline_mode<synchronous>, transform_indices = @transform_6, window_bounds = array<i64: 1, 128>}, {pipeline_mode = #tpu.pipeline_mode<synchronous>, transform_indices = @transform_7, window_bounds = array<i64: 128, 128>}, {pipeline_mode = #tpu.pipeline_mode<synchronous>, transform_indices = @transform_8, window_bounds = array<i64: 1, 128>}, {pipeline_mode = #tpu.pipeline_mode<synchronous>, transform_indices = @transform_9, window_bounds = array<i64: 144, 64>}, {pipeline_mode = #tpu.pipeline_mode<synchronous>, transform_indices = @transform_10, window_bounds = array<i64: 1, 64>}, {pipeline_mode = #tpu.pipeline_mode<synchronous>, transform_indices = @transform_11, window_bounds = array<i64: 256, 128>}, {pipeline_mode = #tpu.pipeline_mode<synchronous>, transform_indices = @transform_12, window_bounds = array<i64: 1, 128>}, {pipeline_mode = #tpu.pipeline_mode<synchronous>, transform_indices = @transform_13, window_bounds = array<i64: 128, 64>}, {pipeline_mode = #tpu.pipeline_mode<synchronous>, transform_indices = @transform_14, window_bounds = array<i64: 1, 64>}, {pipeline_mode = #tpu.pipeline_mode<synchronous>, transform_indices = @transform_15, window_bounds = array<i64: 2, 256, 256>}, {pipeline_mode = #tpu.pipeline_mode<synchronous>, transform_indices = @transform_16, window_bounds = array<i64: 2, 1, 256>}, {pipeline_mode = #tpu.pipeline_mode<synchronous>, transform_indices = @transform_17, window_bounds = array<i64: 2, 1, 256>}, {pipeline_mode = #tpu.pipeline_mode<synchronous>, transform_indices = @transform_18, window_bounds = array<i64: 2, 1, 256>}, {pipeline_mode = #tpu.pipeline_mode<synchronous>, transform_indices = @transform_19, window_bounds = array<i64: 2, 256, 256>}, {pipeline_mode = #tpu.pipeline_mode<synchronous>, transform_indices = @transform_20, window_bounds = array<i64: 2, 1, 256>}, {pipeline_mode = #tpu.pipeline_mode<synchronous>, transform_indices = @transform_21, window_bounds = array<i64: 2, 1, 256>}, {pipeline_mode = #tpu.pipeline_mode<synchronous>, transform_indices = @transform_22, window_bounds = array<i64: 2, 1, 256>}, {pipeline_mode = #tpu.pipeline_mode<synchronous>, transform_indices = @transform_23, window_bounds = array<i64: 256, 144>}, {pipeline_mode = #tpu.pipeline_mode<synchronous>, transform_indices = @transform_24, window_bounds = array<i64: 1, 144>}, {transform_indices = @transform_25, window_bounds = array<i64: 2, 144>}]} {
    %c0 = arith.constant 0 : index
    %c0_0 = arith.constant 0 : index
    %0 = vector.load %arg4[%c0, %c0_0] : memref<256x8xf32, #tpu.memory_space<vmem>>, vector<256x8xf32>
    %c0_1 = arith.constant 0 : index
    %c0_2 = arith.constant 0 : index
    %1 = vector.load %arg5[%c0_1, %c0_2] : memref<8x256xf32, #tpu.memory_space<vmem>>, vector<8x256xf32>
    %c0_3 = arith.constant 0 : index
    %c0_4 = arith.constant 0 : index
    %2 = vector.load %arg3[%c0_3, %c0_4] : memref<2x32xf32, #tpu.memory_space<vmem>>, vector<2x32xf32>
    %c0_5 = arith.constant 0 : index
    %c0_6 = arith.constant 0 : index
    %3 = vector.load %arg6[%c0_5, %c0_6] : memref<32x128xf32, #tpu.memory_space<vmem>>, vector<32x128xf32>
    %c0_7 = arith.constant 0 : index
    %c0_8 = arith.constant 0 : index
    %4 = vector.load %arg7[%c0_7, %c0_8] : memref<1x128xf32, #tpu.memory_space<vmem>>, vector<1x128xf32>
    %cst = arith.constant dense<0.000000e+00> : vector<2x128xf32>
    %5 = tpu.matmul %2, %3, %cst {dimension_numbers = #tpu.dot_dimension_numbers<[1], [0], [0], [1], [0, 0, 1, 1], [], []>} : vector<2x32xf32>, vector<32x128xf32>, vector<2x128xf32> -> vector<2x128xf32>
    %6 = vector.broadcast %4 : vector<1x128xf32> to vector<2x128xf32>
    %7 = arith.addf %5, %6 : vector<2x128xf32>
    %8 = arith.negf %7 : vector<2x128xf32>
    %9 = math.exp %8 : vector<2x128xf32>
    %cst_9 = arith.constant 1.000000e+00 : f32
    %10 = vector.broadcast %cst_9 : f32 to vector<2x128xf32>
    %11 = arith.addf %10, %9 : vector<2x128xf32>
    %12 = arith.divf %10, %11 : vector<2x128xf32>
    %13 = arith.mulf %7, %12 : vector<2x128xf32>
    %c0_10 = arith.constant 0 : index
    %c0_11 = arith.constant 0 : index
    %14 = vector.load %arg8[%c0_10, %c0_11] : memref<128x128xf32, #tpu.memory_space<vmem>>, vector<128x128xf32>
    %c0_12 = arith.constant 0 : index
    %c0_13 = arith.constant 0 : index
    %15 = vector.load %arg9[%c0_12, %c0_13] : memref<1x128xf32, #tpu.memory_space<vmem>>, vector<1x128xf32>
    %cst_14 = arith.constant dense<0.000000e+00> : vector<2x128xf32>
    %16 = tpu.matmul %13, %14, %cst_14 {dimension_numbers = #tpu.dot_dimension_numbers<[1], [0], [0], [1], [0, 0, 1, 1], [], []>} : vector<2x128xf32>, vector<128x128xf32>, vector<2x128xf32> -> vector<2x128xf32>
    %17 = vector.broadcast %15 : vector<1x128xf32> to vector<2x128xf32>
    %18 = arith.addf %16, %17 : vector<2x128xf32>
    %c0_15 = arith.constant 0 : index
    %c0_16 = arith.constant 0 : index
    %19 = vector.load %arg1[%c0_15, %c0_16] : memref<2x144xf32, #tpu.memory_space<vmem>>, vector<2x144xf32>
    %20 = arith.negf %19 : vector<2x144xf32>
    %21 = math.exp %20 : vector<2x144xf32>
    %cst_17 = arith.constant 1.000000e+00 : f32
    %22 = vector.broadcast %cst_17 : f32 to vector<2x144xf32>
    %23 = arith.addf %22, %21 : vector<2x144xf32>
    %24 = arith.divf %22, %23 : vector<2x144xf32>
    %25 = arith.mulf %19, %24 : vector<2x144xf32>
    %c0_18 = arith.constant 0 : index
    %c0_19 = arith.constant 0 : index
    %26 = vector.load %arg10[%c0_18, %c0_19] : memref<144x64xf32, #tpu.memory_space<vmem>>, vector<144x64xf32>
    %c0_20 = arith.constant 0 : index
    %c0_21 = arith.constant 0 : index
    %27 = vector.load %arg11[%c0_20, %c0_21] : memref<1x64xf32, #tpu.memory_space<vmem>>, vector<1x64xf32>
    %cst_22 = arith.constant dense<0.000000e+00> : vector<2x64xf32>
    %28 = tpu.matmul %25, %26, %cst_22 {dimension_numbers = #tpu.dot_dimension_numbers<[1], [0], [0], [1], [0, 0, 1, 1], [], []>} : vector<2x144xf32>, vector<144x64xf32>, vector<2x64xf32> -> vector<2x64xf32>
    %29 = vector.broadcast %27 : vector<1x64xf32> to vector<2x64xf32>
    %30 = arith.addf %28, %29 : vector<2x64xf32>
    %c0_23 = arith.constant 0 : index
    %c0_24 = arith.constant 0 : index
    %31 = vector.load %arg2[%c0_23, %c0_24] : memref<2x256xf32, #tpu.memory_space<vmem>>, vector<2x256xf32>
    %32 = arith.negf %31 : vector<2x256xf32>
    %33 = math.exp %32 : vector<2x256xf32>
    %cst_25 = arith.constant 1.000000e+00 : f32
    %34 = vector.broadcast %cst_25 : f32 to vector<2x256xf32>
    %35 = arith.addf %34, %33 : vector<2x256xf32>
    %36 = arith.divf %34, %35 : vector<2x256xf32>
    %37 = arith.mulf %31, %36 : vector<2x256xf32>
    %c0_26 = arith.constant 0 : index
    %c0_27 = arith.constant 0 : index
    %38 = vector.load %arg12[%c0_26, %c0_27] : memref<256x128xf32, #tpu.memory_space<vmem>>, vector<256x128xf32>
    %c0_28 = arith.constant 0 : index
    %c0_29 = arith.constant 0 : index
    %39 = vector.load %arg13[%c0_28, %c0_29] : memref<1x128xf32, #tpu.memory_space<vmem>>, vector<1x128xf32>
    %cst_30 = arith.constant dense<0.000000e+00> : vector<2x128xf32>
    %40 = tpu.matmul %37, %38, %cst_30 {dimension_numbers = #tpu.dot_dimension_numbers<[1], [0], [0], [1], [0, 0, 1, 1], [], []>} : vector<2x256xf32>, vector<256x128xf32>, vector<2x128xf32> -> vector<2x128xf32>
    %41 = vector.broadcast %39 : vector<1x128xf32> to vector<2x128xf32>
    %42 = arith.addf %40, %41 : vector<2x128xf32>
    %43 = arith.negf %18 : vector<2x128xf32>
    %44 = math.exp %43 : vector<2x128xf32>
    %cst_31 = arith.constant 1.000000e+00 : f32
    %45 = vector.broadcast %cst_31 : f32 to vector<2x128xf32>
    %46 = arith.addf %45, %44 : vector<2x128xf32>
    %47 = arith.divf %45, %46 : vector<2x128xf32>
    %48 = arith.mulf %18, %47 : vector<2x128xf32>
    %c0_32 = arith.constant 0 : index
    %c0_33 = arith.constant 0 : index
    %49 = vector.load %arg14[%c0_32, %c0_33] : memref<128x64xf32, #tpu.memory_space<vmem>>, vector<128x64xf32>
    %c0_34 = arith.constant 0 : index
    %c0_35 = arith.constant 0 : index
    %50 = vector.load %arg15[%c0_34, %c0_35] : memref<1x64xf32, #tpu.memory_space<vmem>>, vector<1x64xf32>
    %cst_36 = arith.constant dense<0.000000e+00> : vector<2x64xf32>
    %51 = tpu.matmul %48, %49, %cst_36 {dimension_numbers = #tpu.dot_dimension_numbers<[1], [0], [0], [1], [0, 0, 1, 1], [], []>} : vector<2x128xf32>, vector<128x64xf32>, vector<2x64xf32> -> vector<2x64xf32>
    %52 = vector.broadcast %50 : vector<1x64xf32> to vector<2x64xf32>
    %53 = arith.addf %51, %52 : vector<2x64xf32>
    %54 = tpu.concatenate %30, %42, %53 in 1 : vector<2x64xf32>, vector<2x128xf32>, vector<2x64xf32> -> vector<2x256xf32>
    %c0_37 = arith.constant 0 : index
    %c0_38 = arith.constant 0 : index
    %c0_39 = arith.constant 0 : index
    %55 = vector.load %arg16[%c0_37, %c0_38, %c0_39] : memref<2x256x256xf32, #tpu.memory_space<vmem>>, vector<1x256x256xf32>
    %56 = vector.shape_cast %55 : vector<1x256x256xf32> to vector<256x256xf32>
    %c0_40 = arith.constant 0 : index
    %c0_41 = arith.constant 0 : index
    %c0_42 = arith.constant 0 : index
    %57 = vector.load %arg17[%c0_40, %c0_41, %c0_42] : memref<2x1x256xf32, #tpu.memory_space<vmem>>, vector<1x1x256xf32>
    %58 = vector.shape_cast %57 : vector<1x1x256xf32> to vector<1x256xf32>
    %cst_43 = arith.constant dense<0.000000e+00> : vector<2x256xf32>
    %59 = tpu.matmul %54, %56, %cst_43 {dimension_numbers = #tpu.dot_dimension_numbers<[1], [0], [0], [1], [0, 0, 1, 1], [], []>} : vector<2x256xf32>, vector<256x256xf32>, vector<2x256xf32> -> vector<2x256xf32>
    %60 = vector.broadcast %58 : vector<1x256xf32> to vector<2x256xf32>
    %61 = arith.addf %59, %60 : vector<2x256xf32>
    %c0_44 = arith.constant 0 : index
    %c0_45 = arith.constant 0 : index
    %c0_46 = arith.constant 0 : index
    %62 = vector.load %arg18[%c0_44, %c0_45, %c0_46] : memref<2x1x256xf32, #tpu.memory_space<vmem>>, vector<1x1x256xf32>
    %63 = vector.shape_cast %62 : vector<1x1x256xf32> to vector<1x256xf32>
    %c0_47 = arith.constant 0 : index
    %c0_48 = arith.constant 0 : index
    %c0_49 = arith.constant 0 : index
    %64 = vector.load %arg19[%c0_47, %c0_48, %c0_49] : memref<2x1x256xf32, #tpu.memory_space<vmem>>, vector<1x1x256xf32>
    %65 = vector.shape_cast %64 : vector<1x1x256xf32> to vector<1x256xf32>
    %cst_50 = arith.constant dense<0.000000e+00> : vector<2x8xf32>
    %66 = tpu.matmul %61, %0, %cst_50 {dimension_numbers = #tpu.dot_dimension_numbers<[1], [0], [0], [1], [0, 0, 1, 1], [], []>} : vector<2x256xf32>, vector<256x8xf32>, vector<2x8xf32> -> vector<2x8xf32>
    %cst_51 = arith.constant 3.125000e-02 : f32
    %67 = vector.broadcast %cst_51 : f32 to vector<2x8xf32>
    %68 = arith.mulf %66, %67 : vector<2x8xf32>
    %69 = arith.mulf %61, %61 : vector<2x256xf32>
    %cst_52 = arith.constant dense<0.000000e+00> : vector<2x8xf32>
    %70 = tpu.matmul %69, %0, %cst_52 {dimension_numbers = #tpu.dot_dimension_numbers<[1], [0], [0], [1], [0, 0, 1, 1], [], []>} : vector<2x256xf32>, vector<256x8xf32>, vector<2x8xf32> -> vector<2x8xf32>
    %cst_53 = arith.constant 3.125000e-02 : f32
    %71 = vector.broadcast %cst_53 : f32 to vector<2x8xf32>
    %72 = arith.mulf %70, %71 : vector<2x8xf32>
    %73 = arith.mulf %68, %68 : vector<2x8xf32>
    %74 = arith.subf %72, %73 : vector<2x8xf32>
    %cst_54 = arith.constant 9.99999974E-6 : f32
    %75 = vector.broadcast %cst_54 : f32 to vector<2x8xf32>
    %76 = arith.addf %74, %75 : vector<2x8xf32>
    %77 = math.rsqrt %76 : vector<2x8xf32>
    %cst_55 = arith.constant dense<0.000000e+00> : vector<2x256xf32>
    %78 = tpu.matmul %68, %1, %cst_55 {dimension_numbers = #tpu.dot_dimension_numbers<[1], [0], [0], [1], [0, 0, 1, 1], [], []>} : vector<2x8xf32>, vector<8x256xf32>, vector<2x256xf32> -> vector<2x256xf32>
    %cst_56 = arith.constant dense<0.000000e+00> : vector<2x256xf32>
    %79 = tpu.matmul %77, %1, %cst_56 {dimension_numbers = #tpu.dot_dimension_numbers<[1], [0], [0], [1], [0, 0, 1, 1], [], []>} : vector<2x8xf32>, vector<8x256xf32>, vector<2x256xf32> -> vector<2x256xf32>
    %80 = arith.subf %61, %78 : vector<2x256xf32>
    %81 = arith.mulf %80, %79 : vector<2x256xf32>
    %82 = vector.broadcast %63 : vector<1x256xf32> to vector<2x256xf32>
    %83 = arith.mulf %81, %82 : vector<2x256xf32>
    %84 = vector.broadcast %65 : vector<1x256xf32> to vector<2x256xf32>
    %85 = arith.addf %83, %84 : vector<2x256xf32>
    %cst_57 = arith.constant 0.000000e+00 : f32
    %86 = vector.broadcast %cst_57 : f32 to vector<2x256xf32>
    %87 = arith.maximumf %85, %86 : vector<2x256xf32>
    %c0_58 = arith.constant 0 : index
    %c0_59 = arith.constant 0 : index
    %c0_60 = arith.constant 0 : index
    %88 = vector.load %arg20[%c0_58, %c0_59, %c0_60] : memref<2x256x256xf32, #tpu.memory_space<vmem>>, vector<1x256x256xf32>
    %89 = vector.shape_cast %88 : vector<1x256x256xf32> to vector<256x256xf32>
    %c0_61 = arith.constant 0 : index
    %c0_62 = arith.constant 0 : index
    %c0_63 = arith.constant 0 : index
    %90 = vector.load %arg21[%c0_61, %c0_62, %c0_63] : memref<2x1x256xf32, #tpu.memory_space<vmem>>, vector<1x1x256xf32>
    %91 = vector.shape_cast %90 : vector<1x1x256xf32> to vector<1x256xf32>
    %cst_64 = arith.constant dense<0.000000e+00> : vector<2x256xf32>
    %92 = tpu.matmul %87, %89, %cst_64 {dimension_numbers = #tpu.dot_dimension_numbers<[1], [0], [0], [1], [0, 0, 1, 1], [], []>} : vector<2x256xf32>, vector<256x256xf32>, vector<2x256xf32> -> vector<2x256xf32>
    %93 = vector.broadcast %91 : vector<1x256xf32> to vector<2x256xf32>
    %94 = arith.addf %92, %93 : vector<2x256xf32>
    %c0_65 = arith.constant 0 : index
    %c0_66 = arith.constant 0 : index
    %c0_67 = arith.constant 0 : index
    %95 = vector.load %arg22[%c0_65, %c0_66, %c0_67] : memref<2x1x256xf32, #tpu.memory_space<vmem>>, vector<1x1x256xf32>
    %96 = vector.shape_cast %95 : vector<1x1x256xf32> to vector<1x256xf32>
    %c0_68 = arith.constant 0 : index
    %c0_69 = arith.constant 0 : index
    %c0_70 = arith.constant 0 : index
    %97 = vector.load %arg23[%c0_68, %c0_69, %c0_70] : memref<2x1x256xf32, #tpu.memory_space<vmem>>, vector<1x1x256xf32>
    %98 = vector.shape_cast %97 : vector<1x1x256xf32> to vector<1x256xf32>
    %cst_71 = arith.constant dense<0.000000e+00> : vector<2x8xf32>
    %99 = tpu.matmul %94, %0, %cst_71 {dimension_numbers = #tpu.dot_dimension_numbers<[1], [0], [0], [1], [0, 0, 1, 1], [], []>} : vector<2x256xf32>, vector<256x8xf32>, vector<2x8xf32> -> vector<2x8xf32>
    %cst_72 = arith.constant 3.125000e-02 : f32
    %100 = vector.broadcast %cst_72 : f32 to vector<2x8xf32>
    %101 = arith.mulf %99, %100 : vector<2x8xf32>
    %102 = arith.mulf %94, %94 : vector<2x256xf32>
    %cst_73 = arith.constant dense<0.000000e+00> : vector<2x8xf32>
    %103 = tpu.matmul %102, %0, %cst_73 {dimension_numbers = #tpu.dot_dimension_numbers<[1], [0], [0], [1], [0, 0, 1, 1], [], []>} : vector<2x256xf32>, vector<256x8xf32>, vector<2x8xf32> -> vector<2x8xf32>
    %cst_74 = arith.constant 3.125000e-02 : f32
    %104 = vector.broadcast %cst_74 : f32 to vector<2x8xf32>
    %105 = arith.mulf %103, %104 : vector<2x8xf32>
    %106 = arith.mulf %101, %101 : vector<2x8xf32>
    %107 = arith.subf %105, %106 : vector<2x8xf32>
    %cst_75 = arith.constant 9.99999974E-6 : f32
    %108 = vector.broadcast %cst_75 : f32 to vector<2x8xf32>
    %109 = arith.addf %107, %108 : vector<2x8xf32>
    %110 = math.rsqrt %109 : vector<2x8xf32>
    %cst_76 = arith.constant dense<0.000000e+00> : vector<2x256xf32>
    %111 = tpu.matmul %101, %1, %cst_76 {dimension_numbers = #tpu.dot_dimension_numbers<[1], [0], [0], [1], [0, 0, 1, 1], [], []>} : vector<2x8xf32>, vector<8x256xf32>, vector<2x256xf32> -> vector<2x256xf32>
    %cst_77 = arith.constant dense<0.000000e+00> : vector<2x256xf32>
    %112 = tpu.matmul %110, %1, %cst_77 {dimension_numbers = #tpu.dot_dimension_numbers<[1], [0], [0], [1], [0, 0, 1, 1], [], []>} : vector<2x8xf32>, vector<8x256xf32>, vector<2x256xf32> -> vector<2x256xf32>
    %113 = arith.subf %94, %111 : vector<2x256xf32>
    %114 = arith.mulf %113, %112 : vector<2x256xf32>
    %115 = vector.broadcast %96 : vector<1x256xf32> to vector<2x256xf32>
    %116 = arith.mulf %114, %115 : vector<2x256xf32>
    %117 = vector.broadcast %98 : vector<1x256xf32> to vector<2x256xf32>
    %118 = arith.addf %116, %117 : vector<2x256xf32>
    %cst_78 = arith.constant 0.000000e+00 : f32
    %119 = vector.broadcast %cst_78 : f32 to vector<2x256xf32>
    %120 = arith.maximumf %118, %119 : vector<2x256xf32>
    %121 = arith.addf %54, %120 : vector<2x256xf32>
    %c1 = arith.constant 1 : index
    %c0_79 = arith.constant 0 : index
    %c0_80 = arith.constant 0 : index
    %122 = vector.load %arg16[%c1, %c0_79, %c0_80] : memref<2x256x256xf32, #tpu.memory_space<vmem>>, vector<1x256x256xf32>
    %123 = vector.shape_cast %122 : vector<1x256x256xf32> to vector<256x256xf32>
    %c1_81 = arith.constant 1 : index
    %c0_82 = arith.constant 0 : index
    %c0_83 = arith.constant 0 : index
    %124 = vector.load %arg17[%c1_81, %c0_82, %c0_83] : memref<2x1x256xf32, #tpu.memory_space<vmem>>, vector<1x1x256xf32>
    %125 = vector.shape_cast %124 : vector<1x1x256xf32> to vector<1x256xf32>
    %cst_84 = arith.constant dense<0.000000e+00> : vector<2x256xf32>
    %126 = tpu.matmul %121, %123, %cst_84 {dimension_numbers = #tpu.dot_dimension_numbers<[1], [0], [0], [1], [0, 0, 1, 1], [], []>} : vector<2x256xf32>, vector<256x256xf32>, vector<2x256xf32> -> vector<2x256xf32>
    %127 = vector.broadcast %125 : vector<1x256xf32> to vector<2x256xf32>
    %128 = arith.addf %126, %127 : vector<2x256xf32>
    %c1_85 = arith.constant 1 : index
    %c0_86 = arith.constant 0 : index
    %c0_87 = arith.constant 0 : index
    %129 = vector.load %arg18[%c1_85, %c0_86, %c0_87] : memref<2x1x256xf32, #tpu.memory_space<vmem>>, vector<1x1x256xf32>
    %130 = vector.shape_cast %129 : vector<1x1x256xf32> to vector<1x256xf32>
    %c1_88 = arith.constant 1 : index
    %c0_89 = arith.constant 0 : index
    %c0_90 = arith.constant 0 : index
    %131 = vector.load %arg19[%c1_88, %c0_89, %c0_90] : memref<2x1x256xf32, #tpu.memory_space<vmem>>, vector<1x1x256xf32>
    %132 = vector.shape_cast %131 : vector<1x1x256xf32> to vector<1x256xf32>
    %cst_91 = arith.constant dense<0.000000e+00> : vector<2x8xf32>
    %133 = tpu.matmul %128, %0, %cst_91 {dimension_numbers = #tpu.dot_dimension_numbers<[1], [0], [0], [1], [0, 0, 1, 1], [], []>} : vector<2x256xf32>, vector<256x8xf32>, vector<2x8xf32> -> vector<2x8xf32>
    %cst_92 = arith.constant 3.125000e-02 : f32
    %134 = vector.broadcast %cst_92 : f32 to vector<2x8xf32>
    %135 = arith.mulf %133, %134 : vector<2x8xf32>
    %136 = arith.mulf %128, %128 : vector<2x256xf32>
    %cst_93 = arith.constant dense<0.000000e+00> : vector<2x8xf32>
    %137 = tpu.matmul %136, %0, %cst_93 {dimension_numbers = #tpu.dot_dimension_numbers<[1], [0], [0], [1], [0, 0, 1, 1], [], []>} : vector<2x256xf32>, vector<256x8xf32>, vector<2x8xf32> -> vector<2x8xf32>
    %cst_94 = arith.constant 3.125000e-02 : f32
    %138 = vector.broadcast %cst_94 : f32 to vector<2x8xf32>
    %139 = arith.mulf %137, %138 : vector<2x8xf32>
    %140 = arith.mulf %135, %135 : vector<2x8xf32>
    %141 = arith.subf %139, %140 : vector<2x8xf32>
    %cst_95 = arith.constant 9.99999974E-6 : f32
    %142 = vector.broadcast %cst_95 : f32 to vector<2x8xf32>
    %143 = arith.addf %141, %142 : vector<2x8xf32>
    %144 = math.rsqrt %143 : vector<2x8xf32>
    %cst_96 = arith.constant dense<0.000000e+00> : vector<2x256xf32>
    %145 = tpu.matmul %135, %1, %cst_96 {dimension_numbers = #tpu.dot_dimension_numbers<[1], [0], [0], [1], [0, 0, 1, 1], [], []>} : vector<2x8xf32>, vector<8x256xf32>, vector<2x256xf32> -> vector<2x256xf32>
    %cst_97 = arith.constant dense<0.000000e+00> : vector<2x256xf32>
    %146 = tpu.matmul %144, %1, %cst_97 {dimension_numbers = #tpu.dot_dimension_numbers<[1], [0], [0], [1], [0, 0, 1, 1], [], []>} : vector<2x8xf32>, vector<8x256xf32>, vector<2x256xf32> -> vector<2x256xf32>
    %147 = arith.subf %128, %145 : vector<2x256xf32>
    %148 = arith.mulf %147, %146 : vector<2x256xf32>
    %149 = vector.broadcast %130 : vector<1x256xf32> to vector<2x256xf32>
    %150 = arith.mulf %148, %149 : vector<2x256xf32>
    %151 = vector.broadcast %132 : vector<1x256xf32> to vector<2x256xf32>
    %152 = arith.addf %150, %151 : vector<2x256xf32>
    %cst_98 = arith.constant 0.000000e+00 : f32
    %153 = vector.broadcast %cst_98 : f32 to vector<2x256xf32>
    %154 = arith.maximumf %152, %153 : vector<2x256xf32>
    %c1_99 = arith.constant 1 : index
    %c0_100 = arith.constant 0 : index
    %c0_101 = arith.constant 0 : index
    %155 = vector.load %arg20[%c1_99, %c0_100, %c0_101] : memref<2x256x256xf32, #tpu.memory_space<vmem>>, vector<1x256x256xf32>
    %156 = vector.shape_cast %155 : vector<1x256x256xf32> to vector<256x256xf32>
    %c1_102 = arith.constant 1 : index
    %c0_103 = arith.constant 0 : index
    %c0_104 = arith.constant 0 : index
    %157 = vector.load %arg21[%c1_102, %c0_103, %c0_104] : memref<2x1x256xf32, #tpu.memory_space<vmem>>, vector<1x1x256xf32>
    %158 = vector.shape_cast %157 : vector<1x1x256xf32> to vector<1x256xf32>
    %cst_105 = arith.constant dense<0.000000e+00> : vector<2x256xf32>
    %159 = tpu.matmul %154, %156, %cst_105 {dimension_numbers = #tpu.dot_dimension_numbers<[1], [0], [0], [1], [0, 0, 1, 1], [], []>} : vector<2x256xf32>, vector<256x256xf32>, vector<2x256xf32> -> vector<2x256xf32>
    %160 = vector.broadcast %158 : vector<1x256xf32> to vector<2x256xf32>
    %161 = arith.addf %159, %160 : vector<2x256xf32>
    %c1_106 = arith.constant 1 : index
    %c0_107 = arith.constant 0 : index
    %c0_108 = arith.constant 0 : index
    %162 = vector.load %arg22[%c1_106, %c0_107, %c0_108] : memref<2x1x256xf32, #tpu.memory_space<vmem>>, vector<1x1x256xf32>
    %163 = vector.shape_cast %162 : vector<1x1x256xf32> to vector<1x256xf32>
    %c1_109 = arith.constant 1 : index
    %c0_110 = arith.constant 0 : index
    %c0_111 = arith.constant 0 : index
    %164 = vector.load %arg23[%c1_109, %c0_110, %c0_111] : memref<2x1x256xf32, #tpu.memory_space<vmem>>, vector<1x1x256xf32>
    %165 = vector.shape_cast %164 : vector<1x1x256xf32> to vector<1x256xf32>
    %cst_112 = arith.constant dense<0.000000e+00> : vector<2x8xf32>
    %166 = tpu.matmul %161, %0, %cst_112 {dimension_numbers = #tpu.dot_dimension_numbers<[1], [0], [0], [1], [0, 0, 1, 1], [], []>} : vector<2x256xf32>, vector<256x8xf32>, vector<2x8xf32> -> vector<2x8xf32>
    %cst_113 = arith.constant 3.125000e-02 : f32
    %167 = vector.broadcast %cst_113 : f32 to vector<2x8xf32>
    %168 = arith.mulf %166, %167 : vector<2x8xf32>
    %169 = arith.mulf %161, %161 : vector<2x256xf32>
    %cst_114 = arith.constant dense<0.000000e+00> : vector<2x8xf32>
    %170 = tpu.matmul %169, %0, %cst_114 {dimension_numbers = #tpu.dot_dimension_numbers<[1], [0], [0], [1], [0, 0, 1, 1], [], []>} : vector<2x256xf32>, vector<256x8xf32>, vector<2x8xf32> -> vector<2x8xf32>
    %cst_115 = arith.constant 3.125000e-02 : f32
    %171 = vector.broadcast %cst_115 : f32 to vector<2x8xf32>
    %172 = arith.mulf %170, %171 : vector<2x8xf32>
    %173 = arith.mulf %168, %168 : vector<2x8xf32>
    %174 = arith.subf %172, %173 : vector<2x8xf32>
    %cst_116 = arith.constant 9.99999974E-6 : f32
    %175 = vector.broadcast %cst_116 : f32 to vector<2x8xf32>
    %176 = arith.addf %174, %175 : vector<2x8xf32>
    %177 = math.rsqrt %176 : vector<2x8xf32>
    %cst_117 = arith.constant dense<0.000000e+00> : vector<2x256xf32>
    %178 = tpu.matmul %168, %1, %cst_117 {dimension_numbers = #tpu.dot_dimension_numbers<[1], [0], [0], [1], [0, 0, 1, 1], [], []>} : vector<2x8xf32>, vector<8x256xf32>, vector<2x256xf32> -> vector<2x256xf32>
    %cst_118 = arith.constant dense<0.000000e+00> : vector<2x256xf32>
    %179 = tpu.matmul %177, %1, %cst_118 {dimension_numbers = #tpu.dot_dimension_numbers<[1], [0], [0], [1], [0, 0, 1, 1], [], []>} : vector<2x8xf32>, vector<8x256xf32>, vector<2x256xf32> -> vector<2x256xf32>
    %180 = arith.subf %161, %178 : vector<2x256xf32>
    %181 = arith.mulf %180, %179 : vector<2x256xf32>
    %182 = vector.broadcast %163 : vector<1x256xf32> to vector<2x256xf32>
    %183 = arith.mulf %181, %182 : vector<2x256xf32>
    %184 = vector.broadcast %165 : vector<1x256xf32> to vector<2x256xf32>
    %185 = arith.addf %183, %184 : vector<2x256xf32>
    %cst_119 = arith.constant 0.000000e+00 : f32
    %186 = vector.broadcast %cst_119 : f32 to vector<2x256xf32>
    %187 = arith.maximumf %185, %186 : vector<2x256xf32>
    %188 = arith.addf %121, %187 : vector<2x256xf32>
    %c0_120 = arith.constant 0 : index
    %c0_121 = arith.constant 0 : index
    %189 = vector.load %arg24[%c0_120, %c0_121] : memref<256x144xf32, #tpu.memory_space<vmem>>, vector<256x144xf32>
    %c0_122 = arith.constant 0 : index
    %c0_123 = arith.constant 0 : index
    %190 = vector.load %arg25[%c0_122, %c0_123] : memref<1x144xf32, #tpu.memory_space<vmem>>, vector<1x144xf32>
    %cst_124 = arith.constant dense<0.000000e+00> : vector<2x144xf32>
    %191 = tpu.matmul %188, %189, %cst_124 {dimension_numbers = #tpu.dot_dimension_numbers<[1], [0], [0], [1], [0, 0, 1, 1], [], []>} : vector<2x256xf32>, vector<256x144xf32>, vector<2x144xf32> -> vector<2x144xf32>
    %192 = vector.broadcast %190 : vector<1x144xf32> to vector<2x144xf32>
    %193 = arith.addf %191, %192 : vector<2x144xf32>
    %c0_125 = arith.constant 0 : index
    %c0_126 = arith.constant 0 : index
    %194 = vector.load %arg26[%c0_125, %c0_126] : memref<2x144xf32, #tpu.memory_space<vmem>>, vector<2x144xf32>
    tpu.vector_store %arg26[%c0_125, %c0_126], %193 {strides = array<i32>} : memref<2x144xf32, #tpu.memory_space<vmem>>, vector<2x144xf32>,
    return
  }
  func.func @transform_0(%arg0: i32) -> (i32, i32) {
    %c0_i32 = arith.constant 0 : i32
    %c0_i32_0 = arith.constant 0 : i32
    return %arg0, %c0_i32 : i32, i32
  }
  func.func @transform_1(%arg0: i32) -> (i32, i32) {
    %c0_i32 = arith.constant 0 : i32
    %c0_i32_0 = arith.constant 0 : i32
    return %arg0, %c0_i32 : i32, i32
  }
  func.func @transform_2(%arg0: i32) -> (i32, i32) {
    %c0_i32 = arith.constant 0 : i32
    %c0_i32_0 = arith.constant 0 : i32
    return %arg0, %c0_i32 : i32, i32
  }
  func.func @transform_3(%arg0: i32) -> (i32, i32) {
    %c0_i32 = arith.constant 0 : i32
    %c0_i32_0 = arith.constant 0 : i32
    %c0_i32_1 = arith.constant 0 : i32
    return %c0_i32, %c0_i32_0 : i32, i32
  }
  func.func @transform_4(%arg0: i32) -> (i32, i32) {
    %c0_i32 = arith.constant 0 : i32
    %c0_i32_0 = arith.constant 0 : i32
    %c0_i32_1 = arith.constant 0 : i32
    return %c0_i32, %c0_i32_0 : i32, i32
  }
  func.func @transform_5(%arg0: i32) -> (i32, i32) {
    %c0_i32 = arith.constant 0 : i32
    %c0_i32_0 = arith.constant 0 : i32
    %c0_i32_1 = arith.constant 0 : i32
    return %c0_i32, %c0_i32_0 : i32, i32
  }
  func.func @transform_6(%arg0: i32) -> (i32, i32) {
    %c0_i32 = arith.constant 0 : i32
    %c0_i32_0 = arith.constant 0 : i32
    %c0_i32_1 = arith.constant 0 : i32
    return %c0_i32, %c0_i32_0 : i32, i32
  }
  func.func @transform_7(%arg0: i32) -> (i32, i32) {
    %c0_i32 = arith.constant 0 : i32
    %c0_i32_0 = arith.constant 0 : i32
    %c0_i32_1 = arith.constant 0 : i32
    return %c0_i32, %c0_i32_0 : i32, i32
  }
  func.func @transform_8(%arg0: i32) -> (i32, i32) {
    %c0_i32 = arith.constant 0 : i32
    %c0_i32_0 = arith.constant 0 : i32
    %c0_i32_1 = arith.constant 0 : i32
    return %c0_i32, %c0_i32_0 : i32, i32
  }
  func.func @transform_9(%arg0: i32) -> (i32, i32) {
    %c0_i32 = arith.constant 0 : i32
    %c0_i32_0 = arith.constant 0 : i32
    %c0_i32_1 = arith.constant 0 : i32
    return %c0_i32, %c0_i32_0 : i32, i32
  }
  func.func @transform_10(%arg0: i32) -> (i32, i32) {
    %c0_i32 = arith.constant 0 : i32
    %c0_i32_0 = arith.constant 0 : i32
    %c0_i32_1 = arith.constant 0 : i32
    return %c0_i32, %c0_i32_0 : i32, i32
  }
  func.func @transform_11(%arg0: i32) -> (i32, i32) {
    %c0_i32 = arith.constant 0 : i32
    %c0_i32_0 = arith.constant 0 : i32
    %c0_i32_1 = arith.constant 0 : i32
    return %c0_i32, %c0_i32_0 : i32, i32
  }
  func.func @transform_12(%arg0: i32) -> (i32, i32) {
    %c0_i32 = arith.constant 0 : i32
    %c0_i32_0 = arith.constant 0 : i32
    %c0_i32_1 = arith.constant 0 : i32
    return %c0_i32, %c0_i32_0 : i32, i32
  }
  func.func @transform_13(%arg0: i32) -> (i32, i32) {
    %c0_i32 = arith.constant 0 : i32
    %c0_i32_0 = arith.constant 0 : i32
    %c0_i32_1 = arith.constant 0 : i32
    return %c0_i32, %c0_i32_0 : i32, i32
  }
  func.func @transform_14(%arg0: i32) -> (i32, i32) {
    %c0_i32 = arith.constant 0 : i32
    %c0_i32_0 = arith.constant 0 : i32
    %c0_i32_1 = arith.constant 0 : i32
    return %c0_i32, %c0_i32_0 : i32, i32
  }
  func.func @transform_15(%arg0: i32) -> (i32, i32, i32) {
    %c0_i32 = arith.constant 0 : i32
    %c0_i32_0 = arith.constant 0 : i32
    %c0_i32_1 = arith.constant 0 : i32
    %c0_i32_2 = arith.constant 0 : i32
    return %c0_i32, %c0_i32_0, %c0_i32_1 : i32, i32, i32
  }
  func.func @transform_16(%arg0: i32) -> (i32, i32, i32) {
    %c0_i32 = arith.constant 0 : i32
    %c0_i32_0 = arith.constant 0 : i32
    %c0_i32_1 = arith.constant 0 : i32
    %c0_i32_2 = arith.constant 0 : i32
    return %c0_i32, %c0_i32_0, %c0_i32_1 : i32, i32, i32
  }
  func.func @transform_17(%arg0: i32) -> (i32, i32, i32) {
    %c0_i32 = arith.constant 0 : i32
    %c0_i32_0 = arith.constant 0 : i32
    %c0_i32_1 = arith.constant 0 : i32
    %c0_i32_2 = arith.constant 0 : i32
    return %c0_i32, %c0_i32_0, %c0_i32_1 : i32, i32, i32
  }
  func.func @transform_18(%arg0: i32) -> (i32, i32, i32) {
    %c0_i32 = arith.constant 0 : i32
    %c0_i32_0 = arith.constant 0 : i32
    %c0_i32_1 = arith.constant 0 : i32
    %c0_i32_2 = arith.constant 0 : i32
    return %c0_i32, %c0_i32_0, %c0_i32_1 : i32, i32, i32
  }
  func.func @transform_19(%arg0: i32) -> (i32, i32, i32) {
    %c0_i32 = arith.constant 0 : i32
    %c0_i32_0 = arith.constant 0 : i32
    %c0_i32_1 = arith.constant 0 : i32
    %c0_i32_2 = arith.constant 0 : i32
    return %c0_i32, %c0_i32_0, %c0_i32_1 : i32, i32, i32
  }
  func.func @transform_20(%arg0: i32) -> (i32, i32, i32) {
    %c0_i32 = arith.constant 0 : i32
    %c0_i32_0 = arith.constant 0 : i32
    %c0_i32_1 = arith.constant 0 : i32
    %c0_i32_2 = arith.constant 0 : i32
    return %c0_i32, %c0_i32_0, %c0_i32_1 : i32, i32, i32
  }
  func.func @transform_21(%arg0: i32) -> (i32, i32, i32) {
    %c0_i32 = arith.constant 0 : i32
    %c0_i32_0 = arith.constant 0 : i32
    %c0_i32_1 = arith.constant 0 : i32
    %c0_i32_2 = arith.constant 0 : i32
    return %c0_i32, %c0_i32_0, %c0_i32_1 : i32, i32, i32
  }
  func.func @transform_22(%arg0: i32) -> (i32, i32, i32) {
    %c0_i32 = arith.constant 0 : i32
    %c0_i32_0 = arith.constant 0 : i32
    %c0_i32_1 = arith.constant 0 : i32
    %c0_i32_2 = arith.constant 0 : i32
    return %c0_i32, %c0_i32_0, %c0_i32_1 : i32, i32, i32
  }
  func.func @transform_23(%arg0: i32) -> (i32, i32) {
    %c0_i32 = arith.constant 0 : i32
    %c0_i32_0 = arith.constant 0 : i32
    %c0_i32_1 = arith.constant 0 : i32
    return %c0_i32, %c0_i32_0 : i32, i32
  }
  func.func @transform_24(%arg0: i32) -> (i32, i32) {
    %c0_i32 = arith.constant 0 : i32
    %c0_i32_0 = arith.constant 0 : i32
    %c0_i32_1 = arith.constant 0 : i32
    return %c0_i32, %c0_i32_0 : i32, i32
  }
  func.func @transform_25(%arg0: i32) -> (i32, i32) {
    %c0_i32 = arith.constant 0 : i32
    %c0_i32_0 = arith.constant 0 : i32
    return %arg0, %c0_i32 : i32, i32
  }
}

</mosaic_0001>

<llo_original>
// kernel: tpu_custom_call.1
$region0: #{tpu_custom_call.1}
  #allocation0 [shape = 'u32[]', space=smem, size = 0x4, offset = 0x4, fixed_abs, tag = 'smem constant byte address 0x4 - core index']
  #allocation1 [shape = 'u32[144,128]{1,0:T(1,128)}', space=vmem, size = 0x12000, scoped, tag = 'internal scratch']
  %s0 = inlined_call_operand.vmem [shape: f32[2,144], index: 0, kind: input, shape index: {}]
  %s1 = inlined_call_operand.hbm [shape: f32[2,256], index: 1, kind: input, shape index: {}]
  %s2 = inlined_call_operand.hbm [shape: f32[2,32], index: 2, kind: input, shape index: {}]
  %s3 = inlined_call_operand.vmem [shape: f32[256,8], index: 3, kind: input, shape index: {}]
  %s4 = inlined_call_operand.hbm [shape: f32[8,256], index: 4, kind: input, shape index: {}]
  %s5 = inlined_call_operand.vmem [shape: f32[32,128], index: 5, kind: input, shape index: {}]
  %s6 = inlined_call_operand.hbm [shape: f32[1,128], index: 6, kind: input, shape index: {}]
  %s7 = inlined_call_operand.hbm [shape: f32[128,128], index: 7, kind: input, shape index: {}]
  %s8 = inlined_call_operand.hbm [shape: f32[1,128], index: 8, kind: input, shape index: {}]
  %s9 = inlined_call_operand.vmem [shape: f32[144,64], index: 9, kind: input, shape index: {}]
  %s10 = inlined_call_operand.hbm [shape: f32[1,64], index: 10, kind: input, shape index: {}]
  %s11 = inlined_call_operand.vmem [shape: f32[256,128], index: 11, kind: input, shape index: {}]
  %s12 = inlined_call_operand.hbm [shape: f32[1,128], index: 12, kind: input, shape index: {}]
  %s13 = inlined_call_operand.vmem [shape: f32[128,64], index: 13, kind: input, shape index: {}]
  %s14 = inlined_call_operand.hbm [shape: f32[1,64], index: 14, kind: input, shape index: {}]
  %s15 = inlined_call_operand.vmem [shape: f32[2,256,256], index: 15, kind: input, shape index: {}]
  %s16 = inlined_call_operand.hbm [shape: f32[2,1,256], index: 16, kind: input, shape index: {}]
  %s17 = inlined_call_operand.hbm [shape: f32[2,1,256], index: 17, kind: input, shape index: {}]
  %s18 = inlined_call_operand.hbm [shape: f32[2,1,256], index: 18, kind: input, shape index: {}]
  %s19 = inlined_call_operand.hbm [shape: f32[2,256,256], index: 19, kind: input, shape index: {}]
  %s20 = inlined_call_operand.vmem [shape: f32[2,1,256], index: 20, kind: input, shape index: {}]
  %s21 = inlined_call_operand.hbm [shape: f32[2,1,256], index: 21, kind: input, shape index: {}]
  %s22 = inlined_call_operand.hbm [shape: f32[2,1,256], index: 22, kind: input, shape index: {}]
  %s23 = inlined_call_operand.vmem [shape: f32[256,144], index: 23, kind: input, shape index: {}]
  %s24 = inlined_call_operand.vmem [shape: f32[1,144], index: 24, kind: input, shape index: {}]
  %s25 = inlined_call_operand.hbm [shape: f32[2,144], index: 25, kind: output, shape index: {}]
  %s26 = sld [smem:[#allocation0]]
  $region170: #{tpu_custom_call.1} parent=0
    _
  %s28 = ssub.s32 1, %s26
  %s29 = scalar_select 0, %s28, %s26
  $region1: #{tpu_custom_call.1} parent=0
    #allocation2 [shape = 'u8[2048]{0}', space=vmem, size = 0x800, scoped, tag = 'input window, operand 1, single buffered']
    #allocation3 [shape = 's32[1]{0}', space=sflag, size = 0x4, scoped, tag = 'scoped memory for tpu_custom_call.1']
    #allocation4 [shape = 's32[1]{0}', space=sflag, size = 0x4, scoped, tag = 'scoped memory for tpu_custom_call.1']
    #allocation5 [shape = 'u8[1024]{0}', space=vmem, size = 0x400, scoped, tag = 'input window, operand 2, single buffered']
    #allocation6 [shape = 's32[1]{0}', space=sflag, size = 0x4, scoped, tag = 'scoped memory for tpu_custom_call.1']
    #allocation7 [shape = 'u8[8192]{0}', space=vmem, size = 0x2000, scoped, tag = 'input window, operand 4, single buffered']
    #allocation8 [shape = 'u8[512]{0}', space=vmem, size = 0x400, scoped, tag = 'input window, operand 6, single buffered']
    #allocation9 [shape = 's32[1]{0}', space=sflag, size = 0x4, scoped, tag = 'scoped memory for tpu_custom_call.1']
    #allocation10 [shape = 'u8[65536]{0}', space=vmem, size = 0x10000, scoped, tag = 'input window, operand 7, single buffered']
    #allocation11 [shape = 'u8[512]{0}', space=vmem, size = 0x400, scoped, tag = 'input window, operand 8, single buffered']
    #allocation12 [shape = 's32[1]{0}', space=sflag, size = 0x4, scoped, tag = 'scoped memory for tpu_custom_call.1']
    #allocation13 [shape = 'u8[512]{0}', space=vmem, size = 0x400, scoped, tag = 'input window, operand 10, single buffered']
    #allocation14 [shape = 'u8[512]{0}', space=vmem, size = 0x400, scoped, tag = 'input window, operand 12, single buffered']
    #allocation15 [shape = 's32[1]{0}', space=sflag, size = 0x4, scoped, tag = 'scoped memory for tpu_custom_call.1']
    #allocation16 [shape = 'u8[512]{0}', space=vmem, size = 0x400, scoped, tag = 'input window, operand 14, single buffered']
    #allocation17 [shape = 'u8[2048]{0}', space=vmem, size = 0x800, scoped, tag = 'input window, operand 16, single buffered']
    #allocation18 [shape = 's32[1]{0}', space=sflag, size = 0x4, scoped, tag = 'scoped memory for tpu_custom_call.1']
    #allocation19 [shape = 'u8[2048]{0}', space=vmem, size = 0x800, scoped, tag = 'input window, operand 17, single buffered']
    #allocation20 [shape = 'u8[2048]{0}', space=vmem, size = 0x800, scoped, tag = 'input window, operand 18, single buffered']
    #allocation21 [shape = 's32[1]{0}', space=sflag, size = 0x4, scoped, tag = 'scoped memory for tpu_custom_call.1']
    #allocation22 [shape = 'u8[524288]{0}', space=vmem, size = 0x80000, scoped, tag = 'input window, operand 19, single buffered']
    #allocation23 [shape = 'u8[2048]{0}', space=vmem, size = 0x800, scoped, tag = 'input window, operand 21, single buffered']
    #allocation24 [shape = 's32[1]{0}', space=sflag, size = 0x4, scoped, tag = 'scoped memory for tpu_custom_call.1']
    #allocation25 [shape = 'u8[2048]{0}', space=vmem, size = 0x800, scoped, tag = 'input window, operand 22, single buffered']
    #allocation26 [shape = 'u8[2048]{0}', space=vmem, size = 0x800, scoped, tag = 'output window, operand 0, single buffered']
    %30 = vsyncpa [#allocation3], 0
    %31 = vsyncpa [#allocation6], 0
    %32 = vsyncpa [#allocation9], 0
    %33 = vsyncpa [#allocation12], 0
    %34 = vsyncpa [#allocation15], 0
    %35 = vsyncpa [#allocation18], 0
    %36 = vsyncpa [#allocation21], 0
    %37 = vsyncpa [#allocation24], 0
    %38 = vsyncpa [#allocation4], 0
    // Predicated region
    $region2: #{tpu_custom_call.1} parent=1 // pred_check
      _
    $region3: #{tpu_custom_call.1} parent=1 // pred_check_branch
      %40 = sbr.rel (0) target = $region5
    $region4: #{tpu_custom_call.1} parent=1 // pred_region
      _
    $region5: #{tpu_custom_call.1} parent=1 // pred_fallthru
      _
    // Predicated region
    $region6: #{tpu_custom_call.1} parent=1 // pred_check
      _
    $region7: #{tpu_custom_call.1} parent=1 // pred_check_branch
      %42 = sbr.rel (0) target = $region9
    $region8: #{tpu_custom_call.1} parent=1 // pred_region
      %s44 = ssub.s32 64, 64
      %45 = vsyncadd [#allocation3], %s44
      %s47 = sshll.u32 [#allocation2], 4
      %s48 = int_to_ptr.vmem [resolvable:$true] %s47
      %50 = dma.hbm_to_vmem [thread:$0]  %s1, 64, %s48, [#allocation3]
    $region9: #{tpu_custom_call.1} parent=1 // pred_fallthru
      _
    // Predicated region
    $region10: #{tpu_custom_call.1} parent=1 // pred_check
      _
    $region11: #{tpu_custom_call.1} parent=1 // pred_check_branch
      %52 = sbr.rel (0) target = $region13
    $region12: #{tpu_custom_call.1} parent=1 // pred_region
      %s54 = ssub.s32 32, 32
      %55 = vsyncadd [#allocation6], %s54
      %s57 = sshll.u32 [#allocation5], 4
      %s58 = int_to_ptr.vmem [resolvable:$true] %s57
      %60 = dma.hbm_to_vmem [thread:$0]  %s2, 32, %s58, [#allocation6]
    $region13: #{tpu_custom_call.1} parent=1 // pred_fallthru
      _
    // Predicated region
    $region14: #{tpu_custom_call.1} parent=1 // pred_check
      _
    $region15: #{tpu_custom_call.1} parent=1 // pred_check_branch
      %62 = sbr.rel (0) target = $region17
    $region16: #{tpu_custom_call.1} parent=1 // pred_region
      _
    $region17: #{tpu_custom_call.1} parent=1 // pred_fallthru
      _
    // Predicated region
    $region18: #{tpu_custom_call.1} parent=1 // pred_check
      _
    $region19: #{tpu_custom_call.1} parent=1 // pred_check_branch
      %64 = sbr.rel (0) target = $region21
    $region20: #{tpu_custom_call.1} parent=1 // pred_region
      %s66 = ssub.s32 256, 256
      %67 = vsyncadd [#allocation6], %s66
      %s69 = sshll.u32 [#allocation7], 4
      %s70 = int_to_ptr.vmem [resolvable:$true] %s69
      %72 = dma.hbm_to_vmem [thread:$0]  %s4, 256, %s70, [#allocation6]
    $region21: #{tpu_custom_call.1} parent=1 // pred_fallthru
      _
    // Predicated region
    $region22: #{tpu_custom_call.1} parent=1 // pred_check
      _
    $region23: #{tpu_custom_call.1} parent=1 // pred_check_branch
      %74 = sbr.rel (0) target = $region25
    $region24: #{tpu_custom_call.1} parent=1 // pred_region
      _
    $region25: #{tpu_custom_call.1} parent=1 // pred_fallthru
      _
    // Predicated region
    $region26: #{tpu_custom_call.1} parent=1 // pred_check
      _
    $region27: #{tpu_custom_call.1} parent=1 // pred_check_branch
      %76 = sbr.rel (0) target = $region29
    $region28: #{tpu_custom_call.1} parent=1 // pred_region
      %s78 = ssub.s32 16, 16
      %79 = vsyncadd [#allocation9], %s78
      %s81 = sshll.u32 [#allocation8], 4
      %s82 = int_to_ptr.vmem [resolvable:$true] %s81
      %84 = dma.hbm_to_vmem [thread:$0]  %s6, 16, %s82, [#allocation9]
    $region29: #{tpu_custom_call.1} parent=1 // pred_fallthru
      _
    // Predicated region
    $region30: #{tpu_custom_call.1} parent=1 // pred_check
      _
    $region31: #{tpu_custom_call.1} parent=1 // pred_check_branch
      %86 = sbr.rel (0) target = $region33
    $region32: #{tpu_custom_call.1} parent=1 // pred_region
      %s88 = ssub.s32 2048, 2048
      %89 = vsyncadd [#allocation9], %s88
      %s90 = sshll.u32 [#allocation10], 4
      %s91 = int_to_ptr.vmem [resolvable:$true] %s90
      %96 = dma.hbm_to_vmem [thread:$0]  %s7, 2048, %s91, [#allocation9], 128, 128, 8
    $region33: #{tpu_custom_call.1} parent=1 // pred_fallthru
      _
    // Predicated region
    $region34: #{tpu_custom_call.1} parent=1 // pred_check
      _
    $region35: #{tpu_custom_call.1} parent=1 // pred_check_branch
      %98 = sbr.rel (0) target = $region37
    $region36: #{tpu_custom_call.1} parent=1 // pred_region
      %s100 = ssub.s32 16, 16
      %101 = vsyncadd [#allocation12], %s100
      %s103 = sshll.u32 [#allocation11], 4
      %s104 = int_to_ptr.vmem [resolvable:$true] %s103
      %106 = dma.hbm_to_vmem [thread:$0]  %s8, 16, %s104, [#allocation12]
    $region37: #{tpu_custom_call.1} parent=1 // pred_fallthru
      _
    // Predicated region
    $region38: #{tpu_custom_call.1} parent=1 // pred_check
      _
    $region39: #{tpu_custom_call.1} parent=1 // pred_check_branch
      %108 = sbr.rel (0) target = $region41
    $region40: #{tpu_custom_call.1} parent=1 // pred_region
      _
    $region41: #{tpu_custom_call.1} parent=1 // pred_fallthru
      _
    // Predicated region
    $region42: #{tpu_custom_call.1} parent=1 // pred_check
      _
    $region43: #{tpu_custom_call.1} parent=1 // pred_check_branch
      %110 = sbr.rel (0) target = $region45
    $region44: #{tpu_custom_call.1} parent=1 // pred_region
      %s112 = ssub.s32 16, 16
      %113 = vsyncadd [#allocation12], %s112
      %s115 = sshll.u32 [#allocation13], 4
      %s116 = int_to_ptr.vmem [resolvable:$true] %s115
      %118 = dma.hbm_to_vmem [thread:$0]  %s10, 16, %s116, [#allocation12]
    $region45: #{tpu_custom_call.1} parent=1 // pred_fallthru
      _
    // Predicated region
    $region46: #{tpu_custom_call.1} parent=1 // pred_check
      _
    $region47: #{tpu_custom_call.1} parent=1 // pred_check_branch
      %120 = sbr.rel (0) target = $region49
    $region48: #{tpu_custom_call.1} parent=1 // pred_region
      _
    $region49: #{tpu_custom_call.1} parent=1 // pred_fallthru
      _
    // Predicated region
    $region50: #{tpu_custom_call.1} parent=1 // pred_check
      _
    $region51: #{tpu_custom_call.1} parent=1 // pred_check_branch
      %122 = sbr.rel (0) target = $region53
    $region52: #{tpu_custom_call.1} parent=1 // pred_region
      %s124 = ssub.s32 16, 16
      %125 = vsyncadd [#allocation15], %s124
      %s127 = sshll.u32 [#allocation14], 4
      %s128 = int_to_ptr.vmem [resolvable:$true] %s127
      %130 = dma.hbm_to_vmem [thread:$0]  %s12, 16, %s128, [#allocation15]
    $region53: #{tpu_custom_call.1} parent=1 // pred_fallthru
      _
    // Predicated region
    $region54: #{tpu_custom_call.1} parent=1 // pred_check
      _
    $region55: #{tpu_custom_call.1} parent=1 // pred_check_branch
      %132 = sbr.rel (0) target = $region57
    $region56: #{tpu_custom_call.1} parent=1 // pred_region
      _
    $region57: #{tpu_custom_call.1} parent=1 // pred_fallthru
      _
    // Predicated region
    $region58: #{tpu_custom_call.1} parent=1 // pred_check
      _
    $region59: #{tpu_custom_call.1} parent=1 // pred_check_branch
      %134 = sbr.rel (0) target = $region61
    $region60: #{tpu_custom_call.1} parent=1 // pred_region
      %s136 = ssub.s32 16, 16
      %137 = vsyncadd [#allocation15], %s136
      %s139 = sshll.u32 [#allocation16], 4
      %s140 = int_to_ptr.vmem [resolvable:$true] %s139
      %142 = dma.hbm_to_vmem [thread:$0]  %s14, 16, %s140, [#allocation15]
    $region61: #{tpu_custom_call.1} parent=1 // pred_fallthru
      _
    // Predicated region
    $region62: #{tpu_custom_call.1} parent=1 // pred_check
      _
    $region63: #{tpu_custom_call.1} parent=1 // pred_check_branch
      %144 = sbr.rel (0) target = $region65
    $region64: #{tpu_custom_call.1} parent=1 // pred_region
      _
    $region65: #{tpu_custom_call.1} parent=1 // pred_fallthru
      _
    // Predicated region
    $region66: #{tpu_custom_call.1} parent=1 // pred_check
      _
    $region67: #{tpu_custom_call.1} parent=1 // pred_check_branch
      %146 = sbr.rel (0) target = $region69
    $region68: #{tpu_custom_call.1} parent=1 // pred_region
      %s148 = ssub.s32 64, 64
      %149 = vsyncadd [#allocation18], %s148
      %s150 = sshll.u32 [#allocation17], 4
      %s151 = int_to_ptr.vmem [resolvable:$true] %s150
      %156 = dma.hbm_to_vmem [thread:$0]  %s16, 64, %s151, [#allocation18], 32, 32, 2
    $region69: #{tpu_custom_call.1} parent=1 // pred_fallthru
      _
    // Predicated region
    $region70: #{tpu_custom_call.1} parent=1 // pred_check
      _
    $region71: #{tpu_custom_call.1} parent=1 // pred_check_branch
      %158 = sbr.rel (0) target = $region73
    $region72: #{tpu_custom_call.1} parent=1 // pred_region
      %s160 = ssub.s32 64, 64
      %161 = vsyncadd [#allocation18], %s160
      %s162 = sshll.u32 [#allocation19], 4
      %s163 = int_to_ptr.vmem [resolvable:$true] %s162
      %168 = dma.hbm_to_vmem [thread:$0]  %s17, 64, %s163, [#allocation18], 32, 32, 2
    $region73: #{tpu_custom_call.1} parent=1 // pred_fallthru
      _
    // Predicated region
    $region74: #{tpu_custom_call.1} parent=1 // pred_check
      _
    $region75: #{tpu_custom_call.1} parent=1 // pred_check_branch
      %170 = sbr.rel (0) target = $region77
    $region76: #{tpu_custom_call.1} parent=1 // pred_region
      %s172 = ssub.s32 64, 64
      %173 = vsyncadd [#allocation21], %s172
      %s174 = sshll.u32 [#allocation20], 4
      %s175 = int_to_ptr.vmem [resolvable:$true] %s174
      %180 = dma.hbm_to_vmem [thread:$0]  %s18, 64, %s175, [#allocation21], 32, 32, 2
    $region77: #{tpu_custom_call.1} parent=1 // pred_fallthru
      _
    // Predicated region
    $region78: #{tpu_custom_call.1} parent=1 // pred_check
      _
    $region79: #{tpu_custom_call.1} parent=1 // pred_check_branch
      %182 = sbr.rel (0) target = $region81
    $region80: #{tpu_custom_call.1} parent=1 // pred_region
      %s184 = ssub.s32 16384, 16384
      %185 = vsyncadd [#allocation21], %s184
      %s186 = sshll.u32 [#allocation22], 4
      %s187 = int_to_ptr.vmem [resolvable:$true] %s186
      %192 = dma.hbm_to_vmem [thread:$0]  %s19, 16384, %s187, [#allocation21], 256, 256, 16
    $region81: #{tpu_custom_call.1} parent=1 // pred_fallthru
      _
    // Predicated region
    $region82: #{tpu_custom_call.1} parent=1 // pred_check
      _
    $region83: #{tpu_custom_call.1} parent=1 // pred_check_branch
      %194 = sbr.rel (0) target = $region85
    $region84: #{tpu_custom_call.1} parent=1 // pred_region
      _
    $region85: #{tpu_custom_call.1} parent=1 // pred_fallthru
      _
    // Predicated region
    $region86: #{tpu_custom_call.1} parent=1 // pred_check
      _
    $region87: #{tpu_custom_call.1} parent=1 // pred_check_branch
      %196 = sbr.rel (0) target = $region89
    $region88: #{tpu_custom_call.1} parent=1 // pred_region
      %s198 = ssub.s32 64, 64
      %199 = vsyncadd [#allocation24], %s198
      %s200 = sshll.u32 [#allocation23], 4
      %s201 = int_to_ptr.vmem [resolvable:$true] %s200
      %206 = dma.hbm_to_vmem [thread:$0]  %s21, 64, %s201, [#allocation24], 32, 32, 2
    $region89: #{tpu_custom_call.1} parent=1 // pred_fallthru
      _
    // Predicated region
    $region90: #{tpu_custom_call.1} parent=1 // pred_check
      _
    $region91: #{tpu_custom_call.1} parent=1 // pred_check_branch
      %208 = sbr.rel (0) target = $region93
    $region92: #{tpu_custom_call.1} parent=1 // pred_region
      %s210 = ssub.s32 64, 64
      %211 = vsyncadd [#allocation24], %s210
      %s212 = sshll.u32 [#allocation25], 4
      %s213 = int_to_ptr.vmem [resolvable:$true] %s212
      %218 = dma.hbm_to_vmem [thread:$0]  %s22, 64, %s213, [#allocation24], 32, 32, 2
    $region93: #{tpu_custom_call.1} parent=1 // pred_fallthru
      _
    // Predicated region
    $region94: #{tpu_custom_call.1} parent=1 // pred_check
      _
    $region95: #{tpu_custom_call.1} parent=1 // pred_check_branch
      %220 = sbr.rel (0) target = $region97
    $region96: #{tpu_custom_call.1} parent=1 // pred_region
      _
    $region97: #{tpu_custom_call.1} parent=1 // pred_fallthru
      _
    // Predicated region
    $region98: #{tpu_custom_call.1} parent=1 // pred_check
      _
    $region99: #{tpu_custom_call.1} parent=1 // pred_check_branch
      %222 = sbr.rel (0) target = $region101
    $region100: #{tpu_custom_call.1} parent=1 // pred_region
      _
    $region101: #{tpu_custom_call.1} parent=1 // pred_fallthru
      _
    // Predicated region
    $region102: #{tpu_custom_call.1} parent=1 // pred_check
      _
    $region103: #{tpu_custom_call.1} parent=1 // pred_check_branch
      %224 = sbr.rel (0) target = $region105
    $region104: #{tpu_custom_call.1} parent=1 // pred_region
      %225 = dma.done [#allocation3], 64
    $region105: #{tpu_custom_call.1} parent=1 // pred_fallthru
      _
    // Predicated region
    $region106: #{tpu_custom_call.1} parent=1 // pred_check
      _
    $region107: #{tpu_custom_call.1} parent=1 // pred_check_branch
      %227 = sbr.rel (0) target = $region109
    $region108: #{tpu_custom_call.1} parent=1 // pred_region
      %228 = dma.done [#allocation6], 32
    $region109: #{tpu_custom_call.1} parent=1 // pred_fallthru
      _
    // Predicated region
    $region110: #{tpu_custom_call.1} parent=1 // pred_check
      _
    $region111: #{tpu_custom_call.1} parent=1 // pred_check_branch
      %230 = sbr.rel (0) target = $region113
    $region112: #{tpu_custom_call.1} parent=1 // pred_region
      %231 = dma.done [#allocation6], 256
    $region113: #{tpu_custom_call.1} parent=1 // pred_fallthru
      _
    // Predicated region
    $region114: #{tpu_custom_call.1} parent=1 // pred_check
      _
    $region115: #{tpu_custom_call.1} parent=1 // pred_check_branch
      %233 = sbr.rel (0) target = $region117
    $region116: #{tpu_custom_call.1} parent=1 // pred_region
      %234 = dma.done [#allocation9], 16
    $region117: #{tpu_custom_call.1} parent=1 // pred_fallthru
      _
    // Predicated region
    $region118: #{tpu_custom_call.1} parent=1 // pred_check
      _
    $region119: #{tpu_custom_call.1} parent=1 // pred_check_branch
      %236 = sbr.rel (0) target = $region121
    $region120: #{tpu_custom_call.1} parent=1 // pred_region
      %237 = dma.done [#allocation9], 2048
    $region121: #{tpu_custom_call.1} parent=1 // pred_fallthru
      _
    // Predicated region
    $region122: #{tpu_custom_call.1} parent=1 // pred_check
      _
    $region123: #{tpu_custom_call.1} parent=1 // pred_check_branch
      %239 = sbr.rel (0) target = $region125
    $region124: #{tpu_custom_call.1} parent=1 // pred_region
      %240 = dma.done [#allocation12], 16
    $region125: #{tpu_custom_call.1} parent=1 // pred_fallthru
      _
    // Predicated region
    $region126: #{tpu_custom_call.1} parent=1 // pred_check
      _
    $region127: #{tpu_custom_call.1} parent=1 // pred_check_branch
      %242 = sbr.rel (0) target = $region129
    $region128: #{tpu_custom_call.1} parent=1 // pred_region
      %243 = dma.done [#allocation12], 16
    $region129: #{tpu_custom_call.1} parent=1 // pred_fallthru
      _
    // Predicated region
    $region130: #{tpu_custom_call.1} parent=1 // pred_check
      _
    $region131: #{tpu_custom_call.1} parent=1 // pred_check_branch
      %245 = sbr.rel (0) target = $region133
    $region132: #{tpu_custom_call.1} parent=1 // pred_region
      %246 = dma.done [#allocation15], 16
    $region133: #{tpu_custom_call.1} parent=1 // pred_fallthru
      _
    // Predicated region
    $region134: #{tpu_custom_call.1} parent=1 // pred_check
      _
    $region135: #{tpu_custom_call.1} parent=1 // pred_check_branch
      %248 = sbr.rel (0) target = $region137
    $region136: #{tpu_custom_call.1} parent=1 // pred_region
      %249 = dma.done [#allocation15], 16
    $region137: #{tpu_custom_call.1} parent=1 // pred_fallthru
      _
    // Predicated region
    $region138: #{tpu_custom_call.1} parent=1 // pred_check
      _
    $region139: #{tpu_custom_call.1} parent=1 // pred_check_branch
      %251 = sbr.rel (0) target = $region141
    $region140: #{tpu_custom_call.1} parent=1 // pred_region
      %252 = dma.done [#allocation18], 64
    $region141: #{tpu_custom_call.1} parent=1 // pred_fallthru
      _
    // Predicated region
    $region142: #{tpu_custom_call.1} parent=1 // pred_check
      _
    $region143: #{tpu_custom_call.1} parent=1 // pred_check_branch
      %254 = sbr.rel (0) target = $region145
    $region144: #{tpu_custom_call.1} parent=1 // pred_region
      %255 = dma.done [#allocation18], 64
    $region145: #{tpu_custom_call.1} parent=1 // pred_fallthru
      _
    // Predicated region
    $region146: #{tpu_custom_call.1} parent=1 // pred_check
      _
    $region147: #{tpu_custom_call.1} parent=1 // pred_check_branch
      %257 = sbr.rel (0) target = $region149
    $region148: #{tpu_custom_call.1} parent=1 // pred_region
      %258 = dma.done [#allocation21], 64
    $region149: #{tpu_custom_call.1} parent=1 // pred_fallthru
      _
    // Predicated region
    $region150: #{tpu_custom_call.1} parent=1 // pred_check
      _
    $region151: #{tpu_custom_call.1} parent=1 // pred_check_branch
      %260 = sbr.rel (0) target = $region153
    $region152: #{tpu_custom_call.1} parent=1 // pred_region
      %261 = dma.done [#allocation21], 16384
    $region153: #{tpu_custom_call.1} parent=1 // pred_fallthru
      _
    // Predicated region
    $region154: #{tpu_custom_call.1} parent=1 // pred_check
      _
    $region155: #{tpu_custom_call.1} parent=1 // pred_check_branch
      %263 = sbr.rel (0) target = $region157
    $region156: #{tpu_custom_call.1} parent=1 // pred_region
      %264 = dma.done [#allocation24], 64
    $region157: #{tpu_custom_call.1} parent=1 // pred_fallthru
      _
    // Predicated region
    $region158: #{tpu_custom_call.1} parent=1 // pred_check
      _
    $region159: #{tpu_custom_call.1} parent=1 // pred_check_branch
      %266 = sbr.rel (0) target = $region161
    $region160: #{tpu_custom_call.1} parent=1 // pred_region
      %267 = dma.done [#allocation24], 64
    $region161: #{tpu_custom_call.1} parent=1 // pred_fallthru
      _
    %v268 = vld [vmem:[%s3] sm:$0xff]
    %v269 = vld [vmem:[%s3 + $0x8] sm:$0xff]
    %v270 = vld [vmem:[%s3 + $0x10] sm:$0xff]
    %v271 = vld [vmem:[%s3 + $0x18] sm:$0xff]
    %v272 = vld [vmem:[%s3 + $0x20] sm:$0xff]
    %v273 = vld [vmem:[%s3 + $0x28] sm:$0xff]
    %v274 = vld [vmem:[%s3 + $0x30] sm:$0xff]
    %v275 = vld [vmem:[%s3 + $0x38] sm:$0xff]
    %v276 = vld [vmem:[%s3 + $0x40] sm:$0xff]
    %v277 = vld [vmem:[%s3 + $0x48] sm:$0xff]
    %v278 = vld [vmem:[%s3 + $0x50] sm:$0xff]
    %v279 = vld [vmem:[%s3 + $0x58] sm:$0xff]
    %v280 = vld [vmem:[%s3 + $0x60] sm:$0xff]
    %v281 = vld [vmem:[%s3 + $0x68] sm:$0xff]
    %v282 = vld [vmem:[%s3 + $0x70] sm:$0xff]
    %v283 = vld [vmem:[%s3 + $0x78] sm:$0xff]
    %v284 = vld [vmem:[%s3 + $0x80] sm:$0xff]
    %v285 = vld [vmem:[%s3 + $0x88] sm:$0xff]
    %v286 = vld [vmem:[%s3 + $0x90] sm:$0xff]
    %v287 = vld [vmem:[%s3 + $0x98] sm:$0xff]
    %v288 = vld [vmem:[%s3 + $0xa0] sm:$0xff]
    %v289 = vld [vmem:[%s3 + $0xa8] sm:$0xff]
    %v290 = vld [vmem:[%s3 + $0xb0] sm:$0xff]
    %v291 = vld [vmem:[%s3 + $0xb8] sm:$0xff]
    %v292 = vld [vmem:[%s3 + $0xc0] sm:$0xff]
    %v293 = vld [vmem:[%s3 + $0xc8] sm:$0xff]
    %v294 = vld [vmem:[%s3 + $0xd0] sm:$0xff]
    %v295 = vld [vmem:[%s3 + $0xd8] sm:$0xff]
    %v296 = vld [vmem:[%s3 + $0xe0] sm:$0xff]
    %v297 = vld [vmem:[%s3 + $0xe8] sm:$0xff]
    %v298 = vld [vmem:[%s3 + $0xf0] sm:$0xff]
    %v299 = vld [vmem:[%s3 + $0xf8] sm:$0xff]
    %v300 = vld [vmem:[#allocation7] sm:$0xff]
    %v301 = vld [vmem:[#allocation7 + $0x8] sm:$0xff]
    %v302 = vld [vmem:[#allocation5] sm:$0x3]
    %v303 = vld [vmem:[%s5] sm:$0xff]
    %v304 = vld [vmem:[%s5 + $0x8] sm:$0xff]
    %v305 = vld [vmem:[%s5 + $0x10] sm:$0xff]
    %v306 = vld [vmem:[%s5 + $0x18] sm:$0xff]
    %v307 = vld [vmem:[#allocation8] sm:$0x1]
    %v309 = vlaneseq
    %v310 = vshrl.u32 %v309, 7
    %v311 = vsub.s32 0, %v310
    %v312 = vrot.slane %v307, %v311
    %vm314 = vcmask 261120
    %v316 = vsel %vm314, %v302, 0
    %318 = vmatprep.subr.mxu0 0.0
    %319 = vmatpush1.msra.mxu0 %v303
    %320 = vmatprep.subr.mxu0 0.0
    %321 = vmatpush1.msra.mxu0 %v304
    %322 = vmatprep.subr.mxu0 0.0
    %323 = vmatpush1.msra.mxu0 %v305
    %324 = vmatprep.subr.mxu0 0.0
    %325 = vmatpush1.msra.mxu0 %v306
    %326 = vmatprep.subr.mxu0 0.0
    %327 = vmatpush1.msra.mxu0 0.0
    %328 = vmatprep.subr.mxu0 0.0
    %329 = vmatpush1.msra.mxu0 0.0
    %330 = vmatprep.subr.mxu0 0.0
    %331 = vmatpush1.msra.mxu0 0.0
    %332 = vmatprep.subr.mxu0 0.0
    %333 = vmatpush1.msra.mxu0 0.0
    %334 = vmatprep.subr.mxu0 0.0
    %335 = vmatpush1.msra.mxu0 0.0
    %336 = vmatprep.subr.mxu0 0.0
    %337 = vmatpush1.msra.mxu0 0.0
    %338 = vmatprep.subr.mxu0 0.0
    %339 = vmatpush1.msra.mxu0 0.0
    %340 = vmatprep.subr.mxu0 0.0
    %341 = vmatpush1.msra.mxu0 0.0
    %342 = vmatprep.subr.mxu0 0.0
    %343 = vmatpush1.msra.mxu0 0.0
    %344 = vmatprep.subr.mxu0 0.0
    %345 = vmatpush1.msra.mxu0 0.0
    %346 = vmatprep.subr.mxu0 0.0
    %347 = vmatpush1.msra.mxu0 0.0
    %348 = vmatprep.subr.mxu0 0.0
    %349 = vmatpush1.msra.mxu0 0.0
    %350 = vmatprep.subr.mxu0 0.0
    %351 = vmatpush1.msra.mxu0 0.0
    %352 = vmatprep.subr.mxu0 0.0
    %353 = vmatpush1.msra.mxu0 0.0
    %354 = vmatprep.subr.mxu0 0.0
    %355 = vmatpush1.msra.mxu0 0.0
    %356 = vmatprep.subr.mxu0 0.0
    %357 = vmatpush1.msra.mxu0 0.0
    %358 = vmatprep.subr.mxu0 0.0
    %359 = vmatpush1.msra.mxu0 0.0
    %360 = vmatprep.subr.mxu0 0.0
    %361 = vmatpush1.msra.mxu0 0.0
    %362 = vmatprep.subr.mxu0 0.0
    %363 = vmatpush1.msra.mxu0 0.0
    %364 = vmatprep.subr.mxu0 0.0
    %365 = vmatpush1.msra.mxu0 0.0
    %366 = vmatprep.subr.mxu0 0.0
    %367 = vmatpush1.msra.mxu0 0.0
    %368 = vmatprep.subr.mxu0 0.0
    %369 = vmatpush1.msra.mxu0 0.0
    %370 = vmatprep.subr.mxu0 0.0
    %371 = vmatpush1.msra.mxu0 0.0
    %372 = vmatprep.subr.mxu0 0.0
    %373 = vmatpush1.msra.mxu0 0.0
    %374 = vmatprep.subr.mxu0 0.0
    %375 = vmatpush1.msra.mxu0 0.0
    %376 = vmatprep.subr.mxu0 0.0
    %377 = vmatpush1.msra.mxu0 0.0
    %378 = vmatprep.subr.mxu0 0.0
    %379 = vmatpush1.msra.mxu0 0.0
    %380 = vmatprep.subr.mxu0 0.0
    %381 = vmatpush1.msra.mxu0 0.0
    %382 = vmatprep.mubr.f32.mxu0 0.0
    %383 = vmatmul.mubr.f32.gmra.mrb[0].mxu0 %v316
    %v384 = vpop.f32.mrb[0].mxu0
    %v385 = vadd.f32 %v312, %v384
    %v386 = vpop.f32.mrb[0].mxu0
    %387 = vdwg.mxu0
    %v388 = vxor.u32 %v385, 2147483648
    %v389 = vmul.f32 %v388, 1.442695
    %v390 = vpow.pop %v389
    %v391 = vadd.f32 %v390, 1.0
    %v392 = vrcp.pop %v391
    %v393 = vmul.f32 1.0, %v392
    %v394 = vmul.f32 %v385, %v393
    %v395 = vld [vmem:[#allocation10] sm:$0xff]
    %v396 = vld [vmem:[#allocation10 + $0x8] sm:$0xff]
    %v397 = vld [vmem:[#allocation10 + $0x10] sm:$0xff]
    %v398 = vld [vmem:[#allocation10 + $0x18] sm:$0xff]
    %v399 = vld [vmem:[#allocation10 + $0x20] sm:$0xff]
    %v400 = vld [vmem:[#allocation10 + $0x28] sm:$0xff]
    %v401 = vld [vmem:[#allocation10 + $0x30] sm:$0xff]
    %v402 = vld [vmem:[#allocation10 + $0x38] sm:$0xff]
    %v403 = vld [vmem:[#allocation10 + $0x40] sm:$0xff]
    %v404 = vld [vmem:[#allocation10 + $0x48] sm:$0xff]
    %v405 = vld [vmem:[#allocation10 + $0x50] sm:$0xff]
    %v406 = vld [vmem:[#allocation10 + $0x58] sm:$0xff]
    %v407 = vld [vmem:[#allocation10 + $0x60] sm:$0xff]
    %v408 = vld [vmem:[#allocation10 + $0x68] sm:$0xff]
    %v409 = vld [vmem:[#allocation10 + $0x70] sm:$0xff]
    %v410 = vld [vmem:[#allocation10 + $0x78] sm:$0xff]
    %v411 = vld [vmem:[#allocation11] sm:$0x1]
    %v413 = vlaneseq
    %v414 = vshrl.u32 %v413, 7
    %v415 = vsub.s32 0, %v414
    %v416 = vrot.slane %v411, %v415
    %418 = vmatprep.subr.mxu0 0.0
    %419 = vmatpush1.msra.mxu0 %v395
    %420 = vmatprep.subr.mxu0 0.0
    %421 = vmatpush1.msra.mxu0 %v396
    %422 = vmatprep.subr.mxu0 0.0
    %423 = vmatpush1.msra.mxu0 %v397
    %424 = vmatprep.subr.mxu0 0.0
    %425 = vmatpush1.msra.mxu0 %v398
    %426 = vmatprep.subr.mxu0 0.0
    %427 = vmatpush1.msra.mxu0 %v399
    %428 = vmatprep.subr.mxu0 0.0
    %429 = vmatpush1.msra.mxu0 %v400
    %430 = vmatprep.subr.mxu0 0.0
    %431 = vmatpush1.msra.mxu0 %v401
    %432 = vmatprep.subr.mxu0 0.0
    %433 = vmatpush1.msra.mxu0 %v402
    %434 = vmatprep.subr.mxu0 0.0
    %435 = vmatpush1.msra.mxu0 %v403
    %436 = vmatprep.subr.mxu0 0.0
    %437 = vmatpush1.msra.mxu0 %v404
    %438 = vmatprep.subr.mxu0 0.0
    %439 = vmatpush1.msra.mxu0 %v405
    %440 = vmatprep.subr.mxu0 0.0
    %441 = vmatpush1.msra.mxu0 %v406
    %442 = vmatprep.subr.mxu0 0.0
    %443 = vmatpush1.msra.mxu0 %v407
    %444 = vmatprep.subr.mxu0 0.0
    %445 = vmatpush1.msra.mxu0 %v408
    %446 = vmatprep.subr.mxu0 0.0
    %447 = vmatpush1.msra.mxu0 %v409
    %448 = vmatprep.subr.mxu0 0.0
    %449 = vmatpush1.msra.mxu0 %v410
    %450 = vmatprep.subr.mxu0 0.0
    %451 = vmatpush1.msra.mxu0 0.0
    %452 = vmatprep.subr.mxu0 0.0
    %453 = vmatpush1.msra.mxu0 0.0
    %454 = vmatprep.subr.mxu0 0.0
    %455 = vmatpush1.msra.mxu0 0.0
    %456 = vmatprep.subr.mxu0 0.0
    %457 = vmatpush1.msra.mxu0 0.0
    %458 = vmatprep.subr.mxu0 0.0
    %459 = vmatpush1.msra.mxu0 0.0
    %460 = vmatprep.subr.mxu0 0.0
    %461 = vmatpush1.msra.mxu0 0.0
    %462 = vmatprep.subr.mxu0 0.0
    %463 = vmatpush1.msra.mxu0 0.0
    %464 = vmatprep.subr.mxu0 0.0
    %465 = vmatpush1.msra.mxu0 0.0
    %466 = vmatprep.subr.mxu0 0.0
    %467 = vmatpush1.msra.mxu0 0.0
    %468 = vmatprep.subr.mxu0 0.0
    %469 = vmatpush1.msra.mxu0 0.0
    %470 = vmatprep.subr.mxu0 0.0
    %471 = vmatpush1.msra.mxu0 0.0
    %472 = vmatprep.subr.mxu0 0.0
    %473 = vmatpush1.msra.mxu0 0.0
    %474 = vmatprep.subr.mxu0 0.0
    %475 = vmatpush1.msra.mxu0 0.0
    %476 = vmatprep.subr.mxu0 0.0
    %477 = vmatpush1.msra.mxu0 0.0
    %478 = vmatprep.subr.mxu0 0.0
    %479 = vmatpush1.msra.mxu0 0.0
    %480 = vmatprep.subr.mxu0 0.0
    %481 = vmatpush1.msra.mxu0 0.0
    %482 = vmatprep.mubr.f32.mxu0 0.0
    %483 = vmatmul.mubr.f32.gmra.mrb[0].mxu0 %v394
    %v484 = vpop.f32.mrb[0].mxu0
    %v485 = vadd.f32 %v416, %v484
    %v486 = vpop.f32.mrb[0].mxu0
    %487 = vdwg.mxu0
    %v488 = vld [vmem:[%s0] sm:$0xf]
    %v489 = vxor.u32 %v488, 2147483648
    %v490 = vmul.f32 %v489, 1.442695
    %v491 = vpow.pop %v490
    %v492 = vadd.f32 %v491, 1.0
    %v493 = vrcp.pop %v492
    %v494 = vmul.f32 1.0, %v493
    %v495 = vmul.f32 %v488, %v494
    %v496 = vld [vmem:[%s9] sm:$0xff]
    %v497 = vld [vmem:[%s9 + $0x8] sm:$0xff]
    %v498 = vld [vmem:[%s9 + $0x10] sm:$0xff]
    %v499 = vld [vmem:[%s9 + $0x18] sm:$0xff]
    %v500 = vld [vmem:[%s9 + $0x20] sm:$0xff]
    %v501 = vld [vmem:[%s9 + $0x28] sm:$0xff]
    %v502 = vld [vmem:[%s9 + $0x30] sm:$0xff]
    %v503 = vld [vmem:[%s9 + $0x38] sm:$0xff]
    %v504 = vld [vmem:[%s9 + $0x40] sm:$0xff]
    %v505 = vld [vmem:[%s9 + $0x48] sm:$0xff]
    %v506 = vld [vmem:[%s9 + $0x50] sm:$0xff]
    %v507 = vld [vmem:[%s9 + $0x58] sm:$0xff]
    %v508 = vld [vmem:[%s9 + $0x60] sm:$0xff]
    %v509 = vld [vmem:[%s9 + $0x68] sm:$0xff]
    %v510 = vld [vmem:[%s9 + $0x70] sm:$0xff]
    %v511 = vld [vmem:[%s9 + $0x78] sm:$0xff]
    %v512 = vld [vmem:[%s9 + $0x80] sm:$0xff]
    %v513 = vld [vmem:[%s9 + $0x88] sm:$0xff]
    %v514 = vld [vmem:[#allocation13] sm:$0x1]
    %v516 = vlaneseq
    %v517 = vshrl.u32 %v516, 7
    %v518 = vsub.s32 0, %v517
    %v519 = vrot.slane %v514, %v518
    %v523 = vunpack.c.l.s4 1983009808
    %v524 = vunpack.c.0.s8 %v523
    %v525 = vlaneseq
    %v526 = vshrl.u32 %v525, 7
    %v527 = vsub.s32 %v524, %v526
    %v528 = vrot.slane %v495, %v527
    %v529 = vcombine.high %v528, %v528
    %vm531 = vcmask 130048
    %v532 = vsel %vm531, %v529, 0
    %534 = vmatprep.subr.mxu0 0.0
    %535 = vmatpush1.msra.mxu0 %v496
    %536 = vmatprep.subr.mxu0 0.0
    %537 = vmatpush1.msra.mxu0 %v497
    %538 = vmatprep.subr.mxu0 0.0
    %539 = vmatpush1.msra.mxu0 %v498
    %540 = vmatprep.subr.mxu0 0.0
    %541 = vmatpush1.msra.mxu0 %v499
    %542 = vmatprep.subr.mxu0 0.0
    %543 = vmatpush1.msra.mxu0 %v500
    %544 = vmatprep.subr.mxu0 0.0
    %545 = vmatpush1.msra.mxu0 %v501
    %546 = vmatprep.subr.mxu0 0.0
    %547 = vmatpush1.msra.mxu0 %v502
    %548 = vmatprep.subr.mxu0 0.0
    %549 = vmatpush1.msra.mxu0 %v503
    %550 = vmatprep.subr.mxu0 0.0
    %551 = vmatpush1.msra.mxu0 %v504
    %552 = vmatprep.subr.mxu0 0.0
    %553 = vmatpush1.msra.mxu0 %v505
    %554 = vmatprep.subr.mxu0 0.0
    %555 = vmatpush1.msra.mxu0 %v506
    %556 = vmatprep.subr.mxu0 0.0
    %557 = vmatpush1.msra.mxu0 %v507
    %558 = vmatprep.subr.mxu0 0.0
    %559 = vmatpush1.msra.mxu0 %v508
    %560 = vmatprep.subr.mxu0 0.0
    %561 = vmatpush1.msra.mxu0 %v509
    %562 = vmatprep.subr.mxu0 0.0
    %563 = vmatpush1.msra.mxu0 %v510
    %564 = vmatprep.subr.mxu0 0.0
    %565 = vmatpush1.msra.mxu0 %v511
    %566 = vmatprep.subr.mxu0 0.0
    %567 = vmatpush1.msra.mxu0 %v512
    %568 = vmatprep.subr.mxu0 0.0
    %569 = vmatpush1.msra.mxu0 %v513
    %570 = vmatprep.subr.mxu0 0.0
    %571 = vmatpush1.msra.mxu0 0.0
    %572 = vmatprep.subr.mxu0 0.0
    %573 = vmatpush1.msra.mxu0 0.0
    %574 = vmatprep.subr.mxu0 0.0
    %575 = vmatpush1.msra.mxu0 0.0
    %576 = vmatprep.subr.mxu0 0.0
    %577 = vmatpush1.msra.mxu0 0.0
    %578 = vmatprep.subr.mxu0 0.0
    %579 = vmatpush1.msra.mxu0 0.0
    %580 = vmatprep.subr.mxu0 0.0
    %581 = vmatpush1.msra.mxu0 0.0
    %582 = vmatprep.subr.mxu0 0.0
    %583 = vmatpush1.msra.mxu0 0.0
    %584 = vmatprep.subr.mxu0 0.0
    %585 = vmatpush1.msra.mxu0 0.0
    %586 = vmatprep.subr.mxu0 0.0
    %587 = vmatpush1.msra.mxu0 0.0
    %588 = vmatprep.subr.mxu0 0.0
    %589 = vmatpush1.msra.mxu0 0.0
    %590 = vmatprep.subr.mxu0 0.0
    %591 = vmatpush1.msra.mxu0 0.0
    %592 = vmatprep.subr.mxu0 0.0
    %593 = vmatpush1.msra.mxu0 0.0
    %594 = vmatprep.subr.mxu0 0.0
    %595 = vmatpush1.msra.mxu0 0.0
    %596 = vmatprep.subr.mxu0 0.0
    %597 = vmatpush1.msra.mxu0 0.0
    %598 = vmatprep.mubr.f32.mxu0 %v532
    %599 = vmatmul.mubr.f32.gmra.mrb[0].mxu0 %v528
    %v600 = vpop.f32.mrb[0].mxu0
    %v601 = vadd.f32 %v519, %v600
    %v602 = vpop.f32.mrb[0].mxu0
    %603 = vdwg.mxu0
    %v604 = vld [vmem:[#allocation2] sm:$0xf]
    %v605 = vxor.u32 %v604, 2147483648
    %v606 = vmul.f32 %v605, 1.442695
    %v607 = vpow.pop %v606
    %v608 = vadd.f32 %v607, 1.0
    %v609 = vrcp.pop %v608
    %v610 = vmul.f32 1.0, %v609
    %v611 = vmul.f32 %v604, %v610
    %v612 = vld [vmem:[%s11] sm:$0xff]
    %v613 = vld [vmem:[%s11 + $0x8] sm:$0xff]
    %v614 = vld [vmem:[%s11 + $0x10] sm:$0xff]
    %v615 = vld [vmem:[%s11 + $0x18] sm:$0xff]
    %v616 = vld [vmem:[%s11 + $0x20] sm:$0xff]
    %v617 = vld [vmem:[%s11 + $0x28] sm:$0xff]
    %v618 = vld [vmem:[%s11 + $0x30] sm:$0xff]
    %v619 = vld [vmem:[%s11 + $0x38] sm:$0xff]
    %v620 = vld [vmem:[%s11 + $0x40] sm:$0xff]
    %v621 = vld [vmem:[%s11 + $0x48] sm:$0xff]
    %v622 = vld [vmem:[%s11 + $0x50] sm:$0xff]
    %v623 = vld [vmem:[%s11 + $0x58] sm:$0xff]
    %v624 = vld [vmem:[%s11 + $0x60] sm:$0xff]
    %v625 = vld [vmem:[%s11 + $0x68] sm:$0xff]
    %v626 = vld [vmem:[%s11 + $0x70] sm:$0xff]
    %v627 = vld [vmem:[%s11 + $0x78] sm:$0xff]
    %v628 = vld [vmem:[%s11 + $0x80] sm:$0xff]
    %v629 = vld [vmem:[%s11 + $0x88] sm:$0xff]
    %v630 = vld [vmem:[%s11 + $0x90] sm:$0xff]
    %v631 = vld [vmem:[%s11 + $0x98] sm:$0xff]
    %v632 = vld [vmem:[%s11 + $0xa0] sm:$0xff]
    %v633 = vld [vmem:[%s11 + $0xa8] sm:$0xff]
    %v634 = vld [vmem:[%s11 + $0xb0] sm:$0xff]
    %v635 = vld [vmem:[%s11 + $0xb8] sm:$0xff]
    %v636 = vld [vmem:[%s11 + $0xc0] sm:$0xff]
    %v637 = vld [vmem:[%s11 + $0xc8] sm:$0xff]
    %v638 = vld [vmem:[%s11 + $0xd0] sm:$0xff]
    %v639 = vld [vmem:[%s11 + $0xd8] sm:$0xff]
    %v640 = vld [vmem:[%s11 + $0xe0] sm:$0xff]
    %v641 = vld [vmem:[%s11 + $0xe8] sm:$0xff]
    %v642 = vld [vmem:[%s11 + $0xf0] sm:$0xff]
    %v643 = vld [vmem:[%s11 + $0xf8] sm:$0xff]
    %v644 = vld [vmem:[#allocation14] sm:$0x1]
    %v646 = vlaneseq
    %v647 = vshrl.u32 %v646, 7
    %v648 = vsub.s32 0, %v647
    %v649 = vrot.slane %v644, %v648
    %v653 = vunpack.c.l.s4 1983009808
    %v654 = vunpack.c.0.s8 %v653
    %v655 = vlaneseq
    %v656 = vshrl.u32 %v655, 7
    %v657 = vsub.s32 %v654, %v656
    %v658 = vrot.slane %v611, %v657
    %v659 = vcombine.high %v658, %v658
    %662 = vmatprep.subr.mxu0 0.0
    %663 = vmatpush1.msra.mxu0 %v612
    %664 = vmatprep.subr.mxu0 0.0
    %665 = vmatpush1.msra.mxu0 %v613
    %666 = vmatprep.subr.mxu0 0.0
    %667 = vmatpush1.msra.mxu0 %v614
    %668 = vmatprep.subr.mxu0 0.0
    %669 = vmatpush1.msra.mxu0 %v615
    %670 = vmatprep.subr.mxu0 0.0
    %671 = vmatpush1.msra.mxu0 %v616
    %672 = vmatprep.subr.mxu0 0.0
    %673 = vmatpush1.msra.mxu0 %v617
    %674 = vmatprep.subr.mxu0 0.0
    %675 = vmatpush1.msra.mxu0 %v618
    %676 = vmatprep.subr.mxu0 0.0
    %677 = vmatpush1.msra.mxu0 %v619
    %678 = vmatprep.subr.mxu0 0.0
    %679 = vmatpush1.msra.mxu0 %v620
    %680 = vmatprep.subr.mxu0 0.0
    %681 = vmatpush1.msra.mxu0 %v621
    %682 = vmatprep.subr.mxu0 0.0
    %683 = vmatpush1.msra.mxu0 %v622
    %684 = vmatprep.subr.mxu0 0.0
    %685 = vmatpush1.msra.mxu0 %v623
    %686 = vmatprep.subr.mxu0 0.0
    %687 = vmatpush1.msra.mxu0 %v624
    %688 = vmatprep.subr.mxu0 0.0
    %689 = vmatpush1.msra.mxu0 %v625
    %690 = vmatprep.subr.mxu0 0.0
    %691 = vmatpush1.msra.mxu0 %v626
    %692 = vmatprep.subr.mxu0 0.0
    %693 = vmatpush1.msra.mxu0 %v627
    %694 = vmatprep.subr.mxu0 0.0
    %695 = vmatpush1.msra.mxu0 %v628
    %696 = vmatprep.subr.mxu0 0.0
    %697 = vmatpush1.msra.mxu0 %v629
    %698 = vmatprep.subr.mxu0 0.0
    %699 = vmatpush1.msra.mxu0 %v630
    %700 = vmatprep.subr.mxu0 0.0
    %701 = vmatpush1.msra.mxu0 %v631
    %702 = vmatprep.subr.mxu0 0.0
    %703 = vmatpush1.msra.mxu0 %v632
    %704 = vmatprep.subr.mxu0 0.0
    %705 = vmatpush1.msra.mxu0 %v633
    %706 = vmatprep.subr.mxu0 0.0
    %707 = vmatpush1.msra.mxu0 %v634
    %708 = vmatprep.subr.mxu0 0.0
    %709 = vmatpush1.msra.mxu0 %v635
    %710 = vmatprep.subr.mxu0 0.0
    %711 = vmatpush1.msra.mxu0 %v636
    %712 = vmatprep.subr.mxu0 0.0
    %713 = vmatpush1.msra.mxu0 %v637
    %714 = vmatprep.subr.mxu0 0.0
    %715 = vmatpush1.msra.mxu0 %v638
    %716 = vmatprep.subr.mxu0 0.0
    %717 = vmatpush1.msra.mxu0 %v639
    %718 = vmatprep.subr.mxu0 0.0
    %719 = vmatpush1.msra.mxu0 %v640
    %720 = vmatprep.subr.mxu0 0.0
    %721 = vmatpush1.msra.mxu0 %v641
    %722 = vmatprep.subr.mxu0 0.0
    %723 = vmatpush1.msra.mxu0 %v642
    %724 = vmatprep.subr.mxu0 0.0
    %725 = vmatpush1.msra.mxu0 %v643
    %726 = vmatprep.mubr.f32.mxu0 %v659
    %727 = vmatmul.mubr.f32.gmra.mrb[0].mxu0 %v658
    %v728 = vpop.f32.mrb[0].mxu0
    %v729 = vadd.f32 %v649, %v728
    %v730 = vpop.f32.mrb[0].mxu0
    %731 = vdwg.mxu0
    %v732 = vxor.u32 %v485, 2147483648
    %v733 = vmul.f32 %v732, 1.442695
    %v734 = vpow.pop %v733
    %v735 = vadd.f32 %v734, 1.0
    %v736 = vrcp.pop %v735
    %v737 = vmul.f32 1.0, %v736
    %v738 = vmul.f32 %v485, %v737
    %v739 = vld [vmem:[%s13] sm:$0xff]
    %v740 = vld [vmem:[%s13 + $0x8] sm:$0xff]
    %v741 = vld [vmem:[%s13 + $0x10] sm:$0xff]
    %v742 = vld [vmem:[%s13 + $0x18] sm:$0xff]
    %v743 = vld [vmem:[%s13 + $0x20] sm:$0xff]
    %v744 = vld [vmem:[%s13 + $0x28] sm:$0xff]
    %v745 = vld [vmem:[%s13 + $0x30] sm:$0xff]
    %v746 = vld [vmem:[%s13 + $0x38] sm:$0xff]
    %v747 = vld [vmem:[%s13 + $0x40] sm:$0xff]
    %v748 = vld [vmem:[%s13 + $0x48] sm:$0xff]
    %v749 = vld [vmem:[%s13 + $0x50] sm:$0xff]
    %v750 = vld [vmem:[%s13 + $0x58] sm:$0xff]
    %v751 = vld [vmem:[%s13 + $0x60] sm:$0xff]
    %v752 = vld [vmem:[%s13 + $0x68] sm:$0xff]
    %v753 = vld [vmem:[%s13 + $0x70] sm:$0xff]
    %v754 = vld [vmem:[%s13 + $0x78] sm:$0xff]
    %v755 = vld [vmem:[#allocation16] sm:$0x1]
    %v757 = vlaneseq
    %v758 = vshrl.u32 %v757, 7
    %v759 = vsub.s32 0, %v758
    %v760 = vrot.slane %v755, %v759
    %762 = vmatprep.subr.mxu0 0.0
    %763 = vmatpush1.msra.mxu0 %v739
    %764 = vmatprep.subr.mxu0 0.0
    %765 = vmatpush1.msra.mxu0 %v740
    %766 = vmatprep.subr.mxu0 0.0
    %767 = vmatpush1.msra.mxu0 %v741
    %768 = vmatprep.subr.mxu0 0.0
    %769 = vmatpush1.msra.mxu0 %v742
    %770 = vmatprep.subr.mxu0 0.0
    %771 = vmatpush1.msra.mxu0 %v743
    %772 = vmatprep.subr.mxu0 0.0
    %773 = vmatpush1.msra.mxu0 %v744
    %774 = vmatprep.subr.mxu0 0.0
    %775 = vmatpush1.msra.mxu0 %v745
    %776 = vmatprep.subr.mxu0 0.0
    %777 = vmatpush1.msra.mxu0 %v746
    %778 = vmatprep.subr.mxu0 0.0
    %779 = vmatpush1.msra.mxu0 %v747
    %780 = vmatprep.subr.mxu0 0.0
    %781 = vmatpush1.msra.mxu0 %v748
    %782 = vmatprep.subr.mxu0 0.0
    %783 = vmatpush1.msra.mxu0 %v749
    %784 = vmatprep.subr.mxu0 0.0
    %785 = vmatpush1.msra.mxu0 %v750
    %786 = vmatprep.subr.mxu0 0.0
    %787 = vmatpush1.msra.mxu0 %v751
    %788 = vmatprep.subr.mxu0 0.0
    %789 = vmatpush1.msra.mxu0 %v752
    %790 = vmatprep.subr.mxu0 0.0
    %791 = vmatpush1.msra.mxu0 %v753
    %792 = vmatprep.subr.mxu0 0.0
    %793 = vmatpush1.msra.mxu0 %v754
    %794 = vmatprep.subr.mxu0 0.0
    %795 = vmatpush1.msra.mxu0 0.0
    %796 = vmatprep.subr.mxu0 0.0
    %797 = vmatpush1.msra.mxu0 0.0
    %798 = vmatprep.subr.mxu0 0.0
    %799 = vmatpush1.msra.mxu0 0.0
    %800 = vmatprep.subr.mxu0 0.0
    %801 = vmatpush1.msra.mxu0 0.0
    %802 = vmatprep.subr.mxu0 0.0
    %803 = vmatpush1.msra.mxu0 0.0
    %804 = vmatprep.subr.mxu0 0.0
    %805 = vmatpush1.msra.mxu0 0.0
    %806 = vmatprep.subr.mxu0 0.0
    %807 = vmatpush1.msra.mxu0 0.0
    %808 = vmatprep.subr.mxu0 0.0
    %809 = vmatpush1.msra.mxu0 0.0
    %810 = vmatprep.subr.mxu0 0.0
    %811 = vmatpush1.msra.mxu0 0.0
    %812 = vmatprep.subr.mxu0 0.0
    %813 = vmatpush1.msra.mxu0 0.0
    %814 = vmatprep.subr.mxu0 0.0
    %815 = vmatpush1.msra.mxu0 0.0
    %816 = vmatprep.subr.mxu0 0.0
    %817 = vmatpush1.msra.mxu0 0.0
    %818 = vmatprep.subr.mxu0 0.0
    %819 = vmatpush1.msra.mxu0 0.0
    %820 = vmatprep.subr.mxu0 0.0
    %821 = vmatpush1.msra.mxu0 0.0
    %822 = vmatprep.subr.mxu0 0.0
    %823 = vmatpush1.msra.mxu0 0.0
    %824 = vmatprep.subr.mxu0 0.0
    %825 = vmatpush1.msra.mxu0 0.0
    %826 = vmatprep.mubr.f32.mxu0 0.0
    %827 = vmatmul.mubr.f32.gmra.mrb[0].mxu0 %v738
    %v828 = vpop.f32.mrb[0].mxu0
    %v829 = vadd.f32 %v760, %v828
    %v830 = vpop.f32.mrb[0].mxu0
    %831 = vdwg.mxu0
    %833 = vrot.lane.b32.xlu0 %v729, 64
    %v834 = vpop.permute.xlu0 %833
    %837 = vrot.lane.b32.xlu0 %v829, 64
    %v838 = vpop.permute.xlu0 %837
    %vm840 = vcmask 523264
    %v841 = vsel %vm840, %v601, %v834
    %v842 = vsel %vm840, %v834, %v838
    %v843 = vld [vmem:[%s15] sm:$0xff]
    %v844 = vld [vmem:[%s15 + $0x8] sm:$0xff]
    %v845 = vld [vmem:[%s15 + $0x10] sm:$0xff]
    %v846 = vld [vmem:[%s15 + $0x18] sm:$0xff]
    %v847 = vld [vmem:[%s15 + $0x20] sm:$0xff]
    %v848 = vld [vmem:[%s15 + $0x28] sm:$0xff]
    %v849 = vld [vmem:[%s15 + $0x30] sm:$0xff]
    %v850 = vld [vmem:[%s15 + $0x38] sm:$0xff]
    %v851 = vld [vmem:[%s15 + $0x40] sm:$0xff]
    %v852 = vld [vmem:[%s15 + $0x48] sm:$0xff]
    %v853 = vld [vmem:[%s15 + $0x50] sm:$0xff]
    %v854 = vld [vmem:[%s15 + $0x58] sm:$0xff]
    %v855 = vld [vmem:[%s15 + $0x60] sm:$0xff]
    %v856 = vld [vmem:[%s15 + $0x68] sm:$0xff]
    %v857 = vld [vmem:[%s15 + $0x70] sm:$0xff]
    %v858 = vld [vmem:[%s15 + $0x78] sm:$0xff]
    %v859 = vld [vmem:[%s15 + $0x80] sm:$0xff]
    %v860 = vld [vmem:[%s15 + $0x88] sm:$0xff]
    %v861 = vld [vmem:[%s15 + $0x90] sm:$0xff]
    %v862 = vld [vmem:[%s15 + $0x98] sm:$0xff]
    %v863 = vld [vmem:[%s15 + $0xa0] sm:$0xff]
    %v864 = vld [vmem:[%s15 + $0xa8] sm:$0xff]
    %v865 = vld [vmem:[%s15 + $0xb0] sm:$0xff]
    %v866 = vld [vmem:[%s15 + $0xb8] sm:$0xff]
    %v867 = vld [vmem:[%s15 + $0xc0] sm:$0xff]
    %v868 = vld [vmem:[%s15 + $0xc8] sm:$0xff]
    %v869 = vld [vmem:[%s15 + $0xd0] sm:$0xff]
    %v870 = vld [vmem:[%s15 + $0xd8] sm:$0xff]
    %v871 = vld [vmem:[%s15 + $0xe0] sm:$0xff]
    %v872 = vld [vmem:[%s15 + $0xe8] sm:$0xff]
    %v873 = vld [vmem:[%s15 + $0xf0] sm:$0xff]
    %v874 = vld [vmem:[%s15 + $0xf8] sm:$0xff]
    %v875 = vld [vmem:[%s15 + $0x100] sm:$0xff]
    %v876 = vld [vmem:[%s15 + $0x108] sm:$0xff]
    %v877 = vld [vmem:[%s15 + $0x110] sm:$0xff]
    %v878 = vld [vmem:[%s15 + $0x118] sm:$0xff]
    %v879 = vld [vmem:[%s15 + $0x120] sm:$0xff]
    %v880 = vld [vmem:[%s15 + $0x128] sm:$0xff]
    %v881 = vld [vmem:[%s15 + $0x130] sm:$0xff]
    %v882 = vld [vmem:[%s15 + $0x138] sm:$0xff]
    %v883 = vld [vmem:[%s15 + $0x140] sm:$0xff]
    %v884 = vld [vmem:[%s15 + $0x148] sm:$0xff]
    %v885 = vld [vmem:[%s15 + $0x150] sm:$0xff]
    %v886 = vld [vmem:[%s15 + $0x158] sm:$0xff]
    %v887 = vld [vmem:[%s15 + $0x160] sm:$0xff]
    %v888 = vld [vmem:[%s15 + $0x168] sm:$0xff]
    %v889 = vld [vmem:[%s15 + $0x170] sm:$0xff]
    %v890 = vld [vmem:[%s15 + $0x178] sm:$0xff]
    %v891 = vld [vmem:[%s15 + $0x180] sm:$0xff]
    %v892 = vld [vmem:[%s15 + $0x188] sm:$0xff]
    %v893 = vld [vmem:[%s15 + $0x190] sm:$0xff]
    %v894 = vld [vmem:[%s15 + $0x198] sm:$0xff]
    %v895 = vld [vmem:[%s15 + $0x1a0] sm:$0xff]
    %v896 = vld [vmem:[%s15 + $0x1a8] sm:$0xff]
    %v897 = vld [vmem:[%s15 + $0x1b0] sm:$0xff]
    %v898 = vld [vmem:[%s15 + $0x1b8] sm:$0xff]
    %v899 = vld [vmem:[%s15 + $0x1c0] sm:$0xff]
    %v900 = vld [vmem:[%s15 + $0x1c8] sm:$0xff]
    %v901 = vld [vmem:[%s15 + $0x1d0] sm:$0xff]
    %v902 = vld [vmem:[%s15 + $0x1d8] sm:$0xff]
    %v903 = vld [vmem:[%s15 + $0x1e0] sm:$0xff]
    %v904 = vld [vmem:[%s15 + $0x1e8] sm:$0xff]
    %v905 = vld [vmem:[%s15 + $0x1f0] sm:$0xff]
    %v906 = vld [vmem:[%s15 + $0x1f8] sm:$0xff]
    %v907 = vld [vmem:[#allocation17] sm:$0x3]
    %v909 = vlaneseq
    %v910 = vshrl.u32 %v909, 7
    %v911 = vsub.s32 0, %v910
    %v912 = vrot.slane %v907, %v911
    %v913 = vlaneseq
    %v914 = vshrl.u32 %v913, 7
    %v915 = vsub.s32 1, %v914
    %v916 = vrot.slane %v907, %v915
    %919 = vmatprep.subr.mxu0 %v844
    %920 = vmatpush1.msra.mxu0 %v843
    %921 = vmatprep.subr.mxu0 %v846
    %922 = vmatpush1.msra.mxu0 %v845
    %923 = vmatprep.subr.mxu0 %v848
    %924 = vmatpush1.msra.mxu0 %v847
    %925 = vmatprep.subr.mxu0 %v850
    %926 = vmatpush1.msra.mxu0 %v849
    %927 = vmatprep.subr.mxu0 %v852
    %928 = vmatpush1.msra.mxu0 %v851
    %929 = vmatprep.subr.mxu0 %v854
    %930 = vmatpush1.msra.mxu0 %v853
    %931 = vmatprep.subr.mxu0 %v856
    %932 = vmatpush1.msra.mxu0 %v855
    %933 = vmatprep.subr.mxu0 %v858
    %934 = vmatpush1.msra.mxu0 %v857
    %935 = vmatprep.subr.mxu0 %v860
    %936 = vmatpush1.msra.mxu0 %v859
    %937 = vmatprep.subr.mxu0 %v862
    %938 = vmatpush1.msra.mxu0 %v861
    %939 = vmatprep.subr.mxu0 %v864
    %940 = vmatpush1.msra.mxu0 %v863
    %941 = vmatprep.subr.mxu0 %v866
    %942 = vmatpush1.msra.mxu0 %v865
    %943 = vmatprep.subr.mxu0 %v868
    %944 = vmatpush1.msra.mxu0 %v867
    %945 = vmatprep.subr.mxu0 %v870
    %946 = vmatpush1.msra.mxu0 %v869
    %947 = vmatprep.subr.mxu0 %v872
    %948 = vmatpush1.msra.mxu0 %v871
    %949 = vmatprep.subr.mxu0 %v874
    %950 = vmatpush1.msra.mxu0 %v873
    %951 = vmatprep.subr.mxu0 %v876
    %952 = vmatpush1.msra.mxu0 %v875
    %953 = vmatprep.subr.mxu0 %v878
    %954 = vmatpush1.msra.mxu0 %v877
    %955 = vmatprep.subr.mxu0 %v880
    %956 = vmatpush1.msra.mxu0 %v879
    %957 = vmatprep.subr.mxu0 %v882
    %958 = vmatpush1.msra.mxu0 %v881
    %959 = vmatprep.subr.mxu0 %v884
    %960 = vmatpush1.msra.mxu0 %v883
    %961 = vmatprep.subr.mxu0 %v886
    %962 = vmatpush1.msra.mxu0 %v885
    %963 = vmatprep.subr.mxu0 %v888
    %964 = vmatpush1.msra.mxu0 %v887
    %965 = vmatprep.subr.mxu0 %v890
    %966 = vmatpush1.msra.mxu0 %v889
    %967 = vmatprep.subr.mxu0 %v892
    %968 = vmatpush1.msra.mxu0 %v891
    %969 = vmatprep.subr.mxu0 %v894
    %970 = vmatpush1.msra.mxu0 %v893
    %971 = vmatprep.subr.mxu0 %v896
    %972 = vmatpush1.msra.mxu0 %v895
    %973 = vmatprep.subr.mxu0 %v898
    %974 = vmatpush1.msra.mxu0 %v897
    %975 = vmatprep.subr.mxu0 %v900
    %976 = vmatpush1.msra.mxu0 %v899
    %977 = vmatprep.subr.mxu0 %v902
    %978 = vmatpush1.msra.mxu0 %v901
    %979 = vmatprep.subr.mxu0 %v904
    %980 = vmatpush1.msra.mxu0 %v903
    %981 = vmatprep.subr.mxu0 %v906
    %982 = vmatpush1.msra.mxu0 %v905
    %983 = vmatprep.mubr.f32.mxu0 %v842
    %984 = vmatmul.mubr.f32.gmra.mrb[0].mxu0 %v841
    %v985 = vpop.f32.mrb[0].mxu0
    %v986 = vadd.f32 %v912, %v985
    %v987 = vpop.f32.mrb[0].mxu0
    %v988 = vadd.f32 %v916, %v987
    %989 = vdwg.mxu0
    %v990 = vld [vmem:[#allocation19] sm:$0x3]
    %v991 = vld [vmem:[#allocation20] sm:$0x3]
    %992 = vmatprep.subr.mxu0 0.0
    %993 = vmatpush1.msra.mxu0 %v268
    %994 = vmatprep.subr.mxu0 0.0
    %995 = vmatpush1.msra.mxu0 %v269
    %996 = vmatprep.subr.mxu0 0.0
    %997 = vmatpush1.msra.mxu0 %v270
    %998 = vmatprep.subr.mxu0 0.0
    %999 = vmatpush1.msra.mxu0 %v271
    %1000 = vmatprep.subr.mxu0 0.0
    %1001 = vmatpush1.msra.mxu0 %v272
    %1002 = vmatprep.subr.mxu0 0.0
    %1003 = vmatpush1.msra.mxu0 %v273
    %1004 = vmatprep.subr.mxu0 0.0
    %1005 = vmatpush1.msra.mxu0 %v274
    %1006 = vmatprep.subr.mxu0 0.0
    %1007 = vmatpush1.msra.mxu0 %v275
    %1008 = vmatprep.subr.mxu0 0.0
    %1009 = vmatpush1.msra.mxu0 %v276
    %1010 = vmatprep.subr.mxu0 0.0
    %1011 = vmatpush1.msra.mxu0 %v277
    %1012 = vmatprep.subr.mxu0 0.0
    %1013 = vmatpush1.msra.mxu0 %v278
    %1014 = vmatprep.subr.mxu0 0.0
    %1015 = vmatpush1.msra.mxu0 %v279
    %1016 = vmatprep.subr.mxu0 0.0
    %1017 = vmatpush1.msra.mxu0 %v280
    %1018 = vmatprep.subr.mxu0 0.0
    %1019 = vmatpush1.msra.mxu0 %v281
    %1020 = vmatprep.subr.mxu0 0.0
    %1021 = vmatpush1.msra.mxu0 %v282
    %1022 = vmatprep.subr.mxu0 0.0
    %1023 = vmatpush1.msra.mxu0 %v283
    %1024 = vmatprep.subr.mxu0 0.0
    %1025 = vmatpush1.msra.mxu0 %v284
    %1026 = vmatprep.subr.mxu0 0.0
    %1027 = vmatpush1.msra.mxu0 %v285
    %1028 = vmatprep.subr.mxu0 0.0
    %1029 = vmatpush1.msra.mxu0 %v286
    %1030 = vmatprep.subr.mxu0 0.0
    %1031 = vmatpush1.msra.mxu0 %v287
    %1032 = vmatprep.subr.mxu0 0.0
    %1033 = vmatpush1.msra.mxu0 %v288
    %1034 = vmatprep.subr.mxu0 0.0
    %1035 = vmatpush1.msra.mxu0 %v289
    %1036 = vmatprep.subr.mxu0 0.0
    %1037 = vmatpush1.msra.mxu0 %v290
    %1038 = vmatprep.subr.mxu0 0.0
    %1039 = vmatpush1.msra.mxu0 %v291
    %1040 = vmatprep.subr.mxu0 0.0
    %1041 = vmatpush1.msra.mxu0 %v292
    %1042 = vmatprep.subr.mxu0 0.0
    %1043 = vmatpush1.msra.mxu0 %v293
    %1044 = vmatprep.subr.mxu0 0.0
    %1045 = vmatpush1.msra.mxu0 %v294
    %1046 = vmatprep.subr.mxu0 0.0
    %1047 = vmatpush1.msra.mxu0 %v295
    %1048 = vmatprep.subr.mxu0 0.0
    %1049 = vmatpush1.msra.mxu0 %v296
    %1050 = vmatprep.subr.mxu0 0.0
    %1051 = vmatpush1.msra.mxu0 %v297
    %1052 = vmatprep.subr.mxu0 0.0
    %1053 = vmatpush1.msra.mxu0 %v298
    %1054 = vmatprep.subr.mxu0 0.0
    %1055 = vmatpush1.msra.mxu0 %v299
    %1056 = vmatprep.mubr.f32.mxu0 %v988
    %1057 = vmatmul.mubr.f32.gmra.mrb[0].mxu0 %v986
    %v1058 = vpop.f32.mrb[0].mxu0
    %v1059 = vadd.f32 0.0, %v1058
    %v1060 = vpop.f32.mrb[0].mxu0
    %1061 = vdwg.mxu0
    %v1062 = vmul.f32 %v1059, 0.03125
    %v1063 = vmul.f32 %v986, %v986
    %v1064 = vmul.f32 %v988, %v988
    %1065 = vmatprep.subr.mxu0 0.0
    %1066 = vmatpush1.msra.mxu0 %v268
    %1067 = vmatprep.subr.mxu0 0.0
    %1068 = vmatpush1.msra.mxu0 %v269
    %1069 = vmatprep.subr.mxu0 0.0
    %1070 = vmatpush1.msra.mxu0 %v270
    %1071 = vmatprep.subr.mxu0 0.0
    %1072 = vmatpush1.msra.mxu0 %v271
    %1073 = vmatprep.subr.mxu0 0.0
    %1074 = vmatpush1.msra.mxu0 %v272
    %1075 = vmatprep.subr.mxu0 0.0
    %1076 = vmatpush1.msra.mxu0 %v273
    %1077 = vmatprep.subr.mxu0 0.0
    %1078 = vmatpush1.msra.mxu0 %v274
    %1079 = vmatprep.subr.mxu0 0.0
    %1080 = vmatpush1.msra.mxu0 %v275
    %1081 = vmatprep.subr.mxu0 0.0
    %1082 = vmatpush1.msra.mxu0 %v276
    %1083 = vmatprep.subr.mxu0 0.0
    %1084 = vmatpush1.msra.mxu0 %v277
    %1085 = vmatprep.subr.mxu0 0.0
    %1086 = vmatpush1.msra.mxu0 %v278
    %1087 = vmatprep.subr.mxu0 0.0
    %1088 = vmatpush1.msra.mxu0 %v279
    %1089 = vmatprep.subr.mxu0 0.0
    %1090 = vmatpush1.msra.mxu0 %v280
    %1091 = vmatprep.subr.mxu0 0.0
    %1092 = vmatpush1.msra.mxu0 %v281
    %1093 = vmatprep.subr.mxu0 0.0
    %1094 = vmatpush1.msra.mxu0 %v282
    %1095 = vmatprep.subr.mxu0 0.0
    %1096 = vmatpush1.msra.mxu0 %v283
    %1097 = vmatprep.subr.mxu0 0.0
    %1098 = vmatpush1.msra.mxu0 %v284
    %1099 = vmatprep.subr.mxu0 0.0
    %1100 = vmatpush1.msra.mxu0 %v285
    %1101 = vmatprep.subr.mxu0 0.0
    %1102 = vmatpush1.msra.mxu0 %v286
    %1103 = vmatprep.subr.mxu0 0.0
    %1104 = vmatpush1.msra.mxu0 %v287
    %1105 = vmatprep.subr.mxu0 0.0
    %1106 = vmatpush1.msra.mxu0 %v288
    %1107 = vmatprep.subr.mxu0 0.0
    %1108 = vmatpush1.msra.mxu0 %v289
    %1109 = vmatprep.subr.mxu0 0.0
    %1110 = vmatpush1.msra.mxu0 %v290
    %1111 = vmatprep.subr.mxu0 0.0
    %1112 = vmatpush1.msra.mxu0 %v291
    %1113 = vmatprep.subr.mxu0 0.0
    %1114 = vmatpush1.msra.mxu0 %v292
    %1115 = vmatprep.subr.mxu0 0.0
    %1116 = vmatpush1.msra.mxu0 %v293
    %1117 = vmatprep.subr.mxu0 0.0
    %1118 = vmatpush1.msra.mxu0 %v294
    %1119 = vmatprep.subr.mxu0 0.0
    %1120 = vmatpush1.msra.mxu0 %v295
    %1121 = vmatprep.subr.mxu0 0.0
    %1122 = vmatpush1.msra.mxu0 %v296
    %1123 = vmatprep.subr.mxu0 0.0
    %1124 = vmatpush1.msra.mxu0 %v297
    %1125 = vmatprep.subr.mxu0 0.0
    %1126 = vmatpush1.msra.mxu0 %v298
    %1127 = vmatprep.subr.mxu0 0.0
    %1128 = vmatpush1.msra.mxu0 %v299
    %1129 = vmatprep.mubr.f32.mxu0 %v1064
    %1130 = vmatmul.mubr.f32.gmra.mrb[0].mxu0 %v1063
    %v1131 = vpop.f32.mrb[0].mxu0
    %v1132 = vadd.f32 0.0, %v1131
    %v1133 = vpop.f32.mrb[0].mxu0
    %1134 = vdwg.mxu0
    %v1135 = vmul.f32 %v1132, 0.03125
    %v1136 = vmul.f32 %v1062, %v1062
    %v1137 = vsub.f32 %v1135, %v1136
    %v1138 = vadd.f32 %v1137, 1e-05
    %v1139 = vrsqrt.pop %v1138
    %vm1140 = vcmask 64512
    %v1142 = vsel %vm1140, %v1062, 0
    %1144 = vmatprep.subr.mxu0 %v301
    %1145 = vmatpush1.msra.mxu0 %v300
    %1146 = vmatprep.subr.mxu0 0.0
    %1147 = vmatpush1.msra.mxu0 0.0
    %1148 = vmatprep.subr.mxu0 0.0
    %1149 = vmatpush1.msra.mxu0 0.0
    %1150 = vmatprep.subr.mxu0 0.0
    %1151 = vmatpush1.msra.mxu0 0.0
    %1152 = vmatprep.subr.mxu0 0.0
    %1153 = vmatpush1.msra.mxu0 0.0
    %1154 = vmatprep.subr.mxu0 0.0
    %1155 = vmatpush1.msra.mxu0 0.0
    %1156 = vmatprep.subr.mxu0 0.0
    %1157 = vmatpush1.msra.mxu0 0.0
    %1158 = vmatprep.subr.mxu0 0.0
    %1159 = vmatpush1.msra.mxu0 0.0
    %1160 = vmatprep.subr.mxu0 0.0
    %1161 = vmatpush1.msra.mxu0 0.0
    %1162 = vmatprep.subr.mxu0 0.0
    %1163 = vmatpush1.msra.mxu0 0.0
    %1164 = vmatprep.subr.mxu0 0.0
    %1165 = vmatpush1.msra.mxu0 0.0
    %1166 = vmatprep.subr.mxu0 0.0
    %1167 = vmatpush1.msra.mxu0 0.0
    %1168 = vmatprep.subr.mxu0 0.0
    %1169 = vmatpush1.msra.mxu0 0.0
    %1170 = vmatprep.subr.mxu0 0.0
    %1171 = vmatpush1.msra.mxu0 0.0
    %1172 = vmatprep.subr.mxu0 0.0
    %1173 = vmatpush1.msra.mxu0 0.0
    %1174 = vmatprep.subr.mxu0 0.0
    %1175 = vmatpush1.msra.mxu0 0.0
    %1176 = vmatprep.subr.mxu0 0.0
    %1177 = vmatpush1.msra.mxu0 0.0
    %1178 = vmatprep.subr.mxu0 0.0
    %1179 = vmatpush1.msra.mxu0 0.0
    %1180 = vmatprep.subr.mxu0 0.0
    %1181 = vmatpush1.msra.mxu0 0.0
    %1182 = vmatprep.subr.mxu0 0.0
    %1183 = vmatpush1.msra.mxu0 0.0
    %1184 = vmatprep.subr.mxu0 0.0
    %1185 = vmatpush1.msra.mxu0 0.0
    %1186 = vmatprep.subr.mxu0 0.0
    %1187 = vmatpush1.msra.mxu0 0.0
    %1188 = vmatprep.subr.mxu0 0.0
    %1189 = vmatpush1.msra.mxu0 0.0
    %1190 = vmatprep.subr.mxu0 0.0
    %1191 = vmatpush1.msra.mxu0 0.0
    %1192 = vmatprep.subr.mxu0 0.0
    %1193 = vmatpush1.msra.mxu0 0.0
    %1194 = vmatprep.subr.mxu0 0.0
    %1195 = vmatpush1.msra.mxu0 0.0
    %1196 = vmatprep.subr.mxu0 0.0
    %1197 = vmatpush1.msra.mxu0 0.0
    %1198 = vmatprep.subr.mxu0 0.0
    %1199 = vmatpush1.msra.mxu0 0.0
    %1200 = vmatprep.subr.mxu0 0.0
    %1201 = vmatpush1.msra.mxu0 0.0
    %1202 = vmatprep.subr.mxu0 0.0
    %1203 = vmatpush1.msra.mxu0 0.0
    %1204 = vmatprep.subr.mxu0 0.0
    %1205 = vmatpush1.msra.mxu0 0.0
    %1206 = vmatprep.subr.mxu0 0.0
    %1207 = vmatpush1.msra.mxu0 0.0
    %1208 = vmatprep.mubr.f32.mxu0 0.0
    %1209 = vmatmul.mubr.f32.gmra.mrb[0].mxu0 %v1142
    %v1210 = vpop.f32.mrb[0].mxu0
    %v1211 = vadd.f32 0.0, %v1210
    %v1212 = vpop.f32.mrb[0].mxu0
    %v1213 = vadd.f32 0.0, %v1212
    %1214 = vdwg.mxu0
    %v1216 = vsel %vm1140, %v1139, 0
    %1218 = vmatprep.subr.mxu0 %v301
    %1219 = vmatpush1.msra.mxu0 %v300
    %1220 = vmatprep.subr.mxu0 0.0
    %1221 = vmatpush1.msra.mxu0 0.0
    %1222 = vmatprep.subr.mxu0 0.0
    %1223 = vmatpush1.msra.mxu0 0.0
    %1224 = vmatprep.subr.mxu0 0.0
    %1225 = vmatpush1.msra.mxu0 0.0
    %1226 = vmatprep.subr.mxu0 0.0
    %1227 = vmatpush1.msra.mxu0 0.0
    %1228 = vmatprep.subr.mxu0 0.0
    %1229 = vmatpush1.msra.mxu0 0.0
    %1230 = vmatprep.subr.mxu0 0.0
    %1231 = vmatpush1.msra.mxu0 0.0
    %1232 = vmatprep.subr.mxu0 0.0
    %1233 = vmatpush1.msra.mxu0 0.0
    %1234 = vmatprep.subr.mxu0 0.0
    %1235 = vmatpush1.msra.mxu0 0.0
    %1236 = vmatprep.subr.mxu0 0.0
    %1237 = vmatpush1.msra.mxu0 0.0
    %1238 = vmatprep.subr.mxu0 0.0
    %1239 = vmatpush1.msra.mxu0 0.0
    %1240 = vmatprep.subr.mxu0 0.0
    %1241 = vmatpush1.msra.mxu0 0.0
    %1242 = vmatprep.subr.mxu0 0.0
    %1243 = vmatpush1.msra.mxu0 0.0
    %1244 = vmatprep.subr.mxu0 0.0
    %1245 = vmatpush1.msra.mxu0 0.0
    %1246 = vmatprep.subr.mxu0 0.0
    %1247 = vmatpush1.msra.mxu0 0.0
    %1248 = vmatprep.subr.mxu0 0.0
    %1249 = vmatpush1.msra.mxu0 0.0
    %1250 = vmatprep.subr.mxu0 0.0
    %1251 = vmatpush1.msra.mxu0 0.0
    %1252 = vmatprep.subr.mxu0 0.0
    %1253 = vmatpush1.msra.mxu0 0.0
    %1254 = vmatprep.subr.mxu0 0.0
    %1255 = vmatpush1.msra.mxu0 0.0
    %1256 = vmatprep.subr.mxu0 0.0
    %1257 = vmatpush1.msra.mxu0 0.0
    %1258 = vmatprep.subr.mxu0 0.0
    %1259 = vmatpush1.msra.mxu0 0.0
    %1260 = vmatprep.subr.mxu0 0.0
    %1261 = vmatpush1.msra.mxu0 0.0
    %1262 = vmatprep.subr.mxu0 0.0
    %1263 = vmatpush1.msra.mxu0 0.0
    %1264 = vmatprep.subr.mxu0 0.0
    %1265 = vmatpush1.msra.mxu0 0.0
    %1266 = vmatprep.subr.mxu0 0.0
    %1267 = vmatpush1.msra.mxu0 0.0
    %1268 = vmatprep.subr.mxu0 0.0
    %1269 = vmatpush1.msra.mxu0 0.0
    %1270 = vmatprep.subr.mxu0 0.0
    %1271 = vmatpush1.msra.mxu0 0.0
    %1272 = vmatprep.subr.mxu0 0.0
    %1273 = vmatpush1.msra.mxu0 0.0
    %1274 = vmatprep.subr.mxu0 0.0
    %1275 = vmatpush1.msra.mxu0 0.0
    %1276 = vmatprep.subr.mxu0 0.0
    %1277 = vmatpush1.msra.mxu0 0.0
    %1278 = vmatprep.subr.mxu0 0.0
    %1279 = vmatpush1.msra.mxu0 0.0
    %1280 = vmatprep.subr.mxu0 0.0
    %1281 = vmatpush1.msra.mxu0 0.0
    %1282 = vmatprep.mubr.f32.mxu0 0.0
    %1283 = vmatmul.mubr.f32.gmra.mrb[0].mxu0 %v1216
    %v1284 = vpop.f32.mrb[0].mxu0
    %v1285 = vadd.f32 0.0, %v1284
    %v1286 = vpop.f32.mrb[0].mxu0
    %v1287 = vadd.f32 0.0, %v1286
    %1288 = vdwg.mxu0
    %v1289 = vsub.f32 %v986, %v1211
    %v1290 = vsub.f32 %v988, %v1213
    %v1291 = vmul.f32 %v1289, %v1285
    %v1292 = vmul.f32 %v1290, %v1287
    %v1294 = vlaneseq
    %v1295 = vshrl.u32 %v1294, 7
    %v1296 = vsub.s32 0, %v1295
    %v1297 = vrot.slane %v990, %v1296
    %v1298 = vlaneseq
    %v1299 = vshrl.u32 %v1298, 7
    %v1300 = vsub.s32 1, %v1299
    %v1301 = vrot.slane %v990, %v1300
    %v1304 = vmul.f32 %v1291, %v1297
    %v1305 = vmul.f32 %v1292, %v1301
    %v1307 = vlaneseq
    %v1308 = vshrl.u32 %v1307, 7
    %v1309 = vsub.s32 0, %v1308
    %v1310 = vrot.slane %v991, %v1309
    %v1311 = vlaneseq
    %v1312 = vshrl.u32 %v1311, 7
    %v1313 = vsub.s32 1, %v1312
    %v1314 = vrot.slane %v991, %v1313
    %v1317 = vadd.f32 %v1304, %v1310
    %v1318 = vadd.f32 %v1305, %v1314
    %v1319 = vmax.f32 %v1317, 0.0
    %v1320 = vmax.f32 %v1318, 0.0
    %v1321 = vld [vmem:[#allocation22] sm:$0xff]
    %v1322 = vld [vmem:[#allocation22 + $0x8] sm:$0xff]
    %v1323 = vld [vmem:[#allocation22 + $0x10] sm:$0xff]
    %v1324 = vld [vmem:[#allocation22 + $0x18] sm:$0xff]
    %v1325 = vld [vmem:[#allocation22 + $0x20] sm:$0xff]
    %v1326 = vld [vmem:[#allocation22 + $0x28] sm:$0xff]
    %v1327 = vld [vmem:[#allocation22 + $0x30] sm:$0xff]
    %v1328 = vld [vmem:[#allocation22 + $0x38] sm:$0xff]
    %v1329 = vld [vmem:[#allocation22 + $0x40] sm:$0xff]
    %v1330 = vld [vmem:[#allocation22 + $0x48] sm:$0xff]
    %v1331 = vld [vmem:[#allocation22 + $0x50] sm:$0xff]
    %v1332 = vld [vmem:[#allocation22 + $0x58] sm:$0xff]
    %v1333 = vld [vmem:[#allocation22 + $0x60] sm:$0xff]
    %v1334 = vld [vmem:[#allocation22 + $0x68] sm:$0xff]
    %v1335 = vld [vmem:[#allocation22 + $0x70] sm:$0xff]
    %v1336 = vld [vmem:[#allocation22 + $0x78] sm:$0xff]
    %v1337 = vld [vmem:[#allocation22 + $0x80] sm:$0xff]
    %v1338 = vld [vmem:[#allocation22 + $0x88] sm:$0xff]
    %v1339 = vld [vmem:[#allocation22 + $0x90] sm:$0xff]
    %v1340 = vld [vmem:[#allocation22 + $0x98] sm:$0xff]
    %v1341 = vld [vmem:[#allocation22 + $0xa0] sm:$0xff]
    %v1342 = vld [vmem:[#allocation22 + $0xa8] sm:$0xff]
    %v1343 = vld [vmem:[#allocation22 + $0xb0] sm:$0xff]
    %v1344 = vld [vmem:[#allocation22 + $0xb8] sm:$0xff]
    %v1345 = vld [vmem:[#allocation22 + $0xc0] sm:$0xff]
    %v1346 = vld [vmem:[#allocation22 + $0xc8] sm:$0xff]
    %v1347 = vld [vmem:[#allocation22 + $0xd0] sm:$0xff]
    %v1348 = vld [vmem:[#allocation22 + $0xd8] sm:$0xff]
    %v1349 = vld [vmem:[#allocation22 + $0xe0] sm:$0xff]
    %v1350 = vld [vmem:[#allocation22 + $0xe8] sm:$0xff]
    %v1351 = vld [vmem:[#allocation22 + $0xf0] sm:$0xff]
    %v1352 = vld [vmem:[#allocation22 + $0xf8] sm:$0xff]
    %v1353 = vld [vmem:[#allocation22 + $0x100] sm:$0xff]
    %v1354 = vld [vmem:[#allocation22 + $0x108] sm:$0xff]
    %v1355 = vld [vmem:[#allocation22 + $0x110] sm:$0xff]
    %v1356 = vld [vmem:[#allocation22 + $0x118] sm:$0xff]
    %v1357 = vld [vmem:[#allocation22 + $0x120] sm:$0xff]
    %v1358 = vld [vmem:[#allocation22 + $0x128] sm:$0xff]
    %v1359 = vld [vmem:[#allocation22 + $0x130] sm:$0xff]
    %v1360 = vld [vmem:[#allocation22 + $0x138] sm:$0xff]
    %v1361 = vld [vmem:[#allocation22 + $0x140] sm:$0xff]
    %v1362 = vld [vmem:[#allocation22 + $0x148] sm:$0xff]
    %v1363 = vld [vmem:[#allocation22 + $0x150] sm:$0xff]
    %v1364 = vld [vmem:[#allocation22 + $0x158] sm:$0xff]
    %v1365 = vld [vmem:[#allocation22 + $0x160] sm:$0xff]
    %v1366 = vld [vmem:[#allocation22 + $0x168] sm:$0xff]
    %v1367 = vld [vmem:[#allocation22 + $0x170] sm:$0xff]
    %v1368 = vld [vmem:[#allocation22 + $0x178] sm:$0xff]
    %v1369 = vld [vmem:[#allocation22 + $0x180] sm:$0xff]
    %v1370 = vld [vmem:[#allocation22 + $0x188] sm:$0xff]
    %v1371 = vld [vmem:[#allocation22 + $0x190] sm:$0xff]
    %v1372 = vld [vmem:[#allocation22 + $0x198] sm:$0xff]
    %v1373 = vld [vmem:[#allocation22 + $0x1a0] sm:$0xff]
    %v1374 = vld [vmem:[#allocation22 + $0x1a8] sm:$0xff]
    %v1375 = vld [vmem:[#allocation22 + $0x1b0] sm:$0xff]
    %v1376 = vld [vmem:[#allocation22 + $0x1b8] sm:$0xff]
    %v1377 = vld [vmem:[#allocation22 + $0x1c0] sm:$0xff]
    %v1378 = vld [vmem:[#allocation22 + $0x1c8] sm:$0xff]
    %v1379 = vld [vmem:[#allocation22 + $0x1d0] sm:$0xff]
    %v1380 = vld [vmem:[#allocation22 + $0x1d8] sm:$0xff]
    %v1381 = vld [vmem:[#allocation22 + $0x1e0] sm:$0xff]
    %v1382 = vld [vmem:[#allocation22 + $0x1e8] sm:$0xff]
    %v1383 = vld [vmem:[#allocation22 + $0x1f0] sm:$0xff]
    %v1384 = vld [vmem:[#allocation22 + $0x1f8] sm:$0xff]
    %v1385 = vld [vmem:[%s20] sm:$0x3]
    %v1387 = vlaneseq
    %v1388 = vshrl.u32 %v1387, 7
    %v1389 = vsub.s32 0, %v1388
    %v1390 = vrot.slane %v1385, %v1389
    %v1391 = vlaneseq
    %v1392 = vshrl.u32 %v1391, 7
    %v1393 = vsub.s32 1, %v1392
    %v1394 = vrot.slane %v1385, %v1393
    %1397 = vmatprep.subr.mxu0 %v1322
    %1398 = vmatpush1.msra.mxu0 %v1321
    %1399 = vmatprep.subr.mxu0 %v1324
    %1400 = vmatpush1.msra.mxu0 %v1323
    %1401 = vmatprep.subr.mxu0 %v1326
    %1402 = vmatpush1.msra.mxu0 %v1325
    %1403 = vmatprep.subr.mxu0 %v1328
    %1404 = vmatpush1.msra.mxu0 %v1327
    %1405 = vmatprep.subr.mxu0 %v1330
    %1406 = vmatpush1.msra.mxu0 %v1329
    %1407 = vmatprep.subr.mxu0 %v1332
    %1408 = vmatpush1.msra.mxu0 %v1331
    %1409 = vmatprep.subr.mxu0 %v1334
    %1410 = vmatpush1.msra.mxu0 %v1333
    %1411 = vmatprep.subr.mxu0 %v1336
    %1412 = vmatpush1.msra.mxu0 %v1335
    %1413 = vmatprep.subr.mxu0 %v1338
    %1414 = vmatpush1.msra.mxu0 %v1337
    %1415 = vmatprep.subr.mxu0 %v1340
    %1416 = vmatpush1.msra.mxu0 %v1339
    %1417 = vmatprep.subr.mxu0 %v1342
    %1418 = vmatpush1.msra.mxu0 %v1341
    %1419 = vmatprep.subr.mxu0 %v1344
    %1420 = vmatpush1.msra.mxu0 %v1343
    %1421 = vmatprep.subr.mxu0 %v1346
    %1422 = vmatpush1.msra.mxu0 %v1345
    %1423 = vmatprep.subr.mxu0 %v1348
    %1424 = vmatpush1.msra.mxu0 %v1347
    %1425 = vmatprep.subr.mxu0 %v1350
    %1426 = vmatpush1.msra.mxu0 %v1349
    %1427 = vmatprep.subr.mxu0 %v1352
    %1428 = vmatpush1.msra.mxu0 %v1351
    %1429 = vmatprep.subr.mxu0 %v1354
    %1430 = vmatpush1.msra.mxu0 %v1353
    %1431 = vmatprep.subr.mxu0 %v1356
    %1432 = vmatpush1.msra.mxu0 %v1355
    %1433 = vmatprep.subr.mxu0 %v1358
    %1434 = vmatpush1.msra.mxu0 %v1357
    %1435 = vmatprep.subr.mxu0 %v1360
    %1436 = vmatpush1.msra.mxu0 %v1359
    %1437 = vmatprep.subr.mxu0 %v1362
    %1438 = vmatpush1.msra.mxu0 %v1361
    %1439 = vmatprep.subr.mxu0 %v1364
    %1440 = vmatpush1.msra.mxu0 %v1363
    %1441 = vmatprep.subr.mxu0 %v1366
    %1442 = vmatpush1.msra.mxu0 %v1365
    %1443 = vmatprep.subr.mxu0 %v1368
    %1444 = vmatpush1.msra.mxu0 %v1367
    %1445 = vmatprep.subr.mxu0 %v1370
    %1446 = vmatpush1.msra.mxu0 %v1369
    %1447 = vmatprep.subr.mxu0 %v1372
    %1448 = vmatpush1.msra.mxu0 %v1371
    %1449 = vmatprep.subr.mxu0 %v1374
    %1450 = vmatpush1.msra.mxu0 %v1373
    %1451 = vmatprep.subr.mxu0 %v1376
    %1452 = vmatpush1.msra.mxu0 %v1375
    %1453 = vmatprep.subr.mxu0 %v1378
    %1454 = vmatpush1.msra.mxu0 %v1377
    %1455 = vmatprep.subr.mxu0 %v1380
    %1456 = vmatpush1.msra.mxu0 %v1379
    %1457 = vmatprep.subr.mxu0 %v1382
    %1458 = vmatpush1.msra.mxu0 %v1381
    %1459 = vmatprep.subr.mxu0 %v1384
    %1460 = vmatpush1.msra.mxu0 %v1383
    %1461 = vmatprep.mubr.f32.mxu0 %v1320
    %1462 = vmatmul.mubr.f32.gmra.mrb[0].mxu0 %v1319
    %v1463 = vpop.f32.mrb[0].mxu0
    %v1464 = vadd.f32 %v1390, %v1463
    %v1465 = vpop.f32.mrb[0].mxu0
    %v1466 = vadd.f32 %v1394, %v1465
    %1467 = vdwg.mxu0
    %v1468 = vld [vmem:[#allocation23] sm:$0x3]
    %v1469 = vld [vmem:[#allocation25] sm:$0x3]
    %1470 = vmatprep.subr.mxu0 0.0
    %1471 = vmatpush1.msra.mxu0 %v268
    %1472 = vmatprep.subr.mxu0 0.0
    %1473 = vmatpush1.msra.mxu0 %v269
    %1474 = vmatprep.subr.mxu0 0.0
    %1475 = vmatpush1.msra.mxu0 %v270
    %1476 = vmatprep.subr.mxu0 0.0
    %1477 = vmatpush1.msra.mxu0 %v271
    %1478 = vmatprep.subr.mxu0 0.0
    %1479 = vmatpush1.msra.mxu0 %v272
    %1480 = vmatprep.subr.mxu0 0.0
    %1481 = vmatpush1.msra.mxu0 %v273
    %1482 = vmatprep.subr.mxu0 0.0
    %1483 = vmatpush1.msra.mxu0 %v274
    %1484 = vmatprep.subr.mxu0 0.0
    %1485 = vmatpush1.msra.mxu0 %v275
    %1486 = vmatprep.subr.mxu0 0.0
    %1487 = vmatpush1.msra.mxu0 %v276
    %1488 = vmatprep.subr.mxu0 0.0
    %1489 = vmatpush1.msra.mxu0 %v277
    %1490 = vmatprep.subr.mxu0 0.0
    %1491 = vmatpush1.msra.mxu0 %v278
    %1492 = vmatprep.subr.mxu0 0.0
    %1493 = vmatpush1.msra.mxu0 %v279
    %1494 = vmatprep.subr.mxu0 0.0
    %1495 = vmatpush1.msra.mxu0 %v280
    %1496 = vmatprep.subr.mxu0 0.0
    %1497 = vmatpush1.msra.mxu0 %v281
    %1498 = vmatprep.subr.mxu0 0.0
    %1499 = vmatpush1.msra.mxu0 %v282
    %1500 = vmatprep.subr.mxu0 0.0
    %1501 = vmatpush1.msra.mxu0 %v283
    %1502 = vmatprep.subr.mxu0 0.0
    %1503 = vmatpush1.msra.mxu0 %v284
    %1504 = vmatprep.subr.mxu0 0.0
    %1505 = vmatpush1.msra.mxu0 %v285
    %1506 = vmatprep.subr.mxu0 0.0
    %1507 = vmatpush1.msra.mxu0 %v286
    %1508 = vmatprep.subr.mxu0 0.0
    %1509 = vmatpush1.msra.mxu0 %v287
    %1510 = vmatprep.subr.mxu0 0.0
    %1511 = vmatpush1.msra.mxu0 %v288
    %1512 = vmatprep.subr.mxu0 0.0
    %1513 = vmatpush1.msra.mxu0 %v289
    %1514 = vmatprep.subr.mxu0 0.0
    %1515 = vmatpush1.msra.mxu0 %v290
    %1516 = vmatprep.subr.mxu0 0.0
    %1517 = vmatpush1.msra.mxu0 %v291
    %1518 = vmatprep.subr.mxu0 0.0
    %1519 = vmatpush1.msra.mxu0 %v292
    %1520 = vmatprep.subr.mxu0 0.0
    %1521 = vmatpush1.msra.mxu0 %v293
    %1522 = vmatprep.subr.mxu0 0.0
    %1523 = vmatpush1.msra.mxu0 %v294
    %1524 = vmatprep.subr.mxu0 0.0
    %1525 = vmatpush1.msra.mxu0 %v295
    %1526 = vmatprep.subr.mxu0 0.0
    %1527 = vmatpush1.msra.mxu0 %v296
    %1528 = vmatprep.subr.mxu0 0.0
    %1529 = vmatpush1.msra.mxu0 %v297
    %1530 = vmatprep.subr.mxu0 0.0
    %1531 = vmatpush1.msra.mxu0 %v298
    %1532 = vmatprep.subr.mxu0 0.0
    %1533 = vmatpush1.msra.mxu0 %v299
    %1534 = vmatprep.mubr.f32.mxu0 %v1466
    %1535 = vmatmul.mubr.f32.gmra.mrb[0].mxu0 %v1464
    %v1536 = vpop.f32.mrb[0].mxu0
    %v1537 = vadd.f32 0.0, %v1536
    %v1538 = vpop.f32.mrb[0].mxu0
    %1539 = vdwg.mxu0
    %v1540 = vmul.f32 %v1537, 0.03125
    %v1541 = vmul.f32 %v1464, %v1464
    %v1542 = vmul.f32 %v1466, %v1466
    %1543 = vmatprep.subr.mxu0 0.0
    %1544 = vmatpush1.msra.mxu0 %v268
    %1545 = vmatprep.subr.mxu0 0.0
    %1546 = vmatpush1.msra.mxu0 %v269
    %1547 = vmatprep.subr.mxu0 0.0
    %1548 = vmatpush1.msra.mxu0 %v270
    %1549 = vmatprep.subr.mxu0 0.0
    %1550 = vmatpush1.msra.mxu0 %v271
    %1551 = vmatprep.subr.mxu0 0.0
    %1552 = vmatpush1.msra.mxu0 %v272
    %1553 = vmatprep.subr.mxu0 0.0
    %1554 = vmatpush1.msra.mxu0 %v273
    %1555 = vmatprep.subr.mxu0 0.0
    %1556 = vmatpush1.msra.mxu0 %v274
    %1557 = vmatprep.subr.mxu0 0.0
    %1558 = vmatpush1.msra.mxu0 %v275
    %1559 = vmatprep.subr.mxu0 0.0
    %1560 = vmatpush1.msra.mxu0 %v276
    %1561 = vmatprep.subr.mxu0 0.0
    %1562 = vmatpush1.msra.mxu0 %v277
    %1563 = vmatprep.subr.mxu0 0.0
    %1564 = vmatpush1.msra.mxu0 %v278
    %1565 = vmatprep.subr.mxu0 0.0
    %1566 = vmatpush1.msra.mxu0 %v279
    %1567 = vmatprep.subr.mxu0 0.0
    %1568 = vmatpush1.msra.mxu0 %v280
    %1569 = vmatprep.subr.mxu0 0.0
    %1570 = vmatpush1.msra.mxu0 %v281
    %1571 = vmatprep.subr.mxu0 0.0
    %1572 = vmatpush1.msra.mxu0 %v282
    %1573 = vmatprep.subr.mxu0 0.0
    %1574 = vmatpush1.msra.mxu0 %v283
    %1575 = vmatprep.subr.mxu0 0.0
    %1576 = vmatpush1.msra.mxu0 %v284
    %1577 = vmatprep.subr.mxu0 0.0
    %1578 = vmatpush1.msra.mxu0 %v285
    %1579 = vmatprep.subr.mxu0 0.0
    %1580 = vmatpush1.msra.mxu0 %v286
    %1581 = vmatprep.subr.mxu0 0.0
    %1582 = vmatpush1.msra.mxu0 %v287
    %1583 = vmatprep.subr.mxu0 0.0
    %1584 = vmatpush1.msra.mxu0 %v288
    %1585 = vmatprep.subr.mxu0 0.0
    %1586 = vmatpush1.msra.mxu0 %v289
    %1587 = vmatprep.subr.mxu0 0.0
    %1588 = vmatpush1.msra.mxu0 %v290
    %1589 = vmatprep.subr.mxu0 0.0
    %1590 = vmatpush1.msra.mxu0 %v291
    %1591 = vmatprep.subr.mxu0 0.0
    %1592 = vmatpush1.msra.mxu0 %v292
    %1593 = vmatprep.subr.mxu0 0.0
    %1594 = vmatpush1.msra.mxu0 %v293
    %1595 = vmatprep.subr.mxu0 0.0
    %1596 = vmatpush1.msra.mxu0 %v294
    %1597 = vmatprep.subr.mxu0 0.0
    %1598 = vmatpush1.msra.mxu0 %v295
    %1599 = vmatprep.subr.mxu0 0.0
    %1600 = vmatpush1.msra.mxu0 %v296
    %1601 = vmatprep.subr.mxu0 0.0
    %1602 = vmatpush1.msra.mxu0 %v297
    %1603 = vmatprep.subr.mxu0 0.0
    %1604 = vmatpush1.msra.mxu0 %v298
    %1605 = vmatprep.subr.mxu0 0.0
    %1606 = vmatpush1.msra.mxu0 %v299
    %1607 = vmatprep.mubr.f32.mxu0 %v1542
    %1608 = vmatmul.mubr.f32.gmra.mrb[0].mxu0 %v1541
    %v1609 = vpop.f32.mrb[0].mxu0
    %v1610 = vadd.f32 0.0, %v1609
    %v1611 = vpop.f32.mrb[0].mxu0
    %1612 = vdwg.mxu0
    %v1613 = vmul.f32 %v1610, 0.03125
    %v1614 = vmul.f32 %v1540, %v1540
    %v1615 = vsub.f32 %v1613, %v1614
    %v1616 = vadd.f32 %v1615, 1e-05
    %v1617 = vrsqrt.pop %v1616
    %v1619 = vsel %vm1140, %v1540, 0
    %1621 = vmatprep.subr.mxu0 %v301
    %1622 = vmatpush1.msra.mxu0 %v300
    %1623 = vmatprep.subr.mxu0 0.0
    %1624 = vmatpush1.msra.mxu0 0.0
    %1625 = vmatprep.subr.mxu0 0.0
    %1626 = vmatpush1.msra.mxu0 0.0
    %1627 = vmatprep.subr.mxu0 0.0
    %1628 = vmatpush1.msra.mxu0 0.0
    %1629 = vmatprep.subr.mxu0 0.0
    %1630 = vmatpush1.msra.mxu0 0.0
    %1631 = vmatprep.subr.mxu0 0.0
    %1632 = vmatpush1.msra.mxu0 0.0
    %1633 = vmatprep.subr.mxu0 0.0
    %1634 = vmatpush1.msra.mxu0 0.0
    %1635 = vmatprep.subr.mxu0 0.0
    %1636 = vmatpush1.msra.mxu0 0.0
    %1637 = vmatprep.subr.mxu0 0.0
    %1638 = vmatpush1.msra.mxu0 0.0
    %1639 = vmatprep.subr.mxu0 0.0
    %1640 = vmatpush1.msra.mxu0 0.0
    %1641 = vmatprep.subr.mxu0 0.0
    %1642 = vmatpush1.msra.mxu0 0.0
    %1643 = vmatprep.subr.mxu0 0.0
    %1644 = vmatpush1.msra.mxu0 0.0
    %1645 = vmatprep.subr.mxu0 0.0
    %1646 = vmatpush1.msra.mxu0 0.0
    %1647 = vmatprep.subr.mxu0 0.0
    %1648 = vmatpush1.msra.mxu0 0.0
    %1649 = vmatprep.subr.mxu0 0.0
    %1650 = vmatpush1.msra.mxu0 0.0
    %1651 = vmatprep.subr.mxu0 0.0
    %1652 = vmatpush1.msra.mxu0 0.0
    %1653 = vmatprep.subr.mxu0 0.0
    %1654 = vmatpush1.msra.mxu0 0.0
    %1655 = vmatprep.subr.mxu0 0.0
    %1656 = vmatpush1.msra.mxu0 0.0
    %1657 = vmatprep.subr.mxu0 0.0
    %1658 = vmatpush1.msra.mxu0 0.0
    %1659 = vmatprep.subr.mxu0 0.0
    %1660 = vmatpush1.msra.mxu0 0.0
    %1661 = vmatprep.subr.mxu0 0.0
    %1662 = vmatpush1.msra.mxu0 0.0
    %1663 = vmatprep.subr.mxu0 0.0
    %1664 = vmatpush1.msra.mxu0 0.0
    %1665 = vmatprep.subr.mxu0 0.0
    %1666 = vmatpush1.msra.mxu0 0.0
    %1667 = vmatprep.subr.mxu0 0.0
    %1668 = vmatpush1.msra.mxu0 0.0
    %1669 = vmatprep.subr.mxu0 0.0
    %1670 = vmatpush1.msra.mxu0 0.0
    %1671 = vmatprep.subr.mxu0 0.0
    %1672 = vmatpush1.msra.mxu0 0.0
    %1673 = vmatprep.subr.mxu0 0.0
    %1674 = vmatpush1.msra.mxu0 0.0
    %1675 = vmatprep.subr.mxu0 0.0
    %1676 = vmatpush1.msra.mxu0 0.0
    %1677 = vmatprep.subr.mxu0 0.0
    %1678 = vmatpush1.msra.mxu0 0.0
    %1679 = vmatprep.subr.mxu0 0.0
    %1680 = vmatpush1.msra.mxu0 0.0
    %1681 = vmatprep.subr.mxu0 0.0
    %1682 = vmatpush1.msra.mxu0 0.0
    %1683 = vmatprep.subr.mxu0 0.0
    %1684 = vmatpush1.msra.mxu0 0.0
    %1685 = vmatprep.mubr.f32.mxu0 0.0
    %1686 = vmatmul.mubr.f32.gmra.mrb[0].mxu0 %v1619
    %v1687 = vpop.f32.mrb[0].mxu0
    %v1688 = vadd.f32 0.0, %v1687
    %v1689 = vpop.f32.mrb[0].mxu0
    %v1690 = vadd.f32 0.0, %v1689
    %1691 = vdwg.mxu0
    %v1693 = vsel %vm1140, %v1617, 0
    %1695 = vmatprep.subr.mxu0 %v301
    %1696 = vmatpush1.msra.mxu0 %v300
    %1697 = vmatprep.subr.mxu0 0.0
    %1698 = vmatpush1.msra.mxu0 0.0
    %1699 = vmatprep.subr.mxu0 0.0
    %1700 = vmatpush1.msra.mxu0 0.0
    %1701 = vmatprep.subr.mxu0 0.0
    %1702 = vmatpush1.msra.mxu0 0.0
    %1703 = vmatprep.subr.mxu0 0.0
    %1704 = vmatpush1.msra.mxu0 0.0
    %1705 = vmatprep.subr.mxu0 0.0
    %1706 = vmatpush1.msra.mxu0 0.0
    %1707 = vmatprep.subr.mxu0 0.0
    %1708 = vmatpush1.msra.mxu0 0.0
    %1709 = vmatprep.subr.mxu0 0.0
    %1710 = vmatpush1.msra.mxu0 0.0
    %1711 = vmatprep.subr.mxu0 0.0
    %1712 = vmatpush1.msra.mxu0 0.0
    %1713 = vmatprep.subr.mxu0 0.0
    %1714 = vmatpush1.msra.mxu0 0.0
    %1715 = vmatprep.subr.mxu0 0.0
    %1716 = vmatpush1.msra.mxu0 0.0
    %1717 = vmatprep.subr.mxu0 0.0
    %1718 = vmatpush1.msra.mxu0 0.0
    %1719 = vmatprep.subr.mxu0 0.0
    %1720 = vmatpush1.msra.mxu0 0.0
    %1721 = vmatprep.subr.mxu0 0.0
    %1722 = vmatpush1.msra.mxu0 0.0
    %1723 = vmatprep.subr.mxu0 0.0
    %1724 = vmatpush1.msra.mxu0 0.0
    %1725 = vmatprep.subr.mxu0 0.0
    %1726 = vmatpush1.msra.mxu0 0.0
    %1727 = vmatprep.subr.mxu0 0.0
    %1728 = vmatpush1.msra.mxu0 0.0
    %1729 = vmatprep.subr.mxu0 0.0
    %1730 = vmatpush1.msra.mxu0 0.0
    %1731 = vmatprep.subr.mxu0 0.0
    %1732 = vmatpush1.msra.mxu0 0.0
    %1733 = vmatprep.subr.mxu0 0.0
    %1734 = vmatpush1.msra.mxu0 0.0
    %1735 = vmatprep.subr.mxu0 0.0
    %1736 = vmatpush1.msra.mxu0 0.0
    %1737 = vmatprep.subr.mxu0 0.0
    %1738 = vmatpush1.msra.mxu0 0.0
    %1739 = vmatprep.subr.mxu0 0.0
    %1740 = vmatpush1.msra.mxu0 0.0
    %1741 = vmatprep.subr.mxu0 0.0
    %1742 = vmatpush1.msra.mxu0 0.0
    %1743 = vmatprep.subr.mxu0 0.0
    %1744 = vmatpush1.msra.mxu0 0.0
    %1745 = vmatprep.subr.mxu0 0.0
    %1746 = vmatpush1.msra.mxu0 0.0
    %1747 = vmatprep.subr.mxu0 0.0
    %1748 = vmatpush1.msra.mxu0 0.0
    %1749 = vmatprep.subr.mxu0 0.0
    %1750 = vmatpush1.msra.mxu0 0.0
    %1751 = vmatprep.subr.mxu0 0.0
    %1752 = vmatpush1.msra.mxu0 0.0
    %1753 = vmatprep.subr.mxu0 0.0
    %1754 = vmatpush1.msra.mxu0 0.0
    %1755 = vmatprep.subr.mxu0 0.0
    %1756 = vmatpush1.msra.mxu0 0.0
    %1757 = vmatprep.subr.mxu0 0.0
    %1758 = vmatpush1.msra.mxu0 0.0
    %1759 = vmatprep.mubr.f32.mxu0 0.0
    %1760 = vmatmul.mubr.f32.gmra.mrb[0].mxu0 %v1693
    %v1761 = vpop.f32.mrb[0].mxu0
    %v1762 = vadd.f32 0.0, %v1761
    %v1763 = vpop.f32.mrb[0].mxu0
    %v1764 = vadd.f32 0.0, %v1763
    %1765 = vdwg.mxu0
    %v1766 = vsub.f32 %v1464, %v1688
    %v1767 = vsub.f32 %v1466, %v1690
    %v1768 = vmul.f32 %v1766, %v1762
    %v1769 = vmul.f32 %v1767, %v1764
    %v1771 = vlaneseq
    %v1772 = vshrl.u32 %v1771, 7
    %v1773 = vsub.s32 0, %v1772
    %v1774 = vrot.slane %v1468, %v1773
    %v1775 = vlaneseq
    %v1776 = vshrl.u32 %v1775, 7
    %v1777 = vsub.s32 1, %v1776
    %v1778 = vrot.slane %v1468, %v1777
    %v1781 = vmul.f32 %v1768, %v1774
    %v1782 = vmul.f32 %v1769, %v1778
    %v1784 = vlaneseq
    %v1785 = vshrl.u32 %v1784, 7
    %v1786 = vsub.s32 0, %v1785
    %v1787 = vrot.slane %v1469, %v1786
    %v1788 = vlaneseq
    %v1789 = vshrl.u32 %v1788, 7
    %v1790 = vsub.s32 1, %v1789
    %v1791 = vrot.slane %v1469, %v1790
    %v1794 = vadd.f32 %v1781, %v1787
    %v1795 = vadd.f32 %v1782, %v1791
    %v1796 = vmax.f32 %v1794, 0.0
    %v1797 = vmax.f32 %v1795, 0.0
    %v1798 = vadd.f32 %v841, %v1796
    %v1799 = vadd.f32 %v842, %v1797
    %s1800 = scalar_lea.vmem %s15, 512
    %v1801 = vld [vmem:[%s1800] sm:$0xff]
    %v1802 = vld [vmem:[%s1800 + $0x8] sm:$0xff]
    %v1803 = vld [vmem:[%s1800 + $0x10] sm:$0xff]
    %v1804 = vld [vmem:[%s1800 + $0x18] sm:$0xff]
    %v1805 = vld [vmem:[%s1800 + $0x20] sm:$0xff]
    %v1806 = vld [vmem:[%s1800 + $0x28] sm:$0xff]
    %v1807 = vld [vmem:[%s1800 + $0x30] sm:$0xff]
    %v1808 = vld [vmem:[%s1800 + $0x38] sm:$0xff]
    %v1809 = vld [vmem:[%s1800 + $0x40] sm:$0xff]
    %v1810 = vld [vmem:[%s1800 + $0x48] sm:$0xff]
    %v1811 = vld [vmem:[%s1800 + $0x50] sm:$0xff]
    %v1812 = vld [vmem:[%s1800 + $0x58] sm:$0xff]
    %v1813 = vld [vmem:[%s1800 + $0x60] sm:$0xff]
    %v1814 = vld [vmem:[%s1800 + $0x68] sm:$0xff]
    %v1815 = vld [vmem:[%s1800 + $0x70] sm:$0xff]
    %v1816 = vld [vmem:[%s1800 + $0x78] sm:$0xff]
    %v1817 = vld [vmem:[%s1800 + $0x80] sm:$0xff]
    %v1818 = vld [vmem:[%s1800 + $0x88] sm:$0xff]
    %v1819 = vld [vmem:[%s1800 + $0x90] sm:$0xff]
    %v1820 = vld [vmem:[%s1800 + $0x98] sm:$0xff]
    %v1821 = vld [vmem:[%s1800 + $0xa0] sm:$0xff]
    %v1822 = vld [vmem:[%s1800 + $0xa8] sm:$0xff]
    %v1823 = vld [vmem:[%s1800 + $0xb0] sm:$0xff]
    %v1824 = vld [vmem:[%s1800 + $0xb8] sm:$0xff]
    %v1825 = vld [vmem:[%s1800 + $0xc0] sm:$0xff]
    %v1826 = vld [vmem:[%s1800 + $0xc8] sm:$0xff]
    %v1827 = vld [vmem:[%s1800 + $0xd0] sm:$0xff]
    %v1828 = vld [vmem:[%s1800 + $0xd8] sm:$0xff]
    %v1829 = vld [vmem:[%s1800 + $0xe0] sm:$0xff]
    %v1830 = vld [vmem:[%s1800 + $0xe8] sm:$0xff]
    %v1831 = vld [vmem:[%s1800 + $0xf0] sm:$0xff]
    %v1832 = vld [vmem:[%s1800 + $0xf8] sm:$0xff]
    %v1833 = vld [vmem:[%s1800 + $0x100] sm:$0xff]
    %v1834 = vld [vmem:[%s1800 + $0x108] sm:$0xff]
    %v1835 = vld [vmem:[%s1800 + $0x110] sm:$0xff]
    %v1836 = vld [vmem:[%s1800 + $0x118] sm:$0xff]
    %v1837 = vld [vmem:[%s1800 + $0x120] sm:$0xff]
    %v1838 = vld [vmem:[%s1800 + $0x128] sm:$0xff]
    %v1839 = vld [vmem:[%s1800 + $0x130] sm:$0xff]
    %v1840 = vld [vmem:[%s1800 + $0x138] sm:$0xff]
    %v1841 = vld [vmem:[%s1800 + $0x140] sm:$0xff]
    %v1842 = vld [vmem:[%s1800 + $0x148] sm:$0xff]
    %v1843 = vld [vmem:[%s1800 + $0x150] sm:$0xff]
    %v1844 = vld [vmem:[%s1800 + $0x158] sm:$0xff]
    %v1845 = vld [vmem:[%s1800 + $0x160] sm:$0xff]
    %v1846 = vld [vmem:[%s1800 + $0x168] sm:$0xff]
    %v1847 = vld [vmem:[%s1800 + $0x170] sm:$0xff]
    %v1848 = vld [vmem:[%s1800 + $0x178] sm:$0xff]
    %v1849 = vld [vmem:[%s1800 + $0x180] sm:$0xff]
    %v1850 = vld [vmem:[%s1800 + $0x188] sm:$0xff]
    %v1851 = vld [vmem:[%s1800 + $0x190] sm:$0xff]
    %v1852 = vld [vmem:[%s1800 + $0x198] sm:$0xff]
    %v1853 = vld [vmem:[%s1800 + $0x1a0] sm:$0xff]
    %v1854 = vld [vmem:[%s1800 + $0x1a8] sm:$0xff]
    %v1855 = vld [vmem:[%s1800 + $0x1b0] sm:$0xff]
    %v1856 = vld [vmem:[%s1800 + $0x1b8] sm:$0xff]
    %v1857 = vld [vmem:[%s1800 + $0x1c0] sm:$0xff]
    %v1858 = vld [vmem:[%s1800 + $0x1c8] sm:$0xff]
    %v1859 = vld [vmem:[%s1800 + $0x1d0] sm:$0xff]
    %v1860 = vld [vmem:[%s1800 + $0x1d8] sm:$0xff]
    %v1861 = vld [vmem:[%s1800 + $0x1e0] sm:$0xff]
    %v1862 = vld [vmem:[%s1800 + $0x1e8] sm:$0xff]
    %v1863 = vld [vmem:[%s1800 + $0x1f0] sm:$0xff]
    %v1864 = vld [vmem:[%s1800 + $0x1f8] sm:$0xff]
    %s1865 = scalar_lea.vmem [#allocation17], 2
    %v1866 = vld [vmem:[%s1865] sm:$0x3]
    %v1868 = vlaneseq
    %v1869 = vshrl.u32 %v1868, 7
    %v1870 = vsub.s32 0, %v1869
    %v1871 = vrot.slane %v1866, %v1870
    %v1872 = vlaneseq
    %v1873 = vshrl.u32 %v1872, 7
    %v1874 = vsub.s32 1, %v1873
    %v1875 = vrot.slane %v1866, %v1874
    %1878 = vmatprep.subr.mxu0 %v1802
    %1879 = vmatpush1.msra.mxu0 %v1801
    %1880 = vmatprep.subr.mxu0 %v1804
    %1881 = vmatpush1.msra.mxu0 %v1803
    %1882 = vmatprep.subr.mxu0 %v1806
    %1883 = vmatpush1.msra.mxu0 %v1805
    %1884 = vmatprep.subr.mxu0 %v1808
    %1885 = vmatpush1.msra.mxu0 %v1807
    %1886 = vmatprep.subr.mxu0 %v1810
    %1887 = vmatpush1.msra.mxu0 %v1809
    %1888 = vmatprep.subr.mxu0 %v1812
    %1889 = vmatpush1.msra.mxu0 %v1811
    %1890 = vmatprep.subr.mxu0 %v1814
    %1891 = vmatpush1.msra.mxu0 %v1813
    %1892 = vmatprep.subr.mxu0 %v1816
    %1893 = vmatpush1.msra.mxu0 %v1815
    %1894 = vmatprep.subr.mxu0 %v1818
    %1895 = vmatpush1.msra.mxu0 %v1817
    %1896 = vmatprep.subr.mxu0 %v1820
    %1897 = vmatpush1.msra.mxu0 %v1819
    %1898 = vmatprep.subr.mxu0 %v1822
    %1899 = vmatpush1.msra.mxu0 %v1821
    %1900 = vmatprep.subr.mxu0 %v1824
    %1901 = vmatpush1.msra.mxu0 %v1823
    %1902 = vmatprep.subr.mxu0 %v1826
    %1903 = vmatpush1.msra.mxu0 %v1825
    %1904 = vmatprep.subr.mxu0 %v1828
    %1905 = vmatpush1.msra.mxu0 %v1827
    %1906 = vmatprep.subr.mxu0 %v1830
    %1907 = vmatpush1.msra.mxu0 %v1829
    %1908 = vmatprep.subr.mxu0 %v1832
    %1909 = vmatpush1.msra.mxu0 %v1831
    %1910 = vmatprep.subr.mxu0 %v1834
    %1911 = vmatpush1.msra.mxu0 %v1833
    %1912 = vmatprep.subr.mxu0 %v1836
    %1913 = vmatpush1.msra.mxu0 %v1835
    %1914 = vmatprep.subr.mxu0 %v1838
    %1915 = vmatpush1.msra.mxu0 %v1837
    %1916 = vmatprep.subr.mxu0 %v1840
    %1917 = vmatpush1.msra.mxu0 %v1839
    %1918 = vmatprep.subr.mxu0 %v1842
    %1919 = vmatpush1.msra.mxu0 %v1841
    %1920 = vmatprep.subr.mxu0 %v1844
    %1921 = vmatpush1.msra.mxu0 %v1843
    %1922 = vmatprep.subr.mxu0 %v1846
    %1923 = vmatpush1.msra.mxu0 %v1845
    %1924 = vmatprep.subr.mxu0 %v1848
    %1925 = vmatpush1.msra.mxu0 %v1847
    %1926 = vmatprep.subr.mxu0 %v1850
    %1927 = vmatpush1.msra.mxu0 %v1849
    %1928 = vmatprep.subr.mxu0 %v1852
    %1929 = vmatpush1.msra.mxu0 %v1851
    %1930 = vmatprep.subr.mxu0 %v1854
    %1931 = vmatpush1.msra.mxu0 %v1853
    %1932 = vmatprep.subr.mxu0 %v1856
    %1933 = vmatpush1.msra.mxu0 %v1855
    %1934 = vmatprep.subr.mxu0 %v1858
    %1935 = vmatpush1.msra.mxu0 %v1857
    %1936 = vmatprep.subr.mxu0 %v1860
    %1937 = vmatpush1.msra.mxu0 %v1859
    %1938 = vmatprep.subr.mxu0 %v1862
    %1939 = vmatpush1.msra.mxu0 %v1861
    %1940 = vmatprep.subr.mxu0 %v1864
    %1941 = vmatpush1.msra.mxu0 %v1863
    %1942 = vmatprep.mubr.f32.mxu0 %v1799
    %1943 = vmatmul.mubr.f32.gmra.mrb[0].mxu0 %v1798
    %v1944 = vpop.f32.mrb[0].mxu0
    %v1945 = vadd.f32 %v1871, %v1944
    %v1946 = vpop.f32.mrb[0].mxu0
    %v1947 = vadd.f32 %v1875, %v1946
    %1948 = vdwg.mxu0
    %s1949 = scalar_lea.vmem [#allocation19], 2
    %v1950 = vld [vmem:[%s1949] sm:$0x3]
    %s1951 = scalar_lea.vmem [#allocation20], 2
    %v1952 = vld [vmem:[%s1951] sm:$0x3]
    %1953 = vmatprep.subr.mxu0 0.0
    %1954 = vmatpush1.msra.mxu0 %v268
    %1955 = vmatprep.subr.mxu0 0.0
    %1956 = vmatpush1.msra.mxu0 %v269
    %1957 = vmatprep.subr.mxu0 0.0
    %1958 = vmatpush1.msra.mxu0 %v270
    %1959 = vmatprep.subr.mxu0 0.0
    %1960 = vmatpush1.msra.mxu0 %v271
    %1961 = vmatprep.subr.mxu0 0.0
    %1962 = vmatpush1.msra.mxu0 %v272
    %1963 = vmatprep.subr.mxu0 0.0
    %1964 = vmatpush1.msra.mxu0 %v273
    %1965 = vmatprep.subr.mxu0 0.0
    %1966 = vmatpush1.msra.mxu0 %v274
    %1967 = vmatprep.subr.mxu0 0.0
    %1968 = vmatpush1.msra.mxu0 %v275
    %1969 = vmatprep.subr.mxu0 0.0
    %1970 = vmatpush1.msra.mxu0 %v276
    %1971 = vmatprep.subr.mxu0 0.0
    %1972 = vmatpush1.msra.mxu0 %v277
    %1973 = vmatprep.subr.mxu0 0.0
    %1974 = vmatpush1.msra.mxu0 %v278
    %1975 = vmatprep.subr.mxu0 0.0
    %1976 = vmatpush1.msra.mxu0 %v279
    %1977 = vmatprep.subr.mxu0 0.0
    %1978 = vmatpush1.msra.mxu0 %v280
    %1979 = vmatprep.subr.mxu0 0.0
    %1980 = vmatpush1.msra.mxu0 %v281
    %1981 = vmatprep.subr.mxu0 0.0
    %1982 = vmatpush1.msra.mxu0 %v282
    %1983 = vmatprep.subr.mxu0 0.0
    %1984 = vmatpush1.msra.mxu0 %v283
    %1985 = vmatprep.subr.mxu0 0.0
    %1986 = vmatpush1.msra.mxu0 %v284
    %1987 = vmatprep.subr.mxu0 0.0
    %1988 = vmatpush1.msra.mxu0 %v285
    %1989 = vmatprep.subr.mxu0 0.0
    %1990 = vmatpush1.msra.mxu0 %v286
    %1991 = vmatprep.subr.mxu0 0.0
    %1992 = vmatpush1.msra.mxu0 %v287
    %1993 = vmatprep.subr.mxu0 0.0
    %1994 = vmatpush1.msra.mxu0 %v288
    %1995 = vmatprep.subr.mxu0 0.0
    %1996 = vmatpush1.msra.mxu0 %v289
    %1997 = vmatprep.subr.mxu0 0.0
    %1998 = vmatpush1.msra.mxu0 %v290
    %1999 = vmatprep.subr.mxu0 0.0
    %2000 = vmatpush1.msra.mxu0 %v291
    %2001 = vmatprep.subr.mxu0 0.0
    %2002 = vmatpush1.msra.mxu0 %v292
    %2003 = vmatprep.subr.mxu0 0.0
    %2004 = vmatpush1.msra.mxu0 %v293
    %2005 = vmatprep.subr.mxu0 0.0
    %2006 = vmatpush1.msra.mxu0 %v294
    %2007 = vmatprep.subr.mxu0 0.0
    %2008 = vmatpush1.msra.mxu0 %v295
    %2009 = vmatprep.subr.mxu0 0.0
    %2010 = vmatpush1.msra.mxu0 %v296
    %2011 = vmatprep.subr.mxu0 0.0
    %2012 = vmatpush1.msra.mxu0 %v297
    %2013 = vmatprep.subr.mxu0 0.0
    %2014 = vmatpush1.msra.mxu0 %v298
    %2015 = vmatprep.subr.mxu0 0.0
    %2016 = vmatpush1.msra.mxu0 %v299
    %2017 = vmatprep.mubr.f32.mxu0 %v1947
    %2018 = vmatmul.mubr.f32.gmra.mrb[0].mxu0 %v1945
    %v2019 = vpop.f32.mrb[0].mxu0
    %v2020 = vadd.f32 0.0, %v2019
    %v2021 = vpop.f32.mrb[0].mxu0
    %2022 = vdwg.mxu0
    %v2023 = vmul.f32 %v2020, 0.03125
    %v2024 = vmul.f32 %v1945, %v1945
    %v2025 = vmul.f32 %v1947, %v1947
    %2026 = vmatprep.subr.mxu0 0.0
    %2027 = vmatpush1.msra.mxu0 %v268
    %2028 = vmatprep.subr.mxu0 0.0
    %2029 = vmatpush1.msra.mxu0 %v269
    %2030 = vmatprep.subr.mxu0 0.0
    %2031 = vmatpush1.msra.mxu0 %v270
    %2032 = vmatprep.subr.mxu0 0.0
    %2033 = vmatpush1.msra.mxu0 %v271
    %2034 = vmatprep.subr.mxu0 0.0
    %2035 = vmatpush1.msra.mxu0 %v272
    %2036 = vmatprep.subr.mxu0 0.0
    %2037 = vmatpush1.msra.mxu0 %v273
    %2038 = vmatprep.subr.mxu0 0.0
    %2039 = vmatpush1.msra.mxu0 %v274
    %2040 = vmatprep.subr.mxu0 0.0
    %2041 = vmatpush1.msra.mxu0 %v275
    %2042 = vmatprep.subr.mxu0 0.0
    %2043 = vmatpush1.msra.mxu0 %v276
    %2044 = vmatprep.subr.mxu0 0.0
    %2045 = vmatpush1.msra.mxu0 %v277
    %2046 = vmatprep.subr.mxu0 0.0
    %2047 = vmatpush1.msra.mxu0 %v278
    %2048 = vmatprep.subr.mxu0 0.0
    %2049 = vmatpush1.msra.mxu0 %v279
    %2050 = vmatprep.subr.mxu0 0.0
    %2051 = vmatpush1.msra.mxu0 %v280
    %2052 = vmatprep.subr.mxu0 0.0
    %2053 = vmatpush1.msra.mxu0 %v281
    %2054 = vmatprep.subr.mxu0 0.0
    %2055 = vmatpush1.msra.mxu0 %v282
    %2056 = vmatprep.subr.mxu0 0.0
    %2057 = vmatpush1.msra.mxu0 %v283
    %2058 = vmatprep.subr.mxu0 0.0
    %2059 = vmatpush1.msra.mxu0 %v284
    %2060 = vmatprep.subr.mxu0 0.0
    %2061 = vmatpush1.msra.mxu0 %v285
    %2062 = vmatprep.subr.mxu0 0.0
    %2063 = vmatpush1.msra.mxu0 %v286
    %2064 = vmatprep.subr.mxu0 0.0
    %2065 = vmatpush1.msra.mxu0 %v287
    %2066 = vmatprep.subr.mxu0 0.0
    %2067 = vmatpush1.msra.mxu0 %v288
    %2068 = vmatprep.subr.mxu0 0.0
    %2069 = vmatpush1.msra.mxu0 %v289
    %2070 = vmatprep.subr.mxu0 0.0
    %2071 = vmatpush1.msra.mxu0 %v290
    %2072 = vmatprep.subr.mxu0 0.0
    %2073 = vmatpush1.msra.mxu0 %v291
    %2074 = vmatprep.subr.mxu0 0.0
    %2075 = vmatpush1.msra.mxu0 %v292
    %2076 = vmatprep.subr.mxu0 0.0
    %2077 = vmatpush1.msra.mxu0 %v293
    %2078 = vmatprep.subr.mxu0 0.0
    %2079 = vmatpush1.msra.mxu0 %v294
    %2080 = vmatprep.subr.mxu0 0.0
    %2081 = vmatpush1.msra.mxu0 %v295
    %2082 = vmatprep.subr.mxu0 0.0
    %2083 = vmatpush1.msra.mxu0 %v296
    %2084 = vmatprep.subr.mxu0 0.0
    %2085 = vmatpush1.msra.mxu0 %v297
    %2086 = vmatprep.subr.mxu0 0.0
    %2087 = vmatpush1.msra.mxu0 %v298
    %2088 = vmatprep.subr.mxu0 0.0
    %2089 = vmatpush1.msra.mxu0 %v299
    %2090 = vmatprep.mubr.f32.mxu0 %v2025
    %2091 = vmatmul.mubr.f32.gmra.mrb[0].mxu0 %v2024
    %v2092 = vpop.f32.mrb[0].mxu0
    %v2093 = vadd.f32 0.0, %v2092
    %v2094 = vpop.f32.mrb[0].mxu0
    %2095 = vdwg.mxu0
    %v2096 = vmul.f32 %v2093, 0.03125
    %v2097 = vmul.f32 %v2023, %v2023
    %v2098 = vsub.f32 %v2096, %v2097
    %v2099 = vadd.f32 %v2098, 1e-05
    %v2100 = vrsqrt.pop %v2099
    %v2102 = vsel %vm1140, %v2023, 0
    %2104 = vmatprep.subr.mxu0 %v301
    %2105 = vmatpush1.msra.mxu0 %v300
    %2106 = vmatprep.subr.mxu0 0.0
    %2107 = vmatpush1.msra.mxu0 0.0
    %2108 = vmatprep.subr.mxu0 0.0
    %2109 = vmatpush1.msra.mxu0 0.0
    %2110 = vmatprep.subr.mxu0 0.0
    %2111 = vmatpush1.msra.mxu0 0.0
    %2112 = vmatprep.subr.mxu0 0.0
    %2113 = vmatpush1.msra.mxu0 0.0
    %2114 = vmatprep.subr.mxu0 0.0
    %2115 = vmatpush1.msra.mxu0 0.0
    %2116 = vmatprep.subr.mxu0 0.0
    %2117 = vmatpush1.msra.mxu0 0.0
    %2118 = vmatprep.subr.mxu0 0.0
    %2119 = vmatpush1.msra.mxu0 0.0
    %2120 = vmatprep.subr.mxu0 0.0
    %2121 = vmatpush1.msra.mxu0 0.0
    %2122 = vmatprep.subr.mxu0 0.0
    %2123 = vmatpush1.msra.mxu0 0.0
    %2124 = vmatprep.subr.mxu0 0.0
    %2125 = vmatpush1.msra.mxu0 0.0
    %2126 = vmatprep.subr.mxu0 0.0
    %2127 = vmatpush1.msra.mxu0 0.0
    %2128 = vmatprep.subr.mxu0 0.0
    %2129 = vmatpush1.msra.mxu0 0.0
    %2130 = vmatprep.subr.mxu0 0.0
    %2131 = vmatpush1.msra.mxu0 0.0
    %2132 = vmatprep.subr.mxu0 0.0
    %2133 = vmatpush1.msra.mxu0 0.0
    %2134 = vmatprep.subr.mxu0 0.0
    %2135 = vmatpush1.msra.mxu0 0.0
    %2136 = vmatprep.subr.mxu0 0.0
    %2137 = vmatpush1.msra.mxu0 0.0
    %2138 = vmatprep.subr.mxu0 0.0
    %2139 = vmatpush1.msra.mxu0 0.0
    %2140 = vmatprep.subr.mxu0 0.0
    %2141 = vmatpush1.msra.mxu0 0.0
    %2142 = vmatprep.subr.mxu0 0.0
    %2143 = vmatpush1.msra.mxu0 0.0
    %2144 = vmatprep.subr.mxu0 0.0
    %2145 = vmatpush1.msra.mxu0 0.0
    %2146 = vmatprep.subr.mxu0 0.0
    %2147 = vmatpush1.msra.mxu0 0.0
    %2148 = vmatprep.subr.mxu0 0.0
    %2149 = vmatpush1.msra.mxu0 0.0
    %2150 = vmatprep.subr.mxu0 0.0
    %2151 = vmatpush1.msra.mxu0 0.0
    %2152 = vmatprep.subr.mxu0 0.0
    %2153 = vmatpush1.msra.mxu0 0.0
    %2154 = vmatprep.subr.mxu0 0.0
    %2155 = vmatpush1.msra.mxu0 0.0
    %2156 = vmatprep.subr.mxu0 0.0
    %2157 = vmatpush1.msra.mxu0 0.0
    %2158 = vmatprep.subr.mxu0 0.0
    %2159 = vmatpush1.msra.mxu0 0.0
    %2160 = vmatprep.subr.mxu0 0.0
    %2161 = vmatpush1.msra.mxu0 0.0
    %2162 = vmatprep.subr.mxu0 0.0
    %2163 = vmatpush1.msra.mxu0 0.0
    %2164 = vmatprep.subr.mxu0 0.0
    %2165 = vmatpush1.msra.mxu0 0.0
    %2166 = vmatprep.subr.mxu0 0.0
    %2167 = vmatpush1.msra.mxu0 0.0
    %2168 = vmatprep.mubr.f32.mxu0 0.0
    %2169 = vmatmul.mubr.f32.gmra.mrb[0].mxu0 %v2102
    %v2170 = vpop.f32.mrb[0].mxu0
    %v2171 = vadd.f32 0.0, %v2170
    %v2172 = vpop.f32.mrb[0].mxu0
    %v2173 = vadd.f32 0.0, %v2172
    %2174 = vdwg.mxu0
    %v2176 = vsel %vm1140, %v2100, 0
    %2178 = vmatprep.subr.mxu0 %v301
    %2179 = vmatpush1.msra.mxu0 %v300
    %2180 = vmatprep.subr.mxu0 0.0
    %2181 = vmatpush1.msra.mxu0 0.0
    %2182 = vmatprep.subr.mxu0 0.0
    %2183 = vmatpush1.msra.mxu0 0.0
    %2184 = vmatprep.subr.mxu0 0.0
    %2185 = vmatpush1.msra.mxu0 0.0
    %2186 = vmatprep.subr.mxu0 0.0
    %2187 = vmatpush1.msra.mxu0 0.0
    %2188 = vmatprep.subr.mxu0 0.0
    %2189 = vmatpush1.msra.mxu0 0.0
    %2190 = vmatprep.subr.mxu0 0.0
    %2191 = vmatpush1.msra.mxu0 0.0
    %2192 = vmatprep.subr.mxu0 0.0
    %2193 = vmatpush1.msra.mxu0 0.0
    %2194 = vmatprep.subr.mxu0 0.0
    %2195 = vmatpush1.msra.mxu0 0.0
    %2196 = vmatprep.subr.mxu0 0.0
    %2197 = vmatpush1.msra.mxu0 0.0
    %2198 = vmatprep.subr.mxu0 0.0
    %2199 = vmatpush1.msra.mxu0 0.0
    %2200 = vmatprep.subr.mxu0 0.0
    %2201 = vmatpush1.msra.mxu0 0.0
    %2202 = vmatprep.subr.mxu0 0.0
    %2203 = vmatpush1.msra.mxu0 0.0
    %2204 = vmatprep.subr.mxu0 0.0
    %2205 = vmatpush1.msra.mxu0 0.0
    %2206 = vmatprep.subr.mxu0 0.0
    %2207 = vmatpush1.msra.mxu0 0.0
    %2208 = vmatprep.subr.mxu0 0.0
    %2209 = vmatpush1.msra.mxu0 0.0
    %2210 = vmatprep.subr.mxu0 0.0
    %2211 = vmatpush1.msra.mxu0 0.0
    %2212 = vmatprep.subr.mxu0 0.0
    %2213 = vmatpush1.msra.mxu0 0.0
    %2214 = vmatprep.subr.mxu0 0.0
    %2215 = vmatpush1.msra.mxu0 0.0
    %2216 = vmatprep.subr.mxu0 0.0
    %2217 = vmatpush1.msra.mxu0 0.0
    %2218 = vmatprep.subr.mxu0 0.0
    %2219 = vmatpush1.msra.mxu0 0.0
    %2220 = vmatprep.subr.mxu0 0.0
    %2221 = vmatpush1.msra.mxu0 0.0
    %2222 = vmatprep.subr.mxu0 0.0
    %2223 = vmatpush1.msra.mxu0 0.0
    %2224 = vmatprep.subr.mxu0 0.0
    %2225 = vmatpush1.msra.mxu0 0.0
    %2226 = vmatprep.subr.mxu0 0.0
    %2227 = vmatpush1.msra.mxu0 0.0
    %2228 = vmatprep.subr.mxu0 0.0
    %2229 = vmatpush1.msra.mxu0 0.0
    %2230 = vmatprep.subr.mxu0 0.0
    %2231 = vmatpush1.msra.mxu0 0.0
    %2232 = vmatprep.subr.mxu0 0.0
    %2233 = vmatpush1.msra.mxu0 0.0
    %2234 = vmatprep.subr.mxu0 0.0
    %2235 = vmatpush1.msra.mxu0 0.0
    %2236 = vmatprep.subr.mxu0 0.0
    %2237 = vmatpush1.msra.mxu0 0.0
    %2238 = vmatprep.subr.mxu0 0.0
    %2239 = vmatpush1.msra.mxu0 0.0
    %2240 = vmatprep.subr.mxu0 0.0
    %2241 = vmatpush1.msra.mxu0 0.0
    %2242 = vmatprep.mubr.f32.mxu0 0.0
    %2243 = vmatmul.mubr.f32.gmra.mrb[0].mxu0 %v2176
    %v2244 = vpop.f32.mrb[0].mxu0
    %v2245 = vadd.f32 0.0, %v2244
    %v2246 = vpop.f32.mrb[0].mxu0
    %v2247 = vadd.f32 0.0, %v2246
    %2248 = vdwg.mxu0
    %v2249 = vsub.f32 %v1945, %v2171
    %v2250 = vsub.f32 %v1947, %v2173
    %v2251 = vmul.f32 %v2249, %v2245
    %v2252 = vmul.f32 %v2250, %v2247
    %v2254 = vlaneseq
    %v2255 = vshrl.u32 %v2254, 7
    %v2256 = vsub.s32 0, %v2255
    %v2257 = vrot.slane %v1950, %v2256
    %v2258 = vlaneseq
    %v2259 = vshrl.u32 %v2258, 7
    %v2260 = vsub.s32 1, %v2259
    %v2261 = vrot.slane %v1950, %v2260
    %v2264 = vmul.f32 %v2251, %v2257
    %v2265 = vmul.f32 %v2252, %v2261
    %v2267 = vlaneseq
    %v2268 = vshrl.u32 %v2267, 7
    %v2269 = vsub.s32 0, %v2268
    %v2270 = vrot.slane %v1952, %v2269
    %v2271 = vlaneseq
    %v2272 = vshrl.u32 %v2271, 7
    %v2273 = vsub.s32 1, %v2272
    %v2274 = vrot.slane %v1952, %v2273
    %v2277 = vadd.f32 %v2264, %v2270
    %v2278 = vadd.f32 %v2265, %v2274
    %v2279 = vmax.f32 %v2277, 0.0
    %v2280 = vmax.f32 %v2278, 0.0
    %s2281 = scalar_lea.vmem [#allocation22], 512
    %v2282 = vld [vmem:[%s2281] sm:$0xff]
    %v2283 = vld [vmem:[%s2281 + $0x8] sm:$0xff]
    %v2284 = vld [vmem:[%s2281 + $0x10] sm:$0xff]
    %v2285 = vld [vmem:[%s2281 + $0x18] sm:$0xff]
    %v2286 = vld [vmem:[%s2281 + $0x20] sm:$0xff]
    %v2287 = vld [vmem:[%s2281 + $0x28] sm:$0xff]
    %v2288 = vld [vmem:[%s2281 + $0x30] sm:$0xff]
    %v2289 = vld [vmem:[%s2281 + $0x38] sm:$0xff]
    %v2290 = vld [vmem:[%s2281 + $0x40] sm:$0xff]
    %v2291 = vld [vmem:[%s2281 + $0x48] sm:$0xff]
    %v2292 = vld [vmem:[%s2281 + $0x50] sm:$0xff]
    %v2293 = vld [vmem:[%s2281 + $0x58] sm:$0xff]
    %v2294 = vld [vmem:[%s2281 + $0x60] sm:$0xff]
    %v2295 = vld [vmem:[%s2281 + $0x68] sm:$0xff]
    %v2296 = vld [vmem:[%s2281 + $0x70] sm:$0xff]
    %v2297 = vld [vmem:[%s2281 + $0x78] sm:$0xff]
    %v2298 = vld [vmem:[%s2281 + $0x80] sm:$0xff]
    %v2299 = vld [vmem:[%s2281 + $0x88] sm:$0xff]
    %v2300 = vld [vmem:[%s2281 + $0x90] sm:$0xff]
    %v2301 = vld [vmem:[%s2281 + $0x98] sm:$0xff]
    %v2302 = vld [vmem:[%s2281 + $0xa0] sm:$0xff]
    %v2303 = vld [vmem:[%s2281 + $0xa8] sm:$0xff]
    %v2304 = vld [vmem:[%s2281 + $0xb0] sm:$0xff]
    %v2305 = vld [vmem:[%s2281 + $0xb8] sm:$0xff]
    %v2306 = vld [vmem:[%s2281 + $0xc0] sm:$0xff]
    %v2307 = vld [vmem:[%s2281 + $0xc8] sm:$0xff]
    %v2308 = vld [vmem:[%s2281 + $0xd0] sm:$0xff]
    %v2309 = vld [vmem:[%s2281 + $0xd8] sm:$0xff]
    %v2310 = vld [vmem:[%s2281 + $0xe0] sm:$0xff]
    %v2311 = vld [vmem:[%s2281 + $0xe8] sm:$0xff]
    %v2312 = vld [vmem:[%s2281 + $0xf0] sm:$0xff]
    %v2313 = vld [vmem:[%s2281 + $0xf8] sm:$0xff]
    %v2314 = vld [vmem:[%s2281 + $0x100] sm:$0xff]
    %v2315 = vld [vmem:[%s2281 + $0x108] sm:$0xff]
    %v2316 = vld [vmem:[%s2281 + $0x110] sm:$0xff]
    %v2317 = vld [vmem:[%s2281 + $0x118] sm:$0xff]
    %v2318 = vld [vmem:[%s2281 + $0x120] sm:$0xff]
    %v2319 = vld [vmem:[%s2281 + $0x128] sm:$0xff]
    %v2320 = vld [vmem:[%s2281 + $0x130] sm:$0xff]
    %v2321 = vld [vmem:[%s2281 + $0x138] sm:$0xff]
    %v2322 = vld [vmem:[%s2281 + $0x140] sm:$0xff]
    %v2323 = vld [vmem:[%s2281 + $0x148] sm:$0xff]
    %v2324 = vld [vmem:[%s2281 + $0x150] sm:$0xff]
    %v2325 = vld [vmem:[%s2281 + $0x158] sm:$0xff]
    %v2326 = vld [vmem:[%s2281 + $0x160] sm:$0xff]
    %v2327 = vld [vmem:[%s2281 + $0x168] sm:$0xff]
    %v2328 = vld [vmem:[%s2281 + $0x170] sm:$0xff]
    %v2329 = vld [vmem:[%s2281 + $0x178] sm:$0xff]
    %v2330 = vld [vmem:[%s2281 + $0x180] sm:$0xff]
    %v2331 = vld [vmem:[%s2281 + $0x188] sm:$0xff]
    %v2332 = vld [vmem:[%s2281 + $0x190] sm:$0xff]
    %v2333 = vld [vmem:[%s2281 + $0x198] sm:$0xff]
    %v2334 = vld [vmem:[%s2281 + $0x1a0] sm:$0xff]
    %v2335 = vld [vmem:[%s2281 + $0x1a8] sm:$0xff]
    %v2336 = vld [vmem:[%s2281 + $0x1b0] sm:$0xff]
    %v2337 = vld [vmem:[%s2281 + $0x1b8] sm:$0xff]
    %v2338 = vld [vmem:[%s2281 + $0x1c0] sm:$0xff]
    %v2339 = vld [vmem:[%s2281 + $0x1c8] sm:$0xff]
    %v2340 = vld [vmem:[%s2281 + $0x1d0] sm:$0xff]
    %v2341 = vld [vmem:[%s2281 + $0x1d8] sm:$0xff]
    %v2342 = vld [vmem:[%s2281 + $0x1e0] sm:$0xff]
    %v2343 = vld [vmem:[%s2281 + $0x1e8] sm:$0xff]
    %v2344 = vld [vmem:[%s2281 + $0x1f0] sm:$0xff]
    %v2345 = vld [vmem:[%s2281 + $0x1f8] sm:$0xff]
    %s2346 = scalar_lea.vmem %s20, 2
    %v2347 = vld [vmem:[%s2346] sm:$0x3]
    %v2349 = vlaneseq
    %v2350 = vshrl.u32 %v2349, 7
    %v2351 = vsub.s32 0, %v2350
    %v2352 = vrot.slane %v2347, %v2351
    %v2353 = vlaneseq
    %v2354 = vshrl.u32 %v2353, 7
    %v2355 = vsub.s32 1, %v2354
    %v2356 = vrot.slane %v2347, %v2355
    %2359 = vmatprep.subr.mxu0 %v2283
    %2360 = vmatpush1.msra.mxu0 %v2282
    %2361 = vmatprep.subr.mxu0 %v2285
    %2362 = vmatpush1.msra.mxu0 %v2284
    %2363 = vmatprep.subr.mxu0 %v2287
    %2364 = vmatpush1.msra.mxu0 %v2286
    %2365 = vmatprep.subr.mxu0 %v2289
    %2366 = vmatpush1.msra.mxu0 %v2288
    %2367 = vmatprep.subr.mxu0 %v2291
    %2368 = vmatpush1.msra.mxu0 %v2290
    %2369 = vmatprep.subr.mxu0 %v2293
    %2370 = vmatpush1.msra.mxu0 %v2292
    %2371 = vmatprep.subr.mxu0 %v2295
    %2372 = vmatpush1.msra.mxu0 %v2294
    %2373 = vmatprep.subr.mxu0 %v2297
    %2374 = vmatpush1.msra.mxu0 %v2296
    %2375 = vmatprep.subr.mxu0 %v2299
    %2376 = vmatpush1.msra.mxu0 %v2298
    %2377 = vmatprep.subr.mxu0 %v2301
    %2378 = vmatpush1.msra.mxu0 %v2300
    %2379 = vmatprep.subr.mxu0 %v2303
    %2380 = vmatpush1.msra.mxu0 %v2302
    %2381 = vmatprep.subr.mxu0 %v2305
    %2382 = vmatpush1.msra.mxu0 %v2304
    %2383 = vmatprep.subr.mxu0 %v2307
    %2384 = vmatpush1.msra.mxu0 %v2306
    %2385 = vmatprep.subr.mxu0 %v2309
    %2386 = vmatpush1.msra.mxu0 %v2308
    %2387 = vmatprep.subr.mxu0 %v2311
    %2388 = vmatpush1.msra.mxu0 %v2310
    %2389 = vmatprep.subr.mxu0 %v2313
    %2390 = vmatpush1.msra.mxu0 %v2312
    %2391 = vmatprep.subr.mxu0 %v2315
    %2392 = vmatpush1.msra.mxu0 %v2314
    %2393 = vmatprep.subr.mxu0 %v2317
    %2394 = vmatpush1.msra.mxu0 %v2316
    %2395 = vmatprep.subr.mxu0 %v2319
    %2396 = vmatpush1.msra.mxu0 %v2318
    %2397 = vmatprep.subr.mxu0 %v2321
    %2398 = vmatpush1.msra.mxu0 %v2320
    %2399 = vmatprep.subr.mxu0 %v2323
    %2400 = vmatpush1.msra.mxu0 %v2322
    %2401 = vmatprep.subr.mxu0 %v2325
    %2402 = vmatpush1.msra.mxu0 %v2324
    %2403 = vmatprep.subr.mxu0 %v2327
    %2404 = vmatpush1.msra.mxu0 %v2326
    %2405 = vmatprep.subr.mxu0 %v2329
    %2406 = vmatpush1.msra.mxu0 %v2328
    %2407 = vmatprep.subr.mxu0 %v2331
    %2408 = vmatpush1.msra.mxu0 %v2330
    %2409 = vmatprep.subr.mxu0 %v2333
    %2410 = vmatpush1.msra.mxu0 %v2332
    %2411 = vmatprep.subr.mxu0 %v2335
    %2412 = vmatpush1.msra.mxu0 %v2334
    %2413 = vmatprep.subr.mxu0 %v2337
    %2414 = vmatpush1.msra.mxu0 %v2336
    %2415 = vmatprep.subr.mxu0 %v2339
    %2416 = vmatpush1.msra.mxu0 %v2338
    %2417 = vmatprep.subr.mxu0 %v2341
    %2418 = vmatpush1.msra.mxu0 %v2340
    %2419 = vmatprep.subr.mxu0 %v2343
    %2420 = vmatpush1.msra.mxu0 %v2342
    %2421 = vmatprep.subr.mxu0 %v2345
    %2422 = vmatpush1.msra.mxu0 %v2344
    %2423 = vmatprep.mubr.f32.mxu0 %v2280
    %2424 = vmatmul.mubr.f32.gmra.mrb[0].mxu0 %v2279
    %v2425 = vpop.f32.mrb[0].mxu0
    %v2426 = vadd.f32 %v2352, %v2425
    %v2427 = vpop.f32.mrb[0].mxu0
    %v2428 = vadd.f32 %v2356, %v2427
    %2429 = vdwg.mxu0
    %s2430 = scalar_lea.vmem [#allocation23], 2
    %v2431 = vld [vmem:[%s2430] sm:$0x3]
    %s2432 = scalar_lea.vmem [#allocation25], 2
    %v2433 = vld [vmem:[%s2432] sm:$0x3]
    %2434 = vmatprep.subr.mxu0 0.0
    %2435 = vmatpush1.msra.mxu0 %v268
    %2436 = vmatprep.subr.mxu0 0.0
    %2437 = vmatpush1.msra.mxu0 %v269
    %2438 = vmatprep.subr.mxu0 0.0
    %2439 = vmatpush1.msra.mxu0 %v270
    %2440 = vmatprep.subr.mxu0 0.0
    %2441 = vmatpush1.msra.mxu0 %v271
    %2442 = vmatprep.subr.mxu0 0.0
    %2443 = vmatpush1.msra.mxu0 %v272
    %2444 = vmatprep.subr.mxu0 0.0
    %2445 = vmatpush1.msra.mxu0 %v273
    %2446 = vmatprep.subr.mxu0 0.0
    %2447 = vmatpush1.msra.mxu0 %v274
    %2448 = vmatprep.subr.mxu0 0.0
    %2449 = vmatpush1.msra.mxu0 %v275
    %2450 = vmatprep.subr.mxu0 0.0
    %2451 = vmatpush1.msra.mxu0 %v276
    %2452 = vmatprep.subr.mxu0 0.0
    %2453 = vmatpush1.msra.mxu0 %v277
    %2454 = vmatprep.subr.mxu0 0.0
    %2455 = vmatpush1.msra.mxu0 %v278
    %2456 = vmatprep.subr.mxu0 0.0
    %2457 = vmatpush1.msra.mxu0 %v279
    %2458 = vmatprep.subr.mxu0 0.0
    %2459 = vmatpush1.msra.mxu0 %v280
    %2460 = vmatprep.subr.mxu0 0.0
    %2461 = vmatpush1.msra.mxu0 %v281
    %2462 = vmatprep.subr.mxu0 0.0
    %2463 = vmatpush1.msra.mxu0 %v282
    %2464 = vmatprep.subr.mxu0 0.0
    %2465 = vmatpush1.msra.mxu0 %v283
    %2466 = vmatprep.subr.mxu0 0.0
    %2467 = vmatpush1.msra.mxu0 %v284
    %2468 = vmatprep.subr.mxu0 0.0
    %2469 = vmatpush1.msra.mxu0 %v285
    %2470 = vmatprep.subr.mxu0 0.0
    %2471 = vmatpush1.msra.mxu0 %v286
    %2472 = vmatprep.subr.mxu0 0.0
    %2473 = vmatpush1.msra.mxu0 %v287
    %2474 = vmatprep.subr.mxu0 0.0
    %2475 = vmatpush1.msra.mxu0 %v288
    %2476 = vmatprep.subr.mxu0 0.0
    %2477 = vmatpush1.msra.mxu0 %v289
    %2478 = vmatprep.subr.mxu0 0.0
    %2479 = vmatpush1.msra.mxu0 %v290
    %2480 = vmatprep.subr.mxu0 0.0
    %2481 = vmatpush1.msra.mxu0 %v291
    %2482 = vmatprep.subr.mxu0 0.0
    %2483 = vmatpush1.msra.mxu0 %v292
    %2484 = vmatprep.subr.mxu0 0.0
    %2485 = vmatpush1.msra.mxu0 %v293
    %2486 = vmatprep.subr.mxu0 0.0
    %2487 = vmatpush1.msra.mxu0 %v294
    %2488 = vmatprep.subr.mxu0 0.0
    %2489 = vmatpush1.msra.mxu0 %v295
    %2490 = vmatprep.subr.mxu0 0.0
    %2491 = vmatpush1.msra.mxu0 %v296
    %2492 = vmatprep.subr.mxu0 0.0
    %2493 = vmatpush1.msra.mxu0 %v297
    %2494 = vmatprep.subr.mxu0 0.0
    %2495 = vmatpush1.msra.mxu0 %v298
    %2496 = vmatprep.subr.mxu0 0.0
    %2497 = vmatpush1.msra.mxu0 %v299
    %2498 = vmatprep.mubr.f32.mxu0 %v2428
    %2499 = vmatmul.mubr.f32.gmra.mrb[0].mxu0 %v2426
    %v2500 = vpop.f32.mrb[0].mxu0
    %v2501 = vadd.f32 0.0, %v2500
    %v2502 = vpop.f32.mrb[0].mxu0
    %2503 = vdwg.mxu0
    %v2504 = vmul.f32 %v2501, 0.03125
    %v2505 = vmul.f32 %v2426, %v2426
    %v2506 = vmul.f32 %v2428, %v2428
    %2507 = vmatprep.subr.mxu0 0.0
    %2508 = vmatpush1.msra.mxu0 %v268
    %2509 = vmatprep.subr.mxu0 0.0
    %2510 = vmatpush1.msra.mxu0 %v269
    %2511 = vmatprep.subr.mxu0 0.0
    %2512 = vmatpush1.msra.mxu0 %v270
    %2513 = vmatprep.subr.mxu0 0.0
    %2514 = vmatpush1.msra.mxu0 %v271
    %2515 = vmatprep.subr.mxu0 0.0
    %2516 = vmatpush1.msra.mxu0 %v272
    %2517 = vmatprep.subr.mxu0 0.0
    %2518 = vmatpush1.msra.mxu0 %v273
    %2519 = vmatprep.subr.mxu0 0.0
    %2520 = vmatpush1.msra.mxu0 %v274
    %2521 = vmatprep.subr.mxu0 0.0
    %2522 = vmatpush1.msra.mxu0 %v275
    %2523 = vmatprep.subr.mxu0 0.0
    %2524 = vmatpush1.msra.mxu0 %v276
    %2525 = vmatprep.subr.mxu0 0.0
    %2526 = vmatpush1.msra.mxu0 %v277
    %2527 = vmatprep.subr.mxu0 0.0
    %2528 = vmatpush1.msra.mxu0 %v278
    %2529 = vmatprep.subr.mxu0 0.0
    %2530 = vmatpush1.msra.mxu0 %v279
    %2531 = vmatprep.subr.mxu0 0.0
    %2532 = vmatpush1.msra.mxu0 %v280
    %2533 = vmatprep.subr.mxu0 0.0
    %2534 = vmatpush1.msra.mxu0 %v281
    %2535 = vmatprep.subr.mxu0 0.0
    %2536 = vmatpush1.msra.mxu0 %v282
    %2537 = vmatprep.subr.mxu0 0.0
    %2538 = vmatpush1.msra.mxu0 %v283
    %2539 = vmatprep.subr.mxu0 0.0
    %2540 = vmatpush1.msra.mxu0 %v284
    %2541 = vmatprep.subr.mxu0 0.0
    %2542 = vmatpush1.msra.mxu0 %v285
    %2543 = vmatprep.subr.mxu0 0.0
    %2544 = vmatpush1.msra.mxu0 %v286
    %2545 = vmatprep.subr.mxu0 0.0
    %2546 = vmatpush1.msra.mxu0 %v287
    %2547 = vmatprep.subr.mxu0 0.0
    %2548 = vmatpush1.msra.mxu0 %v288
    %2549 = vmatprep.subr.mxu0 0.0
    %2550 = vmatpush1.msra.mxu0 %v289
    %2551 = vmatprep.subr.mxu0 0.0
    %2552 = vmatpush1.msra.mxu0 %v290
    %2553 = vmatprep.subr.mxu0 0.0
    %2554 = vmatpush1.msra.mxu0 %v291
    %2555 = vmatprep.subr.mxu0 0.0
    %2556 = vmatpush1.msra.mxu0 %v292
    %2557 = vmatprep.subr.mxu0 0.0
    %2558 = vmatpush1.msra.mxu0 %v293
    %2559 = vmatprep.subr.mxu0 0.0
    %2560 = vmatpush1.msra.mxu0 %v294
    %2561 = vmatprep.subr.mxu0 0.0
    %2562 = vmatpush1.msra.mxu0 %v295
    %2563 = vmatprep.subr.mxu0 0.0
    %2564 = vmatpush1.msra.mxu0 %v296
    %2565 = vmatprep.subr.mxu0 0.0
    %2566 = vmatpush1.msra.mxu0 %v297
    %2567 = vmatprep.subr.mxu0 0.0
    %2568 = vmatpush1.msra.mxu0 %v298
    %2569 = vmatprep.subr.mxu0 0.0
    %2570 = vmatpush1.msra.mxu0 %v299
    %2571 = vmatprep.mubr.f32.mxu0 %v2506
    %2572 = vmatmul.mubr.f32.gmra.mrb[0].mxu0 %v2505
    %v2573 = vpop.f32.mrb[0].mxu0
    %v2574 = vadd.f32 0.0, %v2573
    %v2575 = vpop.f32.mrb[0].mxu0
    %2576 = vdwg.mxu0
    %v2577 = vmul.f32 %v2574, 0.03125
    %v2578 = vmul.f32 %v2504, %v2504
    %v2579 = vsub.f32 %v2577, %v2578
    %v2580 = vadd.f32 %v2579, 1e-05
    %v2581 = vrsqrt.pop %v2580
    %v2583 = vsel %vm1140, %v2504, 0
    %2585 = vmatprep.subr.mxu0 %v301
    %2586 = vmatpush1.msra.mxu0 %v300
    %2587 = vmatprep.subr.mxu0 0.0
    %2588 = vmatpush1.msra.mxu0 0.0
    %2589 = vmatprep.subr.mxu0 0.0
    %2590 = vmatpush1.msra.mxu0 0.0
    %2591 = vmatprep.subr.mxu0 0.0
    %2592 = vmatpush1.msra.mxu0 0.0
    %2593 = vmatprep.subr.mxu0 0.0
    %2594 = vmatpush1.msra.mxu0 0.0
    %2595 = vmatprep.subr.mxu0 0.0
    %2596 = vmatpush1.msra.mxu0 0.0
    %2597 = vmatprep.subr.mxu0 0.0
    %2598 = vmatpush1.msra.mxu0 0.0
    %2599 = vmatprep.subr.mxu0 0.0
    %2600 = vmatpush1.msra.mxu0 0.0
    %2601 = vmatprep.subr.mxu0 0.0
    %2602 = vmatpush1.msra.mxu0 0.0
    %2603 = vmatprep.subr.mxu0 0.0
    %2604 = vmatpush1.msra.mxu0 0.0
    %2605 = vmatprep.subr.mxu0 0.0
    %2606 = vmatpush1.msra.mxu0 0.0
    %2607 = vmatprep.subr.mxu0 0.0
    %2608 = vmatpush1.msra.mxu0 0.0
    %2609 = vmatprep.subr.mxu0 0.0
    %2610 = vmatpush1.msra.mxu0 0.0
    %2611 = vmatprep.subr.mxu0 0.0
    %2612 = vmatpush1.msra.mxu0 0.0
    %2613 = vmatprep.subr.mxu0 0.0
    %2614 = vmatpush1.msra.mxu0 0.0
    %2615 = vmatprep.subr.mxu0 0.0
    %2616 = vmatpush1.msra.mxu0 0.0
    %2617 = vmatprep.subr.mxu0 0.0
    %2618 = vmatpush1.msra.mxu0 0.0
    %2619 = vmatprep.subr.mxu0 0.0
    %2620 = vmatpush1.msra.mxu0 0.0
    %2621 = vmatprep.subr.mxu0 0.0
    %2622 = vmatpush1.msra.mxu0 0.0
    %2623 = vmatprep.subr.mxu0 0.0
    %2624 = vmatpush1.msra.mxu0 0.0
    %2625 = vmatprep.subr.mxu0 0.0
    %2626 = vmatpush1.msra.mxu0 0.0
    %2627 = vmatprep.subr.mxu0 0.0
    %2628 = vmatpush1.msra.mxu0 0.0
    %2629 = vmatprep.subr.mxu0 0.0
    %2630 = vmatpush1.msra.mxu0 0.0
    %2631 = vmatprep.subr.mxu0 0.0
    %2632 = vmatpush1.msra.mxu0 0.0
    %2633 = vmatprep.subr.mxu0 0.0
    %2634 = vmatpush1.msra.mxu0 0.0
    %2635 = vmatprep.subr.mxu0 0.0
    %2636 = vmatpush1.msra.mxu0 0.0
    %2637 = vmatprep.subr.mxu0 0.0
    %2638 = vmatpush1.msra.mxu0 0.0
    %2639 = vmatprep.subr.mxu0 0.0
    %2640 = vmatpush1.msra.mxu0 0.0
    %2641 = vmatprep.subr.mxu0 0.0
    %2642 = vmatpush1.msra.mxu0 0.0
    %2643 = vmatprep.subr.mxu0 0.0
    %2644 = vmatpush1.msra.mxu0 0.0
    %2645 = vmatprep.subr.mxu0 0.0
    %2646 = vmatpush1.msra.mxu0 0.0
    %2647 = vmatprep.subr.mxu0 0.0
    %2648 = vmatpush1.msra.mxu0 0.0
    %2649 = vmatprep.mubr.f32.mxu0 0.0
    %2650 = vmatmul.mubr.f32.gmra.mrb[0].mxu0 %v2583
    %v2651 = vpop.f32.mrb[0].mxu0
    %v2652 = vadd.f32 0.0, %v2651
    %v2653 = vpop.f32.mrb[0].mxu0
    %v2654 = vadd.f32 0.0, %v2653
    %2655 = vdwg.mxu0
    %v2657 = vsel %vm1140, %v2581, 0
    %2659 = vmatprep.subr.mxu0 %v301
    %2660 = vmatpush1.msra.mxu0 %v300
    %2661 = vmatprep.subr.mxu0 0.0
    %2662 = vmatpush1.msra.mxu0 0.0
    %2663 = vmatprep.subr.mxu0 0.0
    %2664 = vmatpush1.msra.mxu0 0.0
    %2665 = vmatprep.subr.mxu0 0.0
    %2666 = vmatpush1.msra.mxu0 0.0
    %2667 = vmatprep.subr.mxu0 0.0
    %2668 = vmatpush1.msra.mxu0 0.0
    %2669 = vmatprep.subr.mxu0 0.0
    %2670 = vmatpush1.msra.mxu0 0.0
    %2671 = vmatprep.subr.mxu0 0.0
    %2672 = vmatpush1.msra.mxu0 0.0
    %2673 = vmatprep.subr.mxu0 0.0
    %2674 = vmatpush1.msra.mxu0 0.0
    %2675 = vmatprep.subr.mxu0 0.0
    %2676 = vmatpush1.msra.mxu0 0.0
    %2677 = vmatprep.subr.mxu0 0.0
    %2678 = vmatpush1.msra.mxu0 0.0
    %2679 = vmatprep.subr.mxu0 0.0
    %2680 = vmatpush1.msra.mxu0 0.0
    %2681 = vmatprep.subr.mxu0 0.0
    %2682 = vmatpush1.msra.mxu0 0.0
    %2683 = vmatprep.subr.mxu0 0.0
    %2684 = vmatpush1.msra.mxu0 0.0
    %2685 = vmatprep.subr.mxu0 0.0
    %2686 = vmatpush1.msra.mxu0 0.0
    %2687 = vmatprep.subr.mxu0 0.0
    %2688 = vmatpush1.msra.mxu0 0.0
    %2689 = vmatprep.subr.mxu0 0.0
    %2690 = vmatpush1.msra.mxu0 0.0
    %2691 = vmatprep.subr.mxu0 0.0
    %2692 = vmatpush1.msra.mxu0 0.0
    %2693 = vmatprep.subr.mxu0 0.0
    %2694 = vmatpush1.msra.mxu0 0.0
    %2695 = vmatprep.subr.mxu0 0.0
    %2696 = vmatpush1.msra.mxu0 0.0
    %2697 = vmatprep.subr.mxu0 0.0
    %2698 = vmatpush1.msra.mxu0 0.0
    %2699 = vmatprep.subr.mxu0 0.0
    %2700 = vmatpush1.msra.mxu0 0.0
    %2701 = vmatprep.subr.mxu0 0.0
    %2702 = vmatpush1.msra.mxu0 0.0
    %2703 = vmatprep.subr.mxu0 0.0
    %2704 = vmatpush1.msra.mxu0 0.0
    %2705 = vmatprep.subr.mxu0 0.0
    %2706 = vmatpush1.msra.mxu0 0.0
    %2707 = vmatprep.subr.mxu0 0.0
    %2708 = vmatpush1.msra.mxu0 0.0
    %2709 = vmatprep.subr.mxu0 0.0
    %2710 = vmatpush1.msra.mxu0 0.0
    %2711 = vmatprep.subr.mxu0 0.0
    %2712 = vmatpush1.msra.mxu0 0.0
    %2713 = vmatprep.subr.mxu0 0.0
    %2714 = vmatpush1.msra.mxu0 0.0
    %2715 = vmatprep.subr.mxu0 0.0
    %2716 = vmatpush1.msra.mxu0 0.0
    %2717 = vmatprep.subr.mxu0 0.0
    %2718 = vmatpush1.msra.mxu0 0.0
    %2719 = vmatprep.subr.mxu0 0.0
    %2720 = vmatpush1.msra.mxu0 0.0
    %2721 = vmatprep.subr.mxu0 0.0
    %2722 = vmatpush1.msra.mxu0 0.0
    %2723 = vmatprep.mubr.f32.mxu0 0.0
    %2724 = vmatmul.mubr.f32.gmra.mrb[0].mxu0 %v2657
    %v2725 = vpop.f32.mrb[0].mxu0
    %v2726 = vadd.f32 0.0, %v2725
    %v2727 = vpop.f32.mrb[0].mxu0
    %v2728 = vadd.f32 0.0, %v2727
    %2729 = vdwg.mxu0
    %v2730 = vsub.f32 %v2426, %v2652
    %v2731 = vsub.f32 %v2428, %v2654
    %v2732 = vmul.f32 %v2730, %v2726
    %v2733 = vmul.f32 %v2731, %v2728
    %v2735 = vlaneseq
    %v2736 = vshrl.u32 %v2735, 7
    %v2737 = vsub.s32 0, %v2736
    %v2738 = vrot.slane %v2431, %v2737
    %v2739 = vlaneseq
    %v2740 = vshrl.u32 %v2739, 7
    %v2741 = vsub.s32 1, %v2740
    %v2742 = vrot.slane %v2431, %v2741
    %v2745 = vmul.f32 %v2732, %v2738
    %v2746 = vmul.f32 %v2733, %v2742
    %v2748 = vlaneseq
    %v2749 = vshrl.u32 %v2748, 7
    %v2750 = vsub.s32 0, %v2749
    %v2751 = vrot.slane %v2433, %v2750
    %v2752 = vlaneseq
    %v2753 = vshrl.u32 %v2752, 7
    %v2754 = vsub.s32 1, %v2753
    %v2755 = vrot.slane %v2433, %v2754
    %v2758 = vadd.f32 %v2745, %v2751
    %v2759 = vadd.f32 %v2746, %v2755
    %v2760 = vmax.f32 %v2758, 0.0
    %v2761 = vmax.f32 %v2759, 0.0
    %v2762 = vadd.f32 %v1798, %v2760
    %v2763 = vadd.f32 %v1799, %v2761
    %v2764 = vld [vmem:[%s23] sm:$0xff]
    %v2765 = vld [vmem:[%s23 + $0x8] sm:$0xff]
    %v2766 = vld [vmem:[%s23 + $0x10] sm:$0xff]
    %v2767 = vld [vmem:[%s23 + $0x18] sm:$0xff]
    %v2768 = vld [vmem:[%s23 + $0x20] sm:$0xff]
    %v2769 = vld [vmem:[%s23 + $0x28] sm:$0xff]
    %v2770 = vld [vmem:[%s23 + $0x30] sm:$0xff]
    %v2771 = vld [vmem:[%s23 + $0x38] sm:$0xff]
    %v2772 = vld [vmem:[%s23 + $0x40] sm:$0xff]
    %v2773 = vld [vmem:[%s23 + $0x48] sm:$0xff]
    %v2774 = vld [vmem:[%s23 + $0x50] sm:$0xff]
    %v2775 = vld [vmem:[%s23 + $0x58] sm:$0xff]
    %v2776 = vld [vmem:[%s23 + $0x60] sm:$0xff]
    %v2777 = vld [vmem:[%s23 + $0x68] sm:$0xff]
    %v2778 = vld [vmem:[%s23 + $0x70] sm:$0xff]
    %v2779 = vld [vmem:[%s23 + $0x78] sm:$0xff]
    %v2780 = vld [vmem:[%s23 + $0x80] sm:$0xff]
    %v2781 = vld [vmem:[%s23 + $0x88] sm:$0xff]
    %v2782 = vld [vmem:[%s23 + $0x90] sm:$0xff]
    %v2783 = vld [vmem:[%s23 + $0x98] sm:$0xff]
    %v2784 = vld [vmem:[%s23 + $0xa0] sm:$0xff]
    %v2785 = vld [vmem:[%s23 + $0xa8] sm:$0xff]
    %v2786 = vld [vmem:[%s23 + $0xb0] sm:$0xff]
    %v2787 = vld [vmem:[%s23 + $0xb8] sm:$0xff]
    %v2788 = vld [vmem:[%s23 + $0xc0] sm:$0xff]
    %v2789 = vld [vmem:[%s23 + $0xc8] sm:$0xff]
    %v2790 = vld [vmem:[%s23 + $0xd0] sm:$0xff]
    %v2791 = vld [vmem:[%s23 + $0xd8] sm:$0xff]
    %v2792 = vld [vmem:[%s23 + $0xe0] sm:$0xff]
    %v2793 = vld [vmem:[%s23 + $0xe8] sm:$0xff]
    %v2794 = vld [vmem:[%s23 + $0xf0] sm:$0xff]
    %v2795 = vld [vmem:[%s23 + $0xf8] sm:$0xff]
    %v2796 = vld [vmem:[%s23 + $0x100] sm:$0xff]
    %v2797 = vld [vmem:[%s23 + $0x108] sm:$0xff]
    %v2798 = vld [vmem:[%s23 + $0x110] sm:$0xff]
    %v2799 = vld [vmem:[%s23 + $0x118] sm:$0xff]
    %v2800 = vld [vmem:[%s23 + $0x120] sm:$0xff]
    %v2801 = vld [vmem:[%s23 + $0x128] sm:$0xff]
    %v2802 = vld [vmem:[%s23 + $0x130] sm:$0xff]
    %v2803 = vld [vmem:[%s23 + $0x138] sm:$0xff]
    %v2804 = vld [vmem:[%s23 + $0x140] sm:$0xff]
    %v2805 = vld [vmem:[%s23 + $0x148] sm:$0xff]
    %v2806 = vld [vmem:[%s23 + $0x150] sm:$0xff]
    %v2807 = vld [vmem:[%s23 + $0x158] sm:$0xff]
    %v2808 = vld [vmem:[%s23 + $0x160] sm:$0xff]
    %v2809 = vld [vmem:[%s23 + $0x168] sm:$0xff]
    %v2810 = vld [vmem:[%s23 + $0x170] sm:$0xff]
    %v2811 = vld [vmem:[%s23 + $0x178] sm:$0xff]
    %v2812 = vld [vmem:[%s23 + $0x180] sm:$0xff]
    %v2813 = vld [vmem:[%s23 + $0x188] sm:$0xff]
    %v2814 = vld [vmem:[%s23 + $0x190] sm:$0xff]
    %v2815 = vld [vmem:[%s23 + $0x198] sm:$0xff]
    %v2816 = vld [vmem:[%s23 + $0x1a0] sm:$0xff]
    %v2817 = vld [vmem:[%s23 + $0x1a8] sm:$0xff]
    %v2818 = vld [vmem:[%s23 + $0x1b0] sm:$0xff]
    %v2819 = vld [vmem:[%s23 + $0x1b8] sm:$0xff]
    %v2820 = vld [vmem:[%s23 + $0x1c0] sm:$0xff]
    %v2821 = vld [vmem:[%s23 + $0x1c8] sm:$0xff]
    %v2822 = vld [vmem:[%s23 + $0x1d0] sm:$0xff]
    %v2823 = vld [vmem:[%s23 + $0x1d8] sm:$0xff]
    %v2824 = vld [vmem:[%s23 + $0x1e0] sm:$0xff]
    %v2825 = vld [vmem:[%s23 + $0x1e8] sm:$0xff]
    %v2826 = vld [vmem:[%s23 + $0x1f0] sm:$0xff]
    %v2827 = vld [vmem:[%s23 + $0x1f8] sm:$0xff]
    %v2828 = vld [vmem:[%s24] sm:$0x3]
    %v2830 = vlaneseq
    %v2831 = vshrl.u32 %v2830, 7
    %v2832 = vsub.s32 0, %v2831
    %v2833 = vrot.slane %v2828, %v2832
    %v2834 = vlaneseq
    %v2835 = vshrl.u32 %v2834, 7
    %v2836 = vsub.s32 1, %v2835
    %v2837 = vrot.slane %v2828, %v2836
    %2840 = vmatprep.subr.mxu0 %v2765
    %2841 = vmatpush1.msra.mxu0 %v2764
    %2842 = vmatprep.subr.mxu0 %v2767
    %2843 = vmatpush1.msra.mxu0 %v2766
    %2844 = vmatprep.subr.mxu0 %v2769
    %2845 = vmatpush1.msra.mxu0 %v2768
    %2846 = vmatprep.subr.mxu0 %v2771
    %2847 = vmatpush1.msra.mxu0 %v2770
    %2848 = vmatprep.subr.mxu0 %v2773
    %2849 = vmatpush1.msra.mxu0 %v2772
    %2850 = vmatprep.subr.mxu0 %v2775
    %2851 = vmatpush1.msra.mxu0 %v2774
    %2852 = vmatprep.subr.mxu0 %v2777
    %2853 = vmatpush1.msra.mxu0 %v2776
    %2854 = vmatprep.subr.mxu0 %v2779
    %2855 = vmatpush1.msra.mxu0 %v2778
    %2856 = vmatprep.subr.mxu0 %v2781
    %2857 = vmatpush1.msra.mxu0 %v2780
    %2858 = vmatprep.subr.mxu0 %v2783
    %2859 = vmatpush1.msra.mxu0 %v2782
    %2860 = vmatprep.subr.mxu0 %v2785
    %2861 = vmatpush1.msra.mxu0 %v2784
    %2862 = vmatprep.subr.mxu0 %v2787
    %2863 = vmatpush1.msra.mxu0 %v2786
    %2864 = vmatprep.subr.mxu0 %v2789
    %2865 = vmatpush1.msra.mxu0 %v2788
    %2866 = vmatprep.subr.mxu0 %v2791
    %2867 = vmatpush1.msra.mxu0 %v2790
    %2868 = vmatprep.subr.mxu0 %v2793
    %2869 = vmatpush1.msra.mxu0 %v2792
    %2870 = vmatprep.subr.mxu0 %v2795
    %2871 = vmatpush1.msra.mxu0 %v2794
    %2872 = vmatprep.subr.mxu0 %v2797
    %2873 = vmatpush1.msra.mxu0 %v2796
    %2874 = vmatprep.subr.mxu0 %v2799
    %2875 = vmatpush1.msra.mxu0 %v2798
    %2876 = vmatprep.subr.mxu0 %v2801
    %2877 = vmatpush1.msra.mxu0 %v2800
    %2878 = vmatprep.subr.mxu0 %v2803
    %2879 = vmatpush1.msra.mxu0 %v2802
    %2880 = vmatprep.subr.mxu0 %v2805
    %2881 = vmatpush1.msra.mxu0 %v2804
    %2882 = vmatprep.subr.mxu0 %v2807
    %2883 = vmatpush1.msra.mxu0 %v2806
    %2884 = vmatprep.subr.mxu0 %v2809
    %2885 = vmatpush1.msra.mxu0 %v2808
    %2886 = vmatprep.subr.mxu0 %v2811
    %2887 = vmatpush1.msra.mxu0 %v2810
    %2888 = vmatprep.subr.mxu0 %v2813
    %2889 = vmatpush1.msra.mxu0 %v2812
    %2890 = vmatprep.subr.mxu0 %v2815
    %2891 = vmatpush1.msra.mxu0 %v2814
    %2892 = vmatprep.subr.mxu0 %v2817
    %2893 = vmatpush1.msra.mxu0 %v2816
    %2894 = vmatprep.subr.mxu0 %v2819
    %2895 = vmatpush1.msra.mxu0 %v2818
    %2896 = vmatprep.subr.mxu0 %v2821
    %2897 = vmatpush1.msra.mxu0 %v2820
    %2898 = vmatprep.subr.mxu0 %v2823
    %2899 = vmatpush1.msra.mxu0 %v2822
    %2900 = vmatprep.subr.mxu0 %v2825
    %2901 = vmatpush1.msra.mxu0 %v2824
    %2902 = vmatprep.subr.mxu0 %v2827
    %2903 = vmatpush1.msra.mxu0 %v2826
    %2904 = vmatprep.mubr.f32.mxu0 %v2763
    %2905 = vmatmul.mubr.f32.gmra.mrb[0].mxu0 %v2762
    %v2906 = vpop.f32.mrb[0].mxu0
    %v2907 = vadd.f32 %v2833, %v2906
    %v2908 = vpop.f32.mrb[0].mxu0
    %v2909 = vadd.f32 %v2837, %v2908
    %2910 = vdwg.mxu0
    %v2913 = vcombine.low %v2907, %v2909
    %v2915 = vunpack.c.l.s4 1983009808
    %v2916 = vunpack.c.0.s8 %v2915
    %v2917 = vlaneseq
    %v2918 = vshrl.u32 %v2917, 7
    %v2919 = vsub.s32 %v2916, %v2918
    %v2920 = vrot.slane %v2913, %v2919
    %vm2922 = vcmask 1041408
    %vm2923 = vcmask 125954
    %vm2924 = vmor %vm2923, %vm2922
    %2925 = vst.msk [vmem:[#allocation26] sm:$0xf] %vm2924, %v2920
    // Predicated region
    $region162: #{tpu_custom_call.1} parent=1 // pred_check
      _
    $region163: #{tpu_custom_call.1} parent=1 // pred_check_branch
      %2927 = sbr.rel (0) target = $region165
    $region164: #{tpu_custom_call.1} parent=1 // pred_region
      %s2929 = ssub.s32 64, 64
      %2930 = vsyncadd [#allocation4], %s2929
      %s2932 = sshll.u32 [#allocation26], 4
      %s2933 = int_to_ptr.vmem [resolvable:$true] %s2932
      %2935 = dma.vmem_to_hbm [thread:$0]  %s2933, 64, %s25, [#allocation4]
    $region165: #{tpu_custom_call.1} parent=1 // pred_fallthru
      _
    // Predicated region
    $region166: #{tpu_custom_call.1} parent=1 // pred_check
      _
    $region167: #{tpu_custom_call.1} parent=1 // pred_check_branch
      %2937 = sbr.rel (0) target = $region169
    $region168: #{tpu_custom_call.1} parent=1 // pred_region
      %2938 = dma.done [#allocation4], 64
    $region169: #{tpu_custom_call.1} parent=1 // pred_fallthru
      _
    %2939 = vsyncpa [#allocation3], 1
    %2940 = vsyncpa [#allocation6], 1
    %2941 = vsyncpa [#allocation9], 1
    %2942 = vsyncpa [#allocation12], 1
    %2943 = vsyncpa [#allocation15], 1
    %2944 = vsyncpa [#allocation18], 1
    %2945 = vsyncpa [#allocation21], 1
    %2946 = vsyncpa [#allocation24], 1
    %2947 = vsyncpa [#allocation4], 1

</llo_original>
